<compile_context>
chip_gen: v7x
topology: tpu7x:2x2x1
jax: 0.10.0
libtpu: 0.0.40
codegen_flags: <defaults>
</compile_context>

<pallas_src>
import functools

import jax
import jax.numpy as jnp
from jax import lax
from jax.experimental import pallas as pl
from jax.experimental.pallas import tpu as pltpu


def _round_up(v, m):
    return (v + m - 1) // m * m


def _basic_block_kernel(xpad_ref, w1_ref, b1_ref, w2_ref, b2_ref,
                        out_ref, ypad_scratch):
    # xpad_ref     : (1, H+2, W+2, Cp) bf16  spatially zero-padded, channel-padded input
    # w1_ref,w2_ref: (3, 3*Cp, Cp)     bf16  BN-scale folded; w_ref[dx][dy*Cp+ci, co]
    #                                        == conv_w[dy, dx, ci, co]
    # b1_ref,b2_ref: (1, Cp)           f32   folded BN bias
    # out_ref      : (1, H, W, Cp)     f32
    # ypad_scratch : (H+2, W+2, Cp)    bf16  VMEM scratch for the padded intermediate
    H = out_ref.shape[1]
    W = out_ref.shape[2]
    Cp = out_ref.shape[3]
    HW = H * W
    sdt = ypad_scratch.dtype

    xpad = xpad_ref[0]                                    # (H+2, W+2, Cp) bf16

    def conv3x3(padded, w_ref):
        # One lane-aligned concat of the 3 vertical taps (K = 3*Cp), then 3 fat
        # MXU matmuls (one per horizontal tap dx).
        pc = jnp.concatenate(                             # (H, W+2, 3*Cp)
            [padded[0:H], padded[1:H + 1], padded[2:H + 2]], axis=-1)
        acc = jnp.zeros((HW, Cp), jnp.float32)
        for dx in range(3):
            patch = pc[:, dx:dx + W, :].reshape(HW, 3 * Cp)
            acc = acc + jnp.dot(patch, w_ref[dx],
                                preferred_element_type=jnp.float32)
        return acc                                        # (HW, Cp) f32

    # ---- conv1 (BN scale folded into weights) + bias + ReLU ----
    y = jnp.maximum(conv3x3(xpad, w1_ref) + b1_ref[...], 0.0)     # (HW, Cp) f32

    # ---- re-pad intermediate into the scratch (zero 1-px border, bf16) ----
    # Top / bottom zero rows: full-width major-dim slices (no masked packed stores).
    zrow = jnp.zeros((1, W + 2, Cp), sdt)
    ypad_scratch[0:1] = zrow
    ypad_scratch[H + 1:H + 2] = zrow
    # Interior rows: fuse the zero side columns into one full-width store.
    zcol = jnp.zeros((H, 1, Cp), sdt)
    ypad_scratch[1:1 + H] = jnp.concatenate(
        [zcol, y.reshape(H, W, Cp).astype(sdt), zcol], axis=1)

    # ---- conv2 + bias + residual + ReLU ----
    acc2 = conv3x3(ypad_scratch[...], w2_ref)
    identity = xpad[1:1 + H, 1:1 + W, :].reshape(HW, Cp).astype(jnp.float32)
    out = jnp.maximum(acc2 + b2_ref[...] + identity, 0.0)
    out_ref[0] = out.reshape(H, W, Cp).astype(out_ref.dtype)


@functools.partial(jax.jit, static_argnames=("compute_dtype",))
def basic_block_pallas(x, w1, scale1, bias1, w2, scale2, bias2,
                       *, compute_dtype=jnp.bfloat16):
    """x: (N, H, W, C) NHWC; w1/w2: (3, 3, C, C) HWIO; scale*/bias*: (C,) folded BN."""
    N, H, W, C = x.shape
    out_dtype = x.dtype

    Cp = max(_round_up(C, 128), 128)      # lane-dense channel axis
    cpad = Cp - C

    # Fold the BN scale into the conv weights (over Cout); the kernel only adds bias.
    w1f = w1 * scale1[None, None, None, :]
    w2f = w2 * scale2[None, None, None, :]
    b1 = bias1
    b2 = bias2

    if cpad:
        w1f = jnp.pad(w1f, ((0, 0), (0, 0), (0, cpad), (0, cpad)))
        w2f = jnp.pad(w2f, ((0, 0), (0, 0), (0, cpad), (0, cpad)))
        b1 = jnp.pad(b1, (0, cpad))
        b2 = jnp.pad(b2, (0, cpad))

    # Group the 3 vertical taps per horizontal tap dx: (3, 3*Cp, Cp),
    # row index = dy*Cp + cin, matching the dy-concatenated patch operand.
    w1g = jnp.transpose(w1f, (1, 0, 2, 3)).reshape(3, 3 * Cp, Cp).astype(compute_dtype)
    w2g = jnp.transpose(w2f, (1, 0, 2, 3)).reshape(3, 3 * Cp, Cp).astype(compute_dtype)
    b1 = b1.reshape(1, Cp).astype(jnp.float32)
    b2 = b2.reshape(1, Cp).astype(jnp.float32)

    # Spatial zero pad (+ channel pad) once in XLA; kernel reads shifted windows.
    xp = jnp.pad(x, ((0, 0), (1, 1), (1, 1), (0, cpad))).astype(compute_dtype)

    grid_spec = pltpu.PrefetchScalarGridSpec(
        num_scalar_prefetch=0,
        grid=(N,),
        in_specs=[
            pl.BlockSpec((1, H + 2, W + 2, Cp), lambda n: (n, 0, 0, 0)),  # padded x
            pl.BlockSpec((3, 3 * Cp, Cp), lambda n: (0, 0, 0)),           # w1 grouped
            pl.BlockSpec((1, Cp), lambda n: (0, 0)),                      # bias1
            pl.BlockSpec((3, 3 * Cp, Cp), lambda n: (0, 0, 0)),           # w2 grouped
            pl.BlockSpec((1, Cp), lambda n: (0, 0)),                      # bias2
        ],
        out_specs=pl.BlockSpec((1, H, W, Cp), lambda n: (n, 0, 0, 0)),
        scratch_shapes=[pltpu.VMEM((H + 2, W + 2, Cp), compute_dtype)],
    )

    out = pl.pallas_call(
        _basic_block_kernel,
        out_shape=jax.ShapeDtypeStruct((N, H, W, Cp), jnp.float32),
        grid_spec=grid_spec,
        compiler_params=pltpu.CompilerParams(
            dimension_semantics=("parallel",)),
    )(xp, w1g, b1, w2g, b2)

    return out[..., :C].astype(out_dtype)


def basic_block_reference(x, w1, scale1, bias1, w2, scale2, bias2):
    """Pure-JAX reference using the same bf16-rounded operands the kernel consumes
    (f32 convolution math, so only accumulation order differs from the kernel)."""
    def bf(v):
        return v.astype(jnp.bfloat16).astype(jnp.float32)

    dn = ('NHWC', 'HWIO', 'NHWC')
    w1f = bf(w1 * scale1[None, None, None, :])
    w2f = bf(w2 * scale2[None, None, None, :])
    xb = bf(x)
    y = lax.conv_general_dilated(xb, w1f, (1, 1), 'SAME', dimension_numbers=dn)
    y = jnp.maximum(y + bias1, 0.0)
    y = bf(y)                       # kernel feeds the intermediate to the MXU in bf16
    z = lax.conv_general_dilated(y, w2f, (1, 1), 'SAME', dimension_numbers=dn)
    z = z + bias2 + xb
    return jnp.maximum(z, 0.0)


if __name__ == "__main__":
    # Small shapes consistent with BasicBlock(inplanes=planes=C, stride=1,
    # downsample=None): the residual add requires inplanes == planes.
    N, H, W, C = 2, 16, 16, 8
    eps = 1e-5

    key = jax.random.PRNGKey(0)
    kx, kw1, kw2, kg1, kb1, km1, kv1, kg2, kb2, km2, kv2 = jax.random.split(key, 11)

    x = jax.random.normal(kx, (N, H, W, C), dtype=jnp.float32)

    # Conv weights (HWIO), deterministic init.
    w1 = 0.1 * jax.random.normal(kw1, (3, 3, C, C), dtype=jnp.float32)
    w2 = 0.1 * jax.random.normal(kw2, (3, 3, C, C), dtype=jnp.float32)

    # BatchNorm parameters (inference-mode fold).
    gamma1 = 1.0 + 0.1 * jax.random.normal(kg1, (C,), dtype=jnp.float32)
    beta1 = 0.1 * jax.random.normal(kb1, (C,), dtype=jnp.float32)
    mean1 = 0.1 * jax.random.normal(km1, (C,), dtype=jnp.float32)
    var1 = jnp.abs(1.0 + 0.1 * jax.random.normal(kv1, (C,), dtype=jnp.float32))

    gamma2 = 1.0 + 0.1 * jax.random.normal(kg2, (C,), dtype=jnp.float32)
    beta2 = 0.1 * jax.random.normal(kb2, (C,), dtype=jnp.float32)
    mean2 = 0.1 * jax.random.normal(km2, (C,), dtype=jnp.float32)
    var2 = jnp.abs(1.0 + 0.1 * jax.random.normal(kv2, (C,), dtype=jnp.float32))

    scale1 = gamma1 / jnp.sqrt(var1 + eps)
    bias1 = beta1 - mean1 * scale1
    scale2 = gamma2 / jnp.sqrt(var2 + eps)
    bias2 = beta2 - mean2 * scale2

    out = basic_block_pallas(x, w1, scale1, bias1, w2, scale2, bias2)
    out = jax.block_until_ready(out)

    ref = basic_block_reference(x, w1, scale1, bias1, w2, scale2, bias2)
    ref = jax.block_until_ready(ref)

    assert out.shape == (N, H, W, C)
    max_err = float(jnp.max(jnp.abs(out - ref)))
    assert jnp.allclose(out, ref, atol=2e-2, rtol=2e-2), max_err

    print("KERNEL_OK")
</pallas_src>

<mosaic_0001>
module attributes {stable_mosaic.version = 11 : i64} {
  func.func @_basic_block_kernel(%arg0: i32, %arg1: memref<1x18x18x128xbf16, #tpu.memory_space<vmem>>, %arg2: memref<3x384x128xbf16, #tpu.memory_space<vmem>>, %arg3: memref<1x128xf32, #tpu.memory_space<vmem>>, %arg4: memref<3x384x128xbf16, #tpu.memory_space<vmem>>, %arg5: memref<1x128xf32, #tpu.memory_space<vmem>>, %arg6: memref<1x16x16x128xf32, #tpu.memory_space<vmem>>, %arg7: memref<18x18x128xbf16, #tpu.memory_space<vmem>>) attributes {dimension_semantics = [#tpu.dimension_semantics<parallel>], iteration_bounds = array<i64: 2>, scalar_prefetch = 0 : i64, scratch_operands = 1 : i64, tpu.core_type = #tpu.core_type<tc>, window_params = [{transform_indices = @transform_0, window_bounds = array<i64: 1, 18, 18, 128>}, {pipeline_mode = #tpu.pipeline_mode<synchronous>, transform_indices = @transform_1, window_bounds = array<i64: 3, 384, 128>}, {pipeline_mode = #tpu.pipeline_mode<synchronous>, transform_indices = @transform_2, window_bounds = array<i64: 1, 128>}, {pipeline_mode = #tpu.pipeline_mode<synchronous>, transform_indices = @transform_3, window_bounds = array<i64: 3, 384, 128>}, {pipeline_mode = #tpu.pipeline_mode<synchronous>, transform_indices = @transform_4, window_bounds = array<i64: 1, 128>}, {transform_indices = @transform_5, window_bounds = array<i64: 1, 16, 16, 128>}]} {
    %c0 = arith.constant 0 : index
    %c0_0 = arith.constant 0 : index
    %c0_1 = arith.constant 0 : index
    %c0_2 = arith.constant 0 : index
    %0 = vector.load %arg1[%c0, %c0_0, %c0_1, %c0_2] : memref<1x18x18x128xbf16, #tpu.memory_space<vmem>>, vector<1x18x18x128xbf16>
    %1 = vector.shape_cast %0 : vector<1x18x18x128xbf16> to vector<18x18x128xbf16>
    %2 = vector.extract_strided_slice %1 {offsets = [0, 0, 0], sizes = [16, 18, 128], strides = [1, 1, 1]} : vector<18x18x128xbf16> to vector<16x18x128xbf16>
    %3 = vector.extract_strided_slice %1 {offsets = [1, 0, 0], sizes = [16, 18, 128], strides = [1, 1, 1]} : vector<18x18x128xbf16> to vector<16x18x128xbf16>
    %4 = vector.extract_strided_slice %1 {offsets = [2, 0, 0], sizes = [16, 18, 128], strides = [1, 1, 1]} : vector<18x18x128xbf16> to vector<16x18x128xbf16>
    %5 = tpu.concatenate %2, %3, %4 in 2 : vector<16x18x128xbf16>, vector<16x18x128xbf16>, vector<16x18x128xbf16> -> vector<16x18x384xbf16>
    %cst = arith.constant 0.000000e+00 : f32
    %6 = vector.broadcast %cst : f32 to vector<256x128xf32>
    %7 = vector.extract_strided_slice %5 {offsets = [0, 0, 0], sizes = [16, 16, 384], strides = [1, 1, 1]} : vector<16x18x384xbf16> to vector<16x16x384xbf16>
    %8 = vector.shape_cast %7 : vector<16x16x384xbf16> to vector<256x384xbf16>
    %c0_3 = arith.constant 0 : index
    %c0_4 = arith.constant 0 : index
    %c0_5 = arith.constant 0 : index
    %9 = vector.load %arg2[%c0_3, %c0_4, %c0_5] : memref<3x384x128xbf16, #tpu.memory_space<vmem>>, vector<1x384x128xbf16>
    %10 = vector.shape_cast %9 : vector<1x384x128xbf16> to vector<384x128xbf16>
    %cst_6 = arith.constant dense<0.000000e+00> : vector<256x128xf32>
    %11 = tpu.matmul %8, %10, %cst_6 {dimension_numbers = #tpu.dot_dimension_numbers<[1], [0], [0], [1], [0, 0, 1, 1], [], []>} : vector<256x384xbf16>, vector<384x128xbf16>, vector<256x128xf32> -> vector<256x128xf32>
    %12 = arith.addf %6, %11 : vector<256x128xf32>
    %13 = vector.extract_strided_slice %5 {offsets = [0, 1, 0], sizes = [16, 16, 384], strides = [1, 1, 1]} : vector<16x18x384xbf16> to vector<16x16x384xbf16>
    %14 = vector.shape_cast %13 : vector<16x16x384xbf16> to vector<256x384xbf16>
    %c1 = arith.constant 1 : index
    %c0_7 = arith.constant 0 : index
    %c0_8 = arith.constant 0 : index
    %15 = vector.load %arg2[%c1, %c0_7, %c0_8] : memref<3x384x128xbf16, #tpu.memory_space<vmem>>, vector<1x384x128xbf16>
    %16 = vector.shape_cast %15 : vector<1x384x128xbf16> to vector<384x128xbf16>
    %cst_9 = arith.constant dense<0.000000e+00> : vector<256x128xf32>
    %17 = tpu.matmul %14, %16, %cst_9 {dimension_numbers = #tpu.dot_dimension_numbers<[1], [0], [0], [1], [0, 0, 1, 1], [], []>} : vector<256x384xbf16>, vector<384x128xbf16>, vector<256x128xf32> -> vector<256x128xf32>
    %18 = arith.addf %12, %17 : vector<256x128xf32>
    %19 = vector.extract_strided_slice %5 {offsets = [0, 2, 0], sizes = [16, 16, 384], strides = [1, 1, 1]} : vector<16x18x384xbf16> to vector<16x16x384xbf16>
    %20 = vector.shape_cast %19 : vector<16x16x384xbf16> to vector<256x384xbf16>
    %c2 = arith.constant 2 : index
    %c0_10 = arith.constant 0 : index
    %c0_11 = arith.constant 0 : index
    %21 = vector.load %arg2[%c2, %c0_10, %c0_11] : memref<3x384x128xbf16, #tpu.memory_space<vmem>>, vector<1x384x128xbf16>
    %22 = vector.shape_cast %21 : vector<1x384x128xbf16> to vector<384x128xbf16>
    %cst_12 = arith.constant dense<0.000000e+00> : vector<256x128xf32>
    %23 = tpu.matmul %20, %22, %cst_12 {dimension_numbers = #tpu.dot_dimension_numbers<[1], [0], [0], [1], [0, 0, 1, 1], [], []>} : vector<256x384xbf16>, vector<384x128xbf16>, vector<256x128xf32> -> vector<256x128xf32>
    %24 = arith.addf %18, %23 : vector<256x128xf32>
    %c0_13 = arith.constant 0 : index
    %c0_14 = arith.constant 0 : index
    %25 = vector.load %arg3[%c0_13, %c0_14] : memref<1x128xf32, #tpu.memory_space<vmem>>, vector<1x128xf32>
    %26 = vector.broadcast %25 : vector<1x128xf32> to vector<256x128xf32>
    %27 = arith.addf %24, %26 : vector<256x128xf32>
    %cst_15 = arith.constant 0.000000e+00 : f32
    %28 = vector.broadcast %cst_15 : f32 to vector<256x128xf32>
    %29 = arith.maximumf %27, %28 : vector<256x128xf32>
    %cst_16 = arith.constant 0.000000e+00 : bf16
    %30 = vector.broadcast %cst_16 : bf16 to vector<1x18x128xbf16>
    %c0_17 = arith.constant 0 : index
    %c0_18 = arith.constant 0 : index
    %c0_19 = arith.constant 0 : index
    %31 = vector.load %arg7[%c0_17, %c0_18, %c0_19] : memref<18x18x128xbf16, #tpu.memory_space<vmem>>, vector<1x18x128xbf16>
    tpu.vector_store %arg7[%c0_17, %c0_18, %c0_19], %30 {strides = array<i32>} : memref<18x18x128xbf16, #tpu.memory_space<vmem>>, vector<1x18x128xbf16>,
    %c17 = arith.constant 17 : index
    %c0_20 = arith.constant 0 : index
    %c0_21 = arith.constant 0 : index
    %32 = vector.load %arg7[%c17, %c0_20, %c0_21] : memref<18x18x128xbf16, #tpu.memory_space<vmem>>, vector<1x18x128xbf16>
    tpu.vector_store %arg7[%c17, %c0_20, %c0_21], %30 {strides = array<i32>} : memref<18x18x128xbf16, #tpu.memory_space<vmem>>, vector<1x18x128xbf16>,
    %cst_22 = arith.constant 0.000000e+00 : bf16
    %33 = vector.broadcast %cst_22 : bf16 to vector<16x1x128xbf16>
    %34 = vector.shape_cast %29 : vector<256x128xf32> to vector<16x16x128xf32>
    %35 = arith.truncf %34 : vector<16x16x128xf32> to vector<16x16x128xbf16>
    %36 = tpu.concatenate %33, %35, %33 in 1 : vector<16x1x128xbf16>, vector<16x16x128xbf16>, vector<16x1x128xbf16> -> vector<16x18x128xbf16>
    %c1_23 = arith.constant 1 : index
    %c0_24 = arith.constant 0 : index
    %c0_25 = arith.constant 0 : index
    %37 = vector.load %arg7[%c1_23, %c0_24, %c0_25] : memref<18x18x128xbf16, #tpu.memory_space<vmem>>, vector<16x18x128xbf16>
    tpu.vector_store %arg7[%c1_23, %c0_24, %c0_25], %36 {strides = array<i32>} : memref<18x18x128xbf16, #tpu.memory_space<vmem>>, vector<16x18x128xbf16>,
    %c0_26 = arith.constant 0 : index
    %c0_27 = arith.constant 0 : index
    %c0_28 = arith.constant 0 : index
    %38 = vector.load %arg7[%c0_26, %c0_27, %c0_28] : memref<18x18x128xbf16, #tpu.memory_space<vmem>>, vector<18x18x128xbf16>
    %39 = vector.extract_strided_slice %38 {offsets = [0, 0, 0], sizes = [16, 18, 128], strides = [1, 1, 1]} : vector<18x18x128xbf16> to vector<16x18x128xbf16>
    %40 = vector.extract_strided_slice %38 {offsets = [1, 0, 0], sizes = [16, 18, 128], strides = [1, 1, 1]} : vector<18x18x128xbf16> to vector<16x18x128xbf16>
    %41 = vector.extract_strided_slice %38 {offsets = [2, 0, 0], sizes = [16, 18, 128], strides = [1, 1, 1]} : vector<18x18x128xbf16> to vector<16x18x128xbf16>
    %42 = tpu.concatenate %39, %40, %41 in 2 : vector<16x18x128xbf16>, vector<16x18x128xbf16>, vector<16x18x128xbf16> -> vector<16x18x384xbf16>
    %cst_29 = arith.constant 0.000000e+00 : f32
    %43 = vector.broadcast %cst_29 : f32 to vector<256x128xf32>
    %44 = vector.extract_strided_slice %42 {offsets = [0, 0, 0], sizes = [16, 16, 384], strides = [1, 1, 1]} : vector<16x18x384xbf16> to vector<16x16x384xbf16>
    %45 = vector.shape_cast %44 : vector<16x16x384xbf16> to vector<256x384xbf16>
    %c0_30 = arith.constant 0 : index
    %c0_31 = arith.constant 0 : index
    %c0_32 = arith.constant 0 : index
    %46 = vector.load %arg4[%c0_30, %c0_31, %c0_32] : memref<3x384x128xbf16, #tpu.memory_space<vmem>>, vector<1x384x128xbf16>
    %47 = vector.shape_cast %46 : vector<1x384x128xbf16> to vector<384x128xbf16>
    %cst_33 = arith.constant dense<0.000000e+00> : vector<256x128xf32>
    %48 = tpu.matmul %45, %47, %cst_33 {dimension_numbers = #tpu.dot_dimension_numbers<[1], [0], [0], [1], [0, 0, 1, 1], [], []>} : vector<256x384xbf16>, vector<384x128xbf16>, vector<256x128xf32> -> vector<256x128xf32>
    %49 = arith.addf %43, %48 : vector<256x128xf32>
    %50 = vector.extract_strided_slice %42 {offsets = [0, 1, 0], sizes = [16, 16, 384], strides = [1, 1, 1]} : vector<16x18x384xbf16> to vector<16x16x384xbf16>
    %51 = vector.shape_cast %50 : vector<16x16x384xbf16> to vector<256x384xbf16>
    %c1_34 = arith.constant 1 : index
    %c0_35 = arith.constant 0 : index
    %c0_36 = arith.constant 0 : index
    %52 = vector.load %arg4[%c1_34, %c0_35, %c0_36] : memref<3x384x128xbf16, #tpu.memory_space<vmem>>, vector<1x384x128xbf16>
    %53 = vector.shape_cast %52 : vector<1x384x128xbf16> to vector<384x128xbf16>
    %cst_37 = arith.constant dense<0.000000e+00> : vector<256x128xf32>
    %54 = tpu.matmul %51, %53, %cst_37 {dimension_numbers = #tpu.dot_dimension_numbers<[1], [0], [0], [1], [0, 0, 1, 1], [], []>} : vector<256x384xbf16>, vector<384x128xbf16>, vector<256x128xf32> -> vector<256x128xf32>
    %55 = arith.addf %49, %54 : vector<256x128xf32>
    %56 = vector.extract_strided_slice %42 {offsets = [0, 2, 0], sizes = [16, 16, 384], strides = [1, 1, 1]} : vector<16x18x384xbf16> to vector<16x16x384xbf16>
    %57 = vector.shape_cast %56 : vector<16x16x384xbf16> to vector<256x384xbf16>
    %c2_38 = arith.constant 2 : index
    %c0_39 = arith.constant 0 : index
    %c0_40 = arith.constant 0 : index
    %58 = vector.load %arg4[%c2_38, %c0_39, %c0_40] : memref<3x384x128xbf16, #tpu.memory_space<vmem>>, vector<1x384x128xbf16>
    %59 = vector.shape_cast %58 : vector<1x384x128xbf16> to vector<384x128xbf16>
    %cst_41 = arith.constant dense<0.000000e+00> : vector<256x128xf32>
    %60 = tpu.matmul %57, %59, %cst_41 {dimension_numbers = #tpu.dot_dimension_numbers<[1], [0], [0], [1], [0, 0, 1, 1], [], []>} : vector<256x384xbf16>, vector<384x128xbf16>, vector<256x128xf32> -> vector<256x128xf32>
    %61 = arith.addf %55, %60 : vector<256x128xf32>
    %62 = vector.extract_strided_slice %1 {offsets = [1, 1, 0], sizes = [16, 16, 128], strides = [1, 1, 1]} : vector<18x18x128xbf16> to vector<16x16x128xbf16>
    %63 = vector.shape_cast %62 : vector<16x16x128xbf16> to vector<256x128xbf16>
    %64 = arith.extf %63 : vector<256x128xbf16> to vector<256x128xf32>
    %c0_42 = arith.constant 0 : index
    %c0_43 = arith.constant 0 : index
    %65 = vector.load %arg5[%c0_42, %c0_43] : memref<1x128xf32, #tpu.memory_space<vmem>>, vector<1x128xf32>
    %66 = vector.broadcast %65 : vector<1x128xf32> to vector<256x128xf32>
    %67 = arith.addf %61, %66 : vector<256x128xf32>
    %68 = arith.addf %67, %64 : vector<256x128xf32>
    %cst_44 = arith.constant 0.000000e+00 : f32
    %69 = vector.broadcast %cst_44 : f32 to vector<256x128xf32>
    %70 = arith.maximumf %68, %69 : vector<256x128xf32>
    %71 = vector.shape_cast %70 : vector<256x128xf32> to vector<16x16x128xf32>
    %c0_45 = arith.constant 0 : index
    %c0_46 = arith.constant 0 : index
    %c0_47 = arith.constant 0 : index
    %c0_48 = arith.constant 0 : index
    %72 = vector.load %arg6[%c0_45, %c0_46, %c0_47, %c0_48] : memref<1x16x16x128xf32, #tpu.memory_space<vmem>>, vector<1x16x16x128xf32>
    %73 = vector.shape_cast %72 : vector<1x16x16x128xf32> to vector<16x16x128xf32>
    %74 = vector.shape_cast %71 : vector<16x16x128xf32> to vector<1x16x16x128xf32>
    tpu.vector_store %arg6[%c0_45, %c0_46, %c0_47, %c0_48], %74 {strides = array<i32>} : memref<1x16x16x128xf32, #tpu.memory_space<vmem>>, vector<1x16x16x128xf32>,
    return
  }
  func.func @transform_0(%arg0: i32) -> (i32, i32, i32, i32) {
    %c0_i32 = arith.constant 0 : i32
    %c0_i32_0 = arith.constant 0 : i32
    %c0_i32_1 = arith.constant 0 : i32
    %c0_i32_2 = arith.constant 0 : i32
    return %arg0, %c0_i32, %c0_i32_0, %c0_i32_1 : i32, i32, i32, i32
  }
  func.func @transform_1(%arg0: i32) -> (i32, i32, i32) {
    %c0_i32 = arith.constant 0 : i32
    %c0_i32_0 = arith.constant 0 : i32
    %c0_i32_1 = arith.constant 0 : i32
    %c0_i32_2 = arith.constant 0 : i32
    return %c0_i32, %c0_i32_0, %c0_i32_1 : i32, i32, i32
  }
  func.func @transform_2(%arg0: i32) -> (i32, i32) {
    %c0_i32 = arith.constant 0 : i32
    %c0_i32_0 = arith.constant 0 : i32
    %c0_i32_1 = arith.constant 0 : i32
    return %c0_i32, %c0_i32_0 : i32, i32
  }
  func.func @transform_3(%arg0: i32) -> (i32, i32, i32) {
    %c0_i32 = arith.constant 0 : i32
    %c0_i32_0 = arith.constant 0 : i32
    %c0_i32_1 = arith.constant 0 : i32
    %c0_i32_2 = arith.constant 0 : i32
    return %c0_i32, %c0_i32_0, %c0_i32_1 : i32, i32, i32
  }
  func.func @transform_4(%arg0: i32) -> (i32, i32) {
    %c0_i32 = arith.constant 0 : i32
    %c0_i32_0 = arith.constant 0 : i32
    %c0_i32_1 = arith.constant 0 : i32
    return %c0_i32, %c0_i32_0 : i32, i32
  }
  func.func @transform_5(%arg0: i32) -> (i32, i32, i32, i32) {
    %c0_i32 = arith.constant 0 : i32
    %c0_i32_0 = arith.constant 0 : i32
    %c0_i32_1 = arith.constant 0 : i32
    %c0_i32_2 = arith.constant 0 : i32
    return %arg0, %c0_i32, %c0_i32_0, %c0_i32_1 : i32, i32, i32, i32
  }
}

</mosaic_0001>

<llo_original>
// kernel: basic_block_pallas.1
$region0: #{basic_block_pallas.1}
  #allocation0 [shape = 'u32[]', space=smem, size = 0x4, offset = 0x4, fixed_abs, tag = 'smem constant byte address 0x4 - core index']
  #allocation1 [shape = 'u32[144,128]{1,0:T(1,128)}', space=vmem, size = 0x12000, scoped, tag = 'internal scratch']
  #allocation2 [shape = 'bf16[18,18,128]{2,1,0:T(8,128)(2,1)}', space=vmem, size = 0x1b000, scoped, tag = 'scratch operand']
  %s0 = inlined_call_operand.vmem [shape: bf16[2,18,18,128], index: 0, kind: input, shape index: {}]
  %s1 = inlined_call_operand.vmem [shape: bf16[3,384,128], index: 1, kind: input, shape index: {}]
  %s2 = inlined_call_operand.vmem [shape: f32[1,128], index: 2, kind: input, shape index: {}]
  %s3 = inlined_call_operand.vmem [shape: bf16[3,384,128], index: 3, kind: input, shape index: {}]
  %s4 = inlined_call_operand.vmem [shape: f32[1,128], index: 4, kind: input, shape index: {}]
  %s5 = inlined_call_operand.vmem [shape: f32[2,16,16,128], index: 5, kind: output, shape index: {}]
  %s6 = sld [smem:[#allocation0]]
  $region53: #{basic_block_pallas.1} parent=0
    _
  %s8 = ssub.s32 1, %s6
  %s9 = scalar_select 0, %s8, %s6
  loop: start=0, step=1, limit=4
  $region2: #{basic_block_pallas.1} parent=0 // loop_pre_header
    _
  $region3: #{basic_block_pallas.1} parent=0 // loop_header
    %s11 = sphi 0, %s15
    %p12 = scmp.ge.s32.totalorder %s11, 4
    %s21 = sphi 0, %s23
    %s24 = sphi 0, %s21
    %s25 = sphi 0, %s24
    %s41 = sphi 0, %s25
    %s45 = sphi 0, %s45
    %s47 = sphi 0, %s45
    %s48 = sphi 0, %s47
    %s62 = sphi 0, %s48
    %s66 = sphi 0, %s66
    %s68 = sphi 0, %s66
    %s69 = sphi 0, %s68
    %s83 = sphi 0, %s69
    %s87 = sphi 0, %s87
    %s89 = sphi 0, %s87
    %s90 = sphi 0, %s89
    %s104 = sphi 0, %s90
    %s108 = sphi 0, %s108
    %s110 = sphi 0, %s108
    %s111 = sphi 0, %s110
    %s125 = sphi 0, %s111
    %s131 = sphi 0, %s133
    %s134 = sphi 0, %s131
    %s135 = sphi 0, %s134
    %s151 = sphi 0, %s135
  $region4: #{basic_block_pallas.1} parent=0 // loop_header_branch
    %14 = sbr.rel (%p12) target = $region8
  $region5: #{basic_block_pallas.1} parent=0 // loop_body
    %s16 = ssub.s32 %s11, 1
    %s17 = ssub.s32 %s11, 2
    %s18 = sadd.s32 %s11, 1
    %s19 = ssub.s32 %s11, %s18
    %p20 = scmp.eq.s32.totalorder %s19, 0
    %s22 = sadd.s32 %s21, 1
    %s23 = scalar_select %p20, %s21, %s22
    %p26 = pneg %p20
    %p27 = scmp.eq.s32.totalorder %s11, 1
    %p28 = por %p26, %p27
    %p29 = scmp.ne.s32.totalorder %s21, %s24
    %p30 = scmp.eq.s32.totalorder %s11, 0
    %p31 = por %p29, %p30
    %p32 = scmp.ne.s32.totalorder %s21, %s24
    %p33 = scmp.eq.s32.totalorder %s16, 1
    %p34 = por %p32, %p33
    %p35 = scmp.ne.s32.totalorder %s24, %s25
    %p36 = scmp.eq.s32.totalorder %s16, 0
    %p37 = por %p35, %p36
    %p38 = scmp.ne.s32.totalorder %s24, %s25
    %p39 = scmp.eq.s32.totalorder %s17, 1
    %p40 = por %p38, %p39
    %p42 = scmp.ne.s32.totalorder %s25, %s41
    %p43 = scmp.eq.s32.totalorder %s17, 0
    %p44 = por %p42, %p43
    %s46 = sadd.s32 %s45, 1
    %p49 = scmp.eq.s32.totalorder %s11, 1
    %p50 = scmp.ne.s32.totalorder %s45, %s47
    %p51 = scmp.eq.s32.totalorder %s11, 0
    %p52 = por %p50, %p51
    %p53 = scmp.ne.s32.totalorder %s45, %s47
    %p54 = scmp.eq.s32.totalorder %s16, 1
    %p55 = por %p53, %p54
    %p56 = scmp.ne.s32.totalorder %s47, %s48
    %p57 = scmp.eq.s32.totalorder %s16, 0
    %p58 = por %p56, %p57
    %p59 = scmp.ne.s32.totalorder %s47, %s48
    %p60 = scmp.eq.s32.totalorder %s17, 1
    %p61 = por %p59, %p60
    %p63 = scmp.ne.s32.totalorder %s48, %s62
    %p64 = scmp.eq.s32.totalorder %s17, 0
    %p65 = por %p63, %p64
    %s67 = sadd.s32 %s66, 1
    %p70 = scmp.eq.s32.totalorder %s11, 1
    %p71 = scmp.ne.s32.totalorder %s66, %s68
    %p72 = scmp.eq.s32.totalorder %s11, 0
    %p73 = por %p71, %p72
    %p74 = scmp.ne.s32.totalorder %s66, %s68
    %p75 = scmp.eq.s32.totalorder %s16, 1
    %p76 = por %p74, %p75
    %p77 = scmp.ne.s32.totalorder %s68, %s69
    %p78 = scmp.eq.s32.totalorder %s16, 0
    %p79 = por %p77, %p78
    %p80 = scmp.ne.s32.totalorder %s68, %s69
    %p81 = scmp.eq.s32.totalorder %s17, 1
    %p82 = por %p80, %p81
    %p84 = scmp.ne.s32.totalorder %s69, %s83
    %p85 = scmp.eq.s32.totalorder %s17, 0
    %p86 = por %p84, %p85
    %s88 = sadd.s32 %s87, 1
    %p91 = scmp.eq.s32.totalorder %s11, 1
    %p92 = scmp.ne.s32.totalorder %s87, %s89
    %p93 = scmp.eq.s32.totalorder %s11, 0
    %p94 = por %p92, %p93
    %p95 = scmp.ne.s32.totalorder %s87, %s89
    %p96 = scmp.eq.s32.totalorder %s16, 1
    %p97 = por %p95, %p96
    %p98 = scmp.ne.s32.totalorder %s89, %s90
    %p99 = scmp.eq.s32.totalorder %s16, 0
    %p100 = por %p98, %p99
    %p101 = scmp.ne.s32.totalorder %s89, %s90
    %p102 = scmp.eq.s32.totalorder %s17, 1
    %p103 = por %p101, %p102
    %p105 = scmp.ne.s32.totalorder %s90, %s104
    %p106 = scmp.eq.s32.totalorder %s17, 0
    %p107 = por %p105, %p106
    %s109 = sadd.s32 %s108, 1
    %p112 = scmp.eq.s32.totalorder %s11, 1
    %p113 = scmp.ne.s32.totalorder %s108, %s110
    %p114 = scmp.eq.s32.totalorder %s11, 0
    %p115 = por %p113, %p114
    %p116 = scmp.ne.s32.totalorder %s108, %s110
    %p117 = scmp.eq.s32.totalorder %s16, 1
    %p118 = por %p116, %p117
    %p119 = scmp.ne.s32.totalorder %s110, %s111
    %p120 = scmp.eq.s32.totalorder %s16, 0
    %p121 = por %p119, %p120
    %p122 = scmp.ne.s32.totalorder %s110, %s111
    %p123 = scmp.eq.s32.totalorder %s17, 1
    %p124 = por %p122, %p123
    %p126 = scmp.ne.s32.totalorder %s111, %s125
    %p127 = scmp.eq.s32.totalorder %s17, 0
    %p128 = por %p126, %p127
    %s129 = ssub.s32 %s11, %s18
    %p130 = scmp.eq.s32.totalorder %s129, 0
    %s132 = sadd.s32 %s131, 1
    %s133 = scalar_select %p130, %s131, %s132
    %p136 = pneg %p130
    %p137 = scmp.eq.s32.totalorder %s11, 1
    %p138 = por %p136, %p137
    %p139 = scmp.ne.s32.totalorder %s131, %s134
    %p140 = scmp.eq.s32.totalorder %s11, 0
    %p141 = por %p139, %p140
    %p142 = scmp.ne.s32.totalorder %s131, %s134
    %p143 = scmp.eq.s32.totalorder %s16, 1
    %p144 = por %p142, %p143
    %p145 = scmp.ne.s32.totalorder %s134, %s135
    %p146 = scmp.eq.s32.totalorder %s16, 0
    %p147 = por %p145, %p146
    %p148 = scmp.ne.s32.totalorder %s134, %s135
    %p149 = scmp.eq.s32.totalorder %s17, 1
    %p150 = por %p148, %p149
    %p152 = scmp.ne.s32.totalorder %s135, %s151
    %p153 = scmp.eq.s32.totalorder %s17, 0
    %p154 = por %p152, %p153
    %p155 = scmp.le.s32.totalorder 1, %s11
    %p156 = scmp.lt.s32.totalorder %s11, 3
    %p157 = pnand %p155, %p156
    %p158 = pneg %p157
    // Predicated region
    $region9: #{basic_block_pallas.1} parent=5 // pred_check
      _
    $region10: #{basic_block_pallas.1} parent=5 // pred_check_branch
      %160 = sbr.rel (%p157) target = $region12
    $region11: #{basic_block_pallas.1} parent=5 // pred_region
      %s161 = ssub.s32 %s11, 1
      // Predicated region
      $region13: #{basic_block_pallas.1} parent=11 // pred_check
        %p162 = pneg %p58
      $region14: #{basic_block_pallas.1} parent=11 // pred_check_branch
        %164 = sbr.rel (%p162) target = $region16
      $region15: #{basic_block_pallas.1} parent=11 // pred_region
        _
      $region16: #{basic_block_pallas.1} parent=11 // pred_fallthru
        _
      // Predicated region
      $region17: #{basic_block_pallas.1} parent=11 // pred_check
        %p165 = pneg %p79
      $region18: #{basic_block_pallas.1} parent=11 // pred_check_branch
        %167 = sbr.rel (%p165) target = $region20
      $region19: #{basic_block_pallas.1} parent=11 // pred_region
        _
      $region20: #{basic_block_pallas.1} parent=11 // pred_fallthru
        _
      // Predicated region
      $region21: #{basic_block_pallas.1} parent=11 // pred_check
        %p168 = pneg %p100
      $region22: #{basic_block_pallas.1} parent=11 // pred_check_branch
        %170 = sbr.rel (%p168) target = $region24
      $region23: #{basic_block_pallas.1} parent=11 // pred_region
        _
      $region24: #{basic_block_pallas.1} parent=11 // pred_fallthru
        _
      // Predicated region
      $region25: #{basic_block_pallas.1} parent=11 // pred_check
        %p171 = pneg %p121
      $region26: #{basic_block_pallas.1} parent=11 // pred_check_branch
        %173 = sbr.rel (%p171) target = $region28
      $region27: #{basic_block_pallas.1} parent=11 // pred_region
        _
      $region28: #{basic_block_pallas.1} parent=11 // pred_fallthru
        _
    $region12: #{basic_block_pallas.1} parent=5 // pred_fallthru
      _
    %p174 = scmp.lt.s32.totalorder %s11, 2
    // Predicated region
    $region29: #{basic_block_pallas.1} parent=5 // pred_check
      %p175 = pneg %p174
    $region30: #{basic_block_pallas.1} parent=5 // pred_check_branch
      %177 = sbr.rel (%p175) target = $region32
    $region31: #{basic_block_pallas.1} parent=5 // pred_region
      // Predicated region
      $region33: #{basic_block_pallas.1} parent=31 // pred_check
        %p178 = pneg %p31
      $region34: #{basic_block_pallas.1} parent=31 // pred_check_branch
        %180 = sbr.rel (%p178) target = $region36
      $region35: #{basic_block_pallas.1} parent=31 // pred_region
        %p181 = scmp.lt.s32.totalorder %s11, 1
        %s182 = scalar_select %p181, %s11, 1
        %s183 = smul.addr %s182, 54
        %s184 = smul.addr %s183, 4
        %s185 = scalar_lea.vmem %s0, %s184
      $region36: #{basic_block_pallas.1} parent=31 // pred_fallthru
        _
    $region32: #{basic_block_pallas.1} parent=5 // pred_fallthru
      _
    %p186 = scmp.le.s32.totalorder 1, %s11
    %p187 = scmp.lt.s32.totalorder %s11, 3
    %p188 = pnand %p186, %p187
    %p189 = pneg %p188
    // Predicated region
    $region37: #{basic_block_pallas.1} parent=5 // pred_check
      _
    $region38: #{basic_block_pallas.1} parent=5 // pred_check_branch
      %191 = sbr.rel (%p188) target = $region40
    $region39: #{basic_block_pallas.1} parent=5 // pred_region
      %s192 = ssub.s32 %s11, 1
      %p193 = scmp.lt.s32.totalorder %s16, 1
      %s194 = scalar_select %p193, %s16, 1
      %s195 = smul.addr %s194, 54
      %s196 = smul.addr %s195, 4
      %s197 = scalar_lea.vmem %s0, %s196
      %p198 = pneg %p37
      %p199 = pneg %p34
      %p200 = pneg %p58
      %p201 = pneg %p55
      %p202 = pneg %p79
      %p203 = pneg %p76
      %p204 = pneg %p100
      %p205 = pneg %p97
      %p206 = pneg %p121
      %p207 = pneg %p118
      %p208 = pneg %p147
      %p209 = pneg %p144
      %p210 = scmp.lt.s32.totalorder %s16, 1
      %s211 = scalar_select %p210, %s16, 1
      %s212 = smul.addr %s211, 32
      %s213 = smul.addr %s212, 8
      %s214 = scalar_lea.vmem %s5, %s213
      %p215 = scmp.lt.s32.totalorder %s16, 1
      %s216 = scalar_select %p215, %s16, 1
      %s217 = smul.addr %s216, 54
      %s218 = smul.addr %s217, 4
      %s219 = scalar_lea.vmem %s0, %s218
      %p220 = scmp.lt.s32.totalorder %s16, 1
      %s221 = scalar_select %p220, %s16, 1
      %s222 = smul.addr %s221, 32
      %s223 = smul.addr %s222, 8
      %s224 = scalar_lea.vmem %s5, %s223
      %v226 = vld [vmem:[%s219] sm:$0xf]
      %v227 = vld [vmem:[%s219 + $0x4] sm:$0xf]
      %v228 = vld [vmem:[%s219 + $0x8] sm:$0x1]
      %v229 = vld [vmem:[%s219 + $0xc] sm:$0xf]
      %v230 = vld [vmem:[%s219 + $0x10] sm:$0xf]
      %v231 = vld [vmem:[%s219 + $0x14] sm:$0x1]
      %v232 = vld [vmem:[%s219 + $0x18] sm:$0xf]
      %v233 = vld [vmem:[%s219 + $0x1c] sm:$0xf]
      %v234 = vld [vmem:[%s219 + $0x20] sm:$0x1]
      %v235 = vld [vmem:[%s219 + $0x24] sm:$0xf]
      %v236 = vld [vmem:[%s219 + $0x28] sm:$0xf]
      %v237 = vld [vmem:[%s219 + $0x2c] sm:$0x1]
      %v238 = vld [vmem:[%s219 + $0x30] sm:$0xf]
      %v239 = vld [vmem:[%s219 + $0x34] sm:$0xf]
      %v240 = vld [vmem:[%s219 + $0x38] sm:$0x1]
      %v241 = vld [vmem:[%s219 + $0x3c] sm:$0xf]
      %v242 = vld [vmem:[%s219 + $0x40] sm:$0xf]
      %v243 = vld [vmem:[%s219 + $0x44] sm:$0x1]
      %v244 = vld [vmem:[%s219 + $0x48] sm:$0xf]
      %v245 = vld [vmem:[%s219 + $0x4c] sm:$0xf]
      %v246 = vld [vmem:[%s219 + $0x50] sm:$0x1]
      %v247 = vld [vmem:[%s219 + $0x54] sm:$0xf]
      %v248 = vld [vmem:[%s219 + $0x58] sm:$0xf]
      %v249 = vld [vmem:[%s219 + $0x5c] sm:$0x1]
      %v250 = vld [vmem:[%s219 + $0x60] sm:$0xf]
      %v251 = vld [vmem:[%s219 + $0x64] sm:$0xf]
      %v252 = vld [vmem:[%s219 + $0x68] sm:$0x1]
      %v253 = vld [vmem:[%s219 + $0x6c] sm:$0xf]
      %v254 = vld [vmem:[%s219 + $0x70] sm:$0xf]
      %v255 = vld [vmem:[%s219 + $0x74] sm:$0x1]
      %v256 = vld [vmem:[%s219 + $0x78] sm:$0xf]
      %v257 = vld [vmem:[%s219 + $0x7c] sm:$0xf]
      %v258 = vld [vmem:[%s219 + $0x80] sm:$0x1]
      %v259 = vld [vmem:[%s219 + $0x84] sm:$0xf]
      %v260 = vld [vmem:[%s219 + $0x88] sm:$0xf]
      %v261 = vld [vmem:[%s219 + $0x8c] sm:$0x1]
      %v262 = vld [vmem:[%s219 + $0x90] sm:$0xf]
      %v263 = vld [vmem:[%s219 + $0x94] sm:$0xf]
      %v264 = vld [vmem:[%s219 + $0x98] sm:$0x1]
      %v265 = vld [vmem:[%s219 + $0x9c] sm:$0xf]
      %v266 = vld [vmem:[%s219 + $0xa0] sm:$0xf]
      %v267 = vld [vmem:[%s219 + $0xa4] sm:$0x1]
      %v268 = vld [vmem:[%s219 + $0xa8] sm:$0xf]
      %v269 = vld [vmem:[%s219 + $0xac] sm:$0xf]
      %v270 = vld [vmem:[%s219 + $0xb0] sm:$0x1]
      %v271 = vld [vmem:[%s219 + $0xb4] sm:$0xf]
      %v272 = vld [vmem:[%s219 + $0xb8] sm:$0xf]
      %v273 = vld [vmem:[%s219 + $0xbc] sm:$0x1]
      %v274 = vld [vmem:[%s219 + $0xc0] sm:$0xf]
      %v275 = vld [vmem:[%s219 + $0xc4] sm:$0xf]
      %v276 = vld [vmem:[%s219 + $0xc8] sm:$0x1]
      %v277 = vld [vmem:[%s219 + $0xcc] sm:$0xf]
      %v278 = vld [vmem:[%s219 + $0xd0] sm:$0xf]
      %v279 = vld [vmem:[%s219 + $0xd4] sm:$0x1]
      %v328 = vunpack.c.l.b16 %v226
      %v329 = vunpack.c.l.b16 %v227
      %v330 = vunpack.c.l.b16 %v228
      %v331 = vunpack.c.l.b16 %v229
      %v332 = vunpack.c.l.b16 %v230
      %v333 = vunpack.c.l.b16 %v231
      %v334 = vunpack.c.l.b16 %v232
      %v335 = vunpack.c.l.b16 %v233
      %v336 = vunpack.c.l.b16 %v234
      %v337 = vunpack.c.l.b16 %v235
      %v338 = vunpack.c.l.b16 %v236
      %v339 = vunpack.c.l.b16 %v237
      %v340 = vunpack.c.l.b16 %v238
      %v341 = vunpack.c.l.b16 %v239
      %v342 = vunpack.c.l.b16 %v240
      %v343 = vunpack.c.l.b16 %v241
      %v344 = vunpack.c.l.b16 %v242
      %v345 = vunpack.c.l.b16 %v243
      %v346 = vunpack.c.l.b16 %v244
      %v347 = vunpack.c.l.b16 %v245
      %v348 = vunpack.c.l.b16 %v246
      %v349 = vunpack.c.l.b16 %v247
      %v350 = vunpack.c.l.b16 %v248
      %v351 = vunpack.c.l.b16 %v249
      %v352 = vunpack.c.l.b16 %v250
      %v353 = vunpack.c.l.b16 %v251
      %v354 = vunpack.c.l.b16 %v252
      %v355 = vunpack.c.l.b16 %v253
      %v356 = vunpack.c.l.b16 %v254
      %v357 = vunpack.c.l.b16 %v255
      %v358 = vunpack.c.l.b16 %v256
      %v359 = vunpack.c.l.b16 %v257
      %v360 = vunpack.c.l.b16 %v258
      %v361 = vunpack.c.l.b16 %v259
      %v362 = vunpack.c.l.b16 %v260
      %v363 = vunpack.c.l.b16 %v261
      %v364 = vunpack.c.l.b16 %v262
      %v365 = vunpack.c.l.b16 %v263
      %v366 = vunpack.c.l.b16 %v264
      %v367 = vunpack.c.l.b16 %v265
      %v368 = vunpack.c.l.b16 %v266
      %v369 = vunpack.c.l.b16 %v267
      %v370 = vunpack.c.l.b16 %v268
      %v371 = vunpack.c.l.b16 %v269
      %v372 = vunpack.c.l.b16 %v270
      %v373 = vunpack.c.l.b16 %v271
      %v374 = vunpack.c.l.b16 %v272
      %v375 = vunpack.c.l.b16 %v273
      %v376 = vpack.c.b16 %v329, %v328
      %v377 = vpack.c.b16 %v330, %v330
      %v378 = vpack.c.b16 %v332, %v331
      %v379 = vpack.c.b16 %v333, %v333
      %v380 = vpack.c.b16 %v335, %v334
      %v381 = vpack.c.b16 %v336, %v336
      %v382 = vpack.c.b16 %v338, %v337
      %v383 = vpack.c.b16 %v339, %v339
      %v384 = vpack.c.b16 %v341, %v340
      %v385 = vpack.c.b16 %v342, %v342
      %v386 = vpack.c.b16 %v344, %v343
      %v387 = vpack.c.b16 %v345, %v345
      %v388 = vpack.c.b16 %v347, %v346
      %v389 = vpack.c.b16 %v348, %v348
      %v390 = vpack.c.b16 %v350, %v349
      %v391 = vpack.c.b16 %v351, %v351
      %v392 = vpack.c.b16 %v353, %v352
      %v393 = vpack.c.b16 %v354, %v354
      %v394 = vpack.c.b16 %v356, %v355
      %v395 = vpack.c.b16 %v357, %v357
      %v396 = vpack.c.b16 %v359, %v358
      %v397 = vpack.c.b16 %v360, %v360
      %v398 = vpack.c.b16 %v362, %v361
      %v399 = vpack.c.b16 %v363, %v363
      %v400 = vpack.c.b16 %v365, %v364
      %v401 = vpack.c.b16 %v366, %v366
      %v402 = vpack.c.b16 %v368, %v367
      %v403 = vpack.c.b16 %v369, %v369
      %v404 = vpack.c.b16 %v371, %v370
      %v405 = vpack.c.b16 %v372, %v372
      %v406 = vpack.c.b16 %v374, %v373
      %v407 = vpack.c.b16 %v375, %v375
      %v427 = vunpack.c.l.b16 %v274
      %v428 = vunpack.c.l.b16 %v275
      %v429 = vunpack.c.l.b16 %v276
      %v430 = vpack.c.b16 %v428, %v427
      %v431 = vpack.c.b16 %v429, %v429
      %v436 = vunpack.c.l.b16 %v277
      %v437 = vunpack.c.l.b16 %v278
      %v438 = vunpack.c.l.b16 %v279
      %v439 = vpack.c.b16 %v437, %v436
      %v440 = vpack.c.b16 %v438, %v438
      %v442 = vld [vmem:[%s1] sm:$0xf]
      %v443 = vld [vmem:[%s1 + $0x4] sm:$0xf]
      %v444 = vld [vmem:[%s1 + $0x8] sm:$0xf]
      %v445 = vld [vmem:[%s1 + $0xc] sm:$0xf]
      %v446 = vld [vmem:[%s1 + $0x10] sm:$0xf]
      %v447 = vld [vmem:[%s1 + $0x14] sm:$0xf]
      %v448 = vld [vmem:[%s1 + $0x18] sm:$0xf]
      %v449 = vld [vmem:[%s1 + $0x1c] sm:$0xf]
      %v450 = vld [vmem:[%s1 + $0x20] sm:$0xf]
      %v451 = vld [vmem:[%s1 + $0x24] sm:$0xf]
      %v452 = vld [vmem:[%s1 + $0x28] sm:$0xf]
      %v453 = vld [vmem:[%s1 + $0x2c] sm:$0xf]
      %v454 = vld [vmem:[%s1 + $0x30] sm:$0xf]
      %v455 = vld [vmem:[%s1 + $0x34] sm:$0xf]
      %v456 = vld [vmem:[%s1 + $0x38] sm:$0xf]
      %v457 = vld [vmem:[%s1 + $0x3c] sm:$0xf]
      %v458 = vld [vmem:[%s1 + $0x40] sm:$0xf]
      %v459 = vld [vmem:[%s1 + $0x44] sm:$0xf]
      %v460 = vld [vmem:[%s1 + $0x48] sm:$0xf]
      %v461 = vld [vmem:[%s1 + $0x4c] sm:$0xf]
      %v462 = vld [vmem:[%s1 + $0x50] sm:$0xf]
      %v463 = vld [vmem:[%s1 + $0x54] sm:$0xf]
      %v464 = vld [vmem:[%s1 + $0x58] sm:$0xf]
      %v465 = vld [vmem:[%s1 + $0x5c] sm:$0xf]
      %v466 = vld [vmem:[%s1 + $0x60] sm:$0xf]
      %v467 = vld [vmem:[%s1 + $0x64] sm:$0xf]
      %v468 = vld [vmem:[%s1 + $0x68] sm:$0xf]
      %v469 = vld [vmem:[%s1 + $0x6c] sm:$0xf]
      %v470 = vld [vmem:[%s1 + $0x70] sm:$0xf]
      %v471 = vld [vmem:[%s1 + $0x74] sm:$0xf]
      %v472 = vld [vmem:[%s1 + $0x78] sm:$0xf]
      %v473 = vld [vmem:[%s1 + $0x7c] sm:$0xf]
      %v474 = vld [vmem:[%s1 + $0x80] sm:$0xf]
      %v475 = vld [vmem:[%s1 + $0x84] sm:$0xf]
      %v476 = vld [vmem:[%s1 + $0x88] sm:$0xf]
      %v477 = vld [vmem:[%s1 + $0x8c] sm:$0xf]
      %v478 = vld [vmem:[%s1 + $0x90] sm:$0xf]
      %v479 = vld [vmem:[%s1 + $0x94] sm:$0xf]
      %v480 = vld [vmem:[%s1 + $0x98] sm:$0xf]
      %v481 = vld [vmem:[%s1 + $0x9c] sm:$0xf]
      %v482 = vld [vmem:[%s1 + $0xa0] sm:$0xf]
      %v483 = vld [vmem:[%s1 + $0xa4] sm:$0xf]
      %v484 = vld [vmem:[%s1 + $0xa8] sm:$0xf]
      %v485 = vld [vmem:[%s1 + $0xac] sm:$0xf]
      %v486 = vld [vmem:[%s1 + $0xb0] sm:$0xf]
      %v487 = vld [vmem:[%s1 + $0xb4] sm:$0xf]
      %v488 = vld [vmem:[%s1 + $0xb8] sm:$0xf]
      %v489 = vld [vmem:[%s1 + $0xbc] sm:$0xf]
      %vm490 = vsmask.f32 7424
      %v492 = vshrl.u32 %v376, 16
      %v494 = vshll.u32 %v376, 16
      %v496 = vrot.slane %v494, 1
      %v497 = vor.u32 %v492, %v496
      %v499 = vshll.u32 %v377, 16
      %v501 = vrot.slane %v499, 1
      %v502 = vsel %vm490, %v497, %v501
      %v504 = vshrl.u32 %v378, 16
      %v506 = vshll.u32 %v378, 16
      %v508 = vrot.slane %v506, 1
      %v509 = vor.u32 %v504, %v508
      %v511 = vshll.u32 %v379, 16
      %v513 = vrot.slane %v511, 1
      %v514 = vsel %vm490, %v509, %v513
      %v516 = vshrl.u32 %v380, 16
      %v518 = vshll.u32 %v380, 16
      %v520 = vrot.slane %v518, 1
      %v521 = vor.u32 %v516, %v520
      %v523 = vshll.u32 %v381, 16
      %v525 = vrot.slane %v523, 1
      %v526 = vsel %vm490, %v521, %v525
      %v528 = vshrl.u32 %v382, 16
      %v530 = vshll.u32 %v382, 16
      %v532 = vrot.slane %v530, 1
      %v533 = vor.u32 %v528, %v532
      %v535 = vshll.u32 %v383, 16
      %v537 = vrot.slane %v535, 1
      %v538 = vsel %vm490, %v533, %v537
      %v540 = vshrl.u32 %v384, 16
      %v542 = vshll.u32 %v384, 16
      %v544 = vrot.slane %v542, 1
      %v545 = vor.u32 %v540, %v544
      %v547 = vshll.u32 %v385, 16
      %v549 = vrot.slane %v547, 1
      %v550 = vsel %vm490, %v545, %v549
      %v552 = vshrl.u32 %v386, 16
      %v554 = vshll.u32 %v386, 16
      %v556 = vrot.slane %v554, 1
      %v557 = vor.u32 %v552, %v556
      %v559 = vshll.u32 %v387, 16
      %v561 = vrot.slane %v559, 1
      %v562 = vsel %vm490, %v557, %v561
      %v564 = vshrl.u32 %v388, 16
      %v566 = vshll.u32 %v388, 16
      %v568 = vrot.slane %v566, 1
      %v569 = vor.u32 %v564, %v568
      %v571 = vshll.u32 %v389, 16
      %v573 = vrot.slane %v571, 1
      %v574 = vsel %vm490, %v569, %v573
      %v576 = vshrl.u32 %v390, 16
      %v578 = vshll.u32 %v390, 16
      %v580 = vrot.slane %v578, 1
      %v581 = vor.u32 %v576, %v580
      %v583 = vshll.u32 %v391, 16
      %v585 = vrot.slane %v583, 1
      %v586 = vsel %vm490, %v581, %v585
      %v588 = vshrl.u32 %v392, 16
      %v590 = vshll.u32 %v392, 16
      %v592 = vrot.slane %v590, 1
      %v593 = vor.u32 %v588, %v592
      %v595 = vshll.u32 %v393, 16
      %v597 = vrot.slane %v595, 1
      %v598 = vsel %vm490, %v593, %v597
      %v600 = vshrl.u32 %v394, 16
      %v602 = vshll.u32 %v394, 16
      %v604 = vrot.slane %v602, 1
      %v605 = vor.u32 %v600, %v604
      %v607 = vshll.u32 %v395, 16
      %v609 = vrot.slane %v607, 1
      %v610 = vsel %vm490, %v605, %v609
      %v612 = vshrl.u32 %v396, 16
      %v614 = vshll.u32 %v396, 16
      %v616 = vrot.slane %v614, 1
      %v617 = vor.u32 %v612, %v616
      %v619 = vshll.u32 %v397, 16
      %v621 = vrot.slane %v619, 1
      %v622 = vsel %vm490, %v617, %v621
      %v624 = vshrl.u32 %v398, 16
      %v626 = vshll.u32 %v398, 16
      %v628 = vrot.slane %v626, 1
      %v629 = vor.u32 %v624, %v628
      %v631 = vshll.u32 %v399, 16
      %v633 = vrot.slane %v631, 1
      %v634 = vsel %vm490, %v629, %v633
      %v636 = vshrl.u32 %v400, 16
      %v638 = vshll.u32 %v400, 16
      %v640 = vrot.slane %v638, 1
      %v641 = vor.u32 %v636, %v640
      %v643 = vshll.u32 %v401, 16
      %v645 = vrot.slane %v643, 1
      %v646 = vsel %vm490, %v641, %v645
      %v648 = vshrl.u32 %v402, 16
      %v650 = vshll.u32 %v402, 16
      %v652 = vrot.slane %v650, 1
      %v653 = vor.u32 %v648, %v652
      %v655 = vshll.u32 %v403, 16
      %v657 = vrot.slane %v655, 1
      %v658 = vsel %vm490, %v653, %v657
      %v660 = vshrl.u32 %v404, 16
      %v662 = vshll.u32 %v404, 16
      %v664 = vrot.slane %v662, 1
      %v665 = vor.u32 %v660, %v664
      %v667 = vshll.u32 %v405, 16
      %v669 = vrot.slane %v667, 1
      %v670 = vsel %vm490, %v665, %v669
      %v672 = vshrl.u32 %v406, 16
      %v674 = vshll.u32 %v406, 16
      %v676 = vrot.slane %v674, 1
      %v677 = vor.u32 %v672, %v676
      %v679 = vshll.u32 %v407, 16
      %v681 = vrot.slane %v679, 1
      %v682 = vsel %vm490, %v677, %v681
      %v684 = vshrl.u32 %v430, 16
      %v686 = vshll.u32 %v430, 16
      %v688 = vrot.slane %v686, 1
      %v689 = vor.u32 %v684, %v688
      %v691 = vshll.u32 %v431, 16
      %v693 = vrot.slane %v691, 1
      %v694 = vsel %vm490, %v689, %v693
      %v696 = vshrl.u32 %v439, 16
      %v698 = vshll.u32 %v439, 16
      %v700 = vrot.slane %v698, 1
      %v701 = vor.u32 %v696, %v700
      %v703 = vshll.u32 %v440, 16
      %v705 = vrot.slane %v703, 1
      %v706 = vsel %vm490, %v701, %v705
      %s725 = scalar_lea.vmem %s1, 192
      %v726 = vld [vmem:[%s725] sm:$0xf]
      %v727 = vld [vmem:[%s725 + $0x4] sm:$0xf]
      %v728 = vld [vmem:[%s725 + $0x8] sm:$0xf]
      %v729 = vld [vmem:[%s725 + $0xc] sm:$0xf]
      %v730 = vld [vmem:[%s725 + $0x10] sm:$0xf]
      %v731 = vld [vmem:[%s725 + $0x14] sm:$0xf]
      %v732 = vld [vmem:[%s725 + $0x18] sm:$0xf]
      %v733 = vld [vmem:[%s725 + $0x1c] sm:$0xf]
      %v734 = vld [vmem:[%s725 + $0x20] sm:$0xf]
      %v735 = vld [vmem:[%s725 + $0x24] sm:$0xf]
      %v736 = vld [vmem:[%s725 + $0x28] sm:$0xf]
      %v737 = vld [vmem:[%s725 + $0x2c] sm:$0xf]
      %v738 = vld [vmem:[%s725 + $0x30] sm:$0xf]
      %v739 = vld [vmem:[%s725 + $0x34] sm:$0xf]
      %v740 = vld [vmem:[%s725 + $0x38] sm:$0xf]
      %v741 = vld [vmem:[%s725 + $0x3c] sm:$0xf]
      %v742 = vld [vmem:[%s725 + $0x40] sm:$0xf]
      %v743 = vld [vmem:[%s725 + $0x44] sm:$0xf]
      %v744 = vld [vmem:[%s725 + $0x48] sm:$0xf]
      %v745 = vld [vmem:[%s725 + $0x4c] sm:$0xf]
      %v746 = vld [vmem:[%s725 + $0x50] sm:$0xf]
      %v747 = vld [vmem:[%s725 + $0x54] sm:$0xf]
      %v748 = vld [vmem:[%s725 + $0x58] sm:$0xf]
      %v749 = vld [vmem:[%s725 + $0x5c] sm:$0xf]
      %v750 = vld [vmem:[%s725 + $0x60] sm:$0xf]
      %v751 = vld [vmem:[%s725 + $0x64] sm:$0xf]
      %v752 = vld [vmem:[%s725 + $0x68] sm:$0xf]
      %v753 = vld [vmem:[%s725 + $0x6c] sm:$0xf]
      %v754 = vld [vmem:[%s725 + $0x70] sm:$0xf]
      %v755 = vld [vmem:[%s725 + $0x74] sm:$0xf]
      %v756 = vld [vmem:[%s725 + $0x78] sm:$0xf]
      %v757 = vld [vmem:[%s725 + $0x7c] sm:$0xf]
      %v758 = vld [vmem:[%s725 + $0x80] sm:$0xf]
      %v759 = vld [vmem:[%s725 + $0x84] sm:$0xf]
      %v760 = vld [vmem:[%s725 + $0x88] sm:$0xf]
      %v761 = vld [vmem:[%s725 + $0x8c] sm:$0xf]
      %v762 = vld [vmem:[%s725 + $0x90] sm:$0xf]
      %v763 = vld [vmem:[%s725 + $0x94] sm:$0xf]
      %v764 = vld [vmem:[%s725 + $0x98] sm:$0xf]
      %v765 = vld [vmem:[%s725 + $0x9c] sm:$0xf]
      %v766 = vld [vmem:[%s725 + $0xa0] sm:$0xf]
      %v767 = vld [vmem:[%s725 + $0xa4] sm:$0xf]
      %v768 = vld [vmem:[%s725 + $0xa8] sm:$0xf]
      %v769 = vld [vmem:[%s725 + $0xac] sm:$0xf]
      %v770 = vld [vmem:[%s725 + $0xb0] sm:$0xf]
      %v771 = vld [vmem:[%s725 + $0xb4] sm:$0xf]
      %v772 = vld [vmem:[%s725 + $0xb8] sm:$0xf]
      %v773 = vld [vmem:[%s725 + $0xbc] sm:$0xf]
      %v822 = vunpack.c.l.b16 %v726
      %v823 = vunpack.c.l.b16 %v727
      %v824 = vunpack.c.l.b16 %v728
      %v825 = vunpack.c.l.b16 %v729
      %v826 = vunpack.c.l.b16 %v730
      %v827 = vunpack.c.l.b16 %v731
      %v828 = vunpack.c.l.b16 %v732
      %v829 = vunpack.c.l.b16 %v733
      %v830 = vunpack.c.l.b16 %v734
      %v831 = vunpack.c.l.b16 %v735
      %v832 = vunpack.c.l.b16 %v736
      %v833 = vunpack.c.l.b16 %v737
      %v834 = vunpack.c.l.b16 %v738
      %v835 = vunpack.c.l.b16 %v739
      %v836 = vunpack.c.l.b16 %v740
      %v837 = vunpack.c.l.b16 %v741
      %v838 = vunpack.c.l.b16 %v742
      %v839 = vunpack.c.l.b16 %v743
      %v840 = vunpack.c.l.b16 %v744
      %v841 = vunpack.c.l.b16 %v745
      %v842 = vunpack.c.l.b16 %v746
      %v843 = vunpack.c.l.b16 %v747
      %v844 = vunpack.c.l.b16 %v748
      %v845 = vunpack.c.l.b16 %v749
      %v846 = vunpack.c.l.b16 %v750
      %v847 = vunpack.c.l.b16 %v751
      %v848 = vunpack.c.l.b16 %v752
      %v849 = vunpack.c.l.b16 %v753
      %v850 = vunpack.c.l.b16 %v754
      %v851 = vunpack.c.l.b16 %v755
      %v852 = vunpack.c.l.b16 %v756
      %v853 = vunpack.c.l.b16 %v757
      %v854 = vunpack.c.l.b16 %v758
      %v855 = vunpack.c.l.b16 %v759
      %v856 = vunpack.c.l.b16 %v760
      %v857 = vunpack.c.l.b16 %v761
      %v858 = vunpack.c.l.b16 %v762
      %v859 = vunpack.c.l.b16 %v763
      %v860 = vunpack.c.l.b16 %v764
      %v861 = vunpack.c.l.b16 %v765
      %v862 = vunpack.c.l.b16 %v766
      %v863 = vunpack.c.l.b16 %v767
      %v864 = vunpack.c.l.b16 %v768
      %v865 = vunpack.c.l.b16 %v769
      %v866 = vunpack.c.l.b16 %v770
      %v867 = vunpack.c.l.b16 %v771
      %v868 = vunpack.c.l.b16 %v772
      %v869 = vunpack.c.l.b16 %v773
      %v870 = vpack.c.b16 %v823, %v822
      %v871 = vpack.c.b16 %v825, %v824
      %v872 = vpack.c.b16 %v827, %v826
      %v873 = vpack.c.b16 %v829, %v828
      %v874 = vpack.c.b16 %v831, %v830
      %v875 = vpack.c.b16 %v833, %v832
      %v876 = vpack.c.b16 %v835, %v834
      %v877 = vpack.c.b16 %v837, %v836
      %v878 = vpack.c.b16 %v839, %v838
      %v879 = vpack.c.b16 %v841, %v840
      %v880 = vpack.c.b16 %v843, %v842
      %v881 = vpack.c.b16 %v845, %v844
      %v882 = vpack.c.b16 %v847, %v846
      %v883 = vpack.c.b16 %v849, %v848
      %v884 = vpack.c.b16 %v851, %v850
      %v885 = vpack.c.b16 %v853, %v852
      %v886 = vpack.c.b16 %v855, %v854
      %v887 = vpack.c.b16 %v857, %v856
      %v888 = vpack.c.b16 %v859, %v858
      %v889 = vpack.c.b16 %v861, %v860
      %v890 = vpack.c.b16 %v863, %v862
      %v891 = vpack.c.b16 %v865, %v864
      %v892 = vpack.c.b16 %v867, %v866
      %v893 = vpack.c.b16 %v869, %v868
      %918 = vmatprep.subr.bf16.mxu0 0
      %919 = vmatpush1.bf16.msra.mxu0 %v870
      %920 = vmatprep.subr.bf16.mxu0 0
      %921 = vmatpush1.bf16.msra.mxu0 %v871
      %922 = vmatprep.subr.bf16.mxu0 0
      %923 = vmatpush1.bf16.msra.mxu0 %v872
      %924 = vmatprep.subr.bf16.mxu0 0
      %925 = vmatpush1.bf16.msra.mxu0 %v873
      %926 = vmatprep.subr.bf16.mxu0 0
      %927 = vmatpush1.bf16.msra.mxu0 %v874
      %928 = vmatprep.subr.bf16.mxu0 0
      %929 = vmatpush1.bf16.msra.mxu0 %v875
      %930 = vmatprep.subr.bf16.mxu0 0
      %931 = vmatpush1.bf16.msra.mxu0 %v876
      %932 = vmatprep.subr.bf16.mxu0 0
      %933 = vmatpush1.bf16.msra.mxu0 %v877
      %934 = vmatprep.subr.bf16.mxu0 0
      %935 = vmatpush1.bf16.msra.mxu0 %v878
      %936 = vmatprep.subr.bf16.mxu0 0
      %937 = vmatpush1.bf16.msra.mxu0 %v879
      %938 = vmatprep.subr.bf16.mxu0 0
      %939 = vmatpush1.bf16.msra.mxu0 %v880
      %940 = vmatprep.subr.bf16.mxu0 0
      %941 = vmatpush1.bf16.msra.mxu0 %v881
      %942 = vmatprep.subr.bf16.mxu0 0
      %943 = vmatpush1.bf16.msra.mxu0 %v882
      %944 = vmatprep.subr.bf16.mxu0 0
      %945 = vmatpush1.bf16.msra.mxu0 %v883
      %946 = vmatprep.subr.bf16.mxu0 0
      %947 = vmatpush1.bf16.msra.mxu0 %v884
      %948 = vmatprep.subr.bf16.mxu0 0
      %949 = vmatpush1.bf16.msra.mxu0 %v885
      %950 = vmatprep.mubr.bf16.mxu0 %v514
      %951 = vmatmul.mubr.bf16.gmra.mrb[0].mxu0 %v502
      %v952 = vpop.f32.mrb[0].mxu0
      %v953 = vadd.f32 0.0, %v952
      %v954 = vpop.f32.mrb[0].mxu0
      %v955 = vpop.f32.mrb[0].mxu0
      %v956 = vadd.f32 0.0, %v955
      %v957 = vpop.f32.mrb[0].mxu0
      %958 = vmatprep.mubr.bf16.mxu0 %v526
      %959 = vmatmul.mubr.bf16.gmra.mrb[0].mxu0 %v514
      %v960 = vpop.f32.mrb[0].mxu0
      %v961 = vadd.f32 0.0, %v960
      %v962 = vpop.f32.mrb[0].mxu0
      %v963 = vpop.f32.mrb[0].mxu0
      %v964 = vadd.f32 0.0, %v963
      %v965 = vpop.f32.mrb[0].mxu0
      %966 = vmatprep.mubr.bf16.mxu0 %v538
      %967 = vmatmul.mubr.bf16.gmra.mrb[0].mxu0 %v526
      %v968 = vpop.f32.mrb[0].mxu0
      %v969 = vadd.f32 0.0, %v968
      %v970 = vpop.f32.mrb[0].mxu0
      %v971 = vpop.f32.mrb[0].mxu0
      %v972 = vadd.f32 0.0, %v971
      %v973 = vpop.f32.mrb[0].mxu0
      %974 = vmatprep.mubr.bf16.mxu0 %v550
      %975 = vmatmul.mubr.bf16.gmra.mrb[0].mxu0 %v538
      %v976 = vpop.f32.mrb[0].mxu0
      %v977 = vadd.f32 0.0, %v976
      %v978 = vpop.f32.mrb[0].mxu0
      %v979 = vpop.f32.mrb[0].mxu0
      %v980 = vadd.f32 0.0, %v979
      %v981 = vpop.f32.mrb[0].mxu0
      %982 = vmatprep.mubr.bf16.mxu0 %v562
      %983 = vmatmul.mubr.bf16.gmra.mrb[0].mxu0 %v550
      %v984 = vpop.f32.mrb[0].mxu0
      %v985 = vadd.f32 0.0, %v984
      %v986 = vpop.f32.mrb[0].mxu0
      %v987 = vpop.f32.mrb[0].mxu0
      %v988 = vadd.f32 0.0, %v987
      %v989 = vpop.f32.mrb[0].mxu0
      %990 = vmatprep.mubr.bf16.mxu0 %v574
      %991 = vmatmul.mubr.bf16.gmra.mrb[0].mxu0 %v562
      %v992 = vpop.f32.mrb[0].mxu0
      %v993 = vadd.f32 0.0, %v992
      %v994 = vpop.f32.mrb[0].mxu0
      %v995 = vpop.f32.mrb[0].mxu0
      %v996 = vadd.f32 0.0, %v995
      %v997 = vpop.f32.mrb[0].mxu0
      %998 = vmatprep.mubr.bf16.mxu0 %v586
      %999 = vmatmul.mubr.bf16.gmra.mrb[0].mxu0 %v574
      %v1000 = vpop.f32.mrb[0].mxu0
      %v1001 = vadd.f32 0.0, %v1000
      %v1002 = vpop.f32.mrb[0].mxu0
      %v1003 = vpop.f32.mrb[0].mxu0
      %v1004 = vadd.f32 0.0, %v1003
      %v1005 = vpop.f32.mrb[0].mxu0
      %1006 = vmatprep.mubr.bf16.mxu0 %v598
      %1007 = vmatmul.mubr.bf16.gmra.mrb[0].mxu0 %v586
      %v1008 = vpop.f32.mrb[0].mxu0
      %v1009 = vadd.f32 0.0, %v1008
      %v1010 = vpop.f32.mrb[0].mxu0
      %v1011 = vpop.f32.mrb[0].mxu0
      %v1012 = vadd.f32 0.0, %v1011
      %v1013 = vpop.f32.mrb[0].mxu0
      %1014 = vmatprep.mubr.bf16.mxu0 %v610
      %1015 = vmatmul.mubr.bf16.gmra.mrb[0].mxu0 %v598
      %v1016 = vpop.f32.mrb[0].mxu0
      %v1017 = vadd.f32 0.0, %v1016
      %v1018 = vpop.f32.mrb[0].mxu0
      %v1019 = vpop.f32.mrb[0].mxu0
      %v1020 = vadd.f32 0.0, %v1019
      %v1021 = vpop.f32.mrb[0].mxu0
      %1022 = vmatprep.mubr.bf16.mxu0 %v622
      %1023 = vmatmul.mubr.bf16.gmra.mrb[0].mxu0 %v610
      %v1024 = vpop.f32.mrb[0].mxu0
      %v1025 = vadd.f32 0.0, %v1024
      %v1026 = vpop.f32.mrb[0].mxu0
      %v1027 = vpop.f32.mrb[0].mxu0
      %v1028 = vadd.f32 0.0, %v1027
      %v1029 = vpop.f32.mrb[0].mxu0
      %1030 = vmatprep.mubr.bf16.mxu0 %v634
      %1031 = vmatmul.mubr.bf16.gmra.mrb[0].mxu0 %v622
      %v1032 = vpop.f32.mrb[0].mxu0
      %v1033 = vadd.f32 0.0, %v1032
      %v1034 = vpop.f32.mrb[0].mxu0
      %v1035 = vpop.f32.mrb[0].mxu0
      %v1036 = vadd.f32 0.0, %v1035
      %v1037 = vpop.f32.mrb[0].mxu0
      %1038 = vmatprep.mubr.bf16.mxu0 %v646
      %1039 = vmatmul.mubr.bf16.gmra.mrb[0].mxu0 %v634
      %v1040 = vpop.f32.mrb[0].mxu0
      %v1041 = vadd.f32 0.0, %v1040
      %v1042 = vpop.f32.mrb[0].mxu0
      %v1043 = vpop.f32.mrb[0].mxu0
      %v1044 = vadd.f32 0.0, %v1043
      %v1045 = vpop.f32.mrb[0].mxu0
      %1046 = vmatprep.mubr.bf16.mxu0 %v658
      %1047 = vmatmul.mubr.bf16.gmra.mrb[0].mxu0 %v646
      %v1048 = vpop.f32.mrb[0].mxu0
      %v1049 = vadd.f32 0.0, %v1048
      %v1050 = vpop.f32.mrb[0].mxu0
      %v1051 = vpop.f32.mrb[0].mxu0
      %v1052 = vadd.f32 0.0, %v1051
      %v1053 = vpop.f32.mrb[0].mxu0
      %1054 = vmatprep.mubr.bf16.mxu0 %v670
      %1055 = vmatmul.mubr.bf16.gmra.mrb[0].mxu0 %v658
      %v1056 = vpop.f32.mrb[0].mxu0
      %v1057 = vadd.f32 0.0, %v1056
      %v1058 = vpop.f32.mrb[0].mxu0
      %v1059 = vpop.f32.mrb[0].mxu0
      %v1060 = vadd.f32 0.0, %v1059
      %v1061 = vpop.f32.mrb[0].mxu0
      %1062 = vmatprep.mubr.bf16.mxu0 %v682
      %1063 = vmatmul.mubr.bf16.gmra.mrb[0].mxu0 %v670
      %v1064 = vpop.f32.mrb[0].mxu0
      %v1065 = vadd.f32 0.0, %v1064
      %v1066 = vpop.f32.mrb[0].mxu0
      %v1067 = vpop.f32.mrb[0].mxu0
      %v1068 = vadd.f32 0.0, %v1067
      %v1069 = vpop.f32.mrb[0].mxu0
      %1070 = vmatprep.mubr.bf16.mxu0 %v694
      %1071 = vmatmul.mubr.bf16.gmra.mrb[0].mxu0 %v682
      %v1072 = vpop.f32.mrb[0].mxu0
      %v1073 = vadd.f32 0.0, %v1072
      %v1074 = vpop.f32.mrb[0].mxu0
      %v1075 = vpop.f32.mrb[0].mxu0
      %v1076 = vadd.f32 0.0, %v1075
      %v1077 = vpop.f32.mrb[0].mxu0
      %1078 = vdwg.mxu0
      %1079 = vmatprep.subr.bf16.mxu0 0
      %1080 = vmatpush1.bf16.msra.mxu0 %v886
      %1081 = vmatprep.subr.bf16.mxu0 0
      %1082 = vmatpush1.bf16.msra.mxu0 %v887
      %1083 = vmatprep.subr.bf16.mxu0 0
      %1084 = vmatpush1.bf16.msra.mxu0 %v888
      %1085 = vmatprep.subr.bf16.mxu0 0
      %1086 = vmatpush1.bf16.msra.mxu0 %v889
      %1087 = vmatprep.subr.bf16.mxu0 0
      %1088 = vmatpush1.bf16.msra.mxu0 %v890
      %1089 = vmatprep.subr.bf16.mxu0 0
      %1090 = vmatpush1.bf16.msra.mxu0 %v891
      %1091 = vmatprep.subr.bf16.mxu0 0
      %1092 = vmatpush1.bf16.msra.mxu0 %v892
      %1093 = vmatprep.subr.bf16.mxu0 0
      %1094 = vmatpush1.bf16.msra.mxu0 %v893
      %1095 = vmatprep.subr.bf16.mxu0 0
      %1096 = vmatpush1.bf16.msra.mxu0 0
      %1097 = vmatprep.subr.bf16.mxu0 0
      %1098 = vmatpush1.bf16.msra.mxu0 0
      %1099 = vmatprep.subr.bf16.mxu0 0
      %1100 = vmatpush1.bf16.msra.mxu0 0
      %1101 = vmatprep.subr.bf16.mxu0 0
      %1102 = vmatpush1.bf16.msra.mxu0 0
      %1103 = vmatprep.subr.bf16.mxu0 0
      %1104 = vmatpush1.bf16.msra.mxu0 0
      %1105 = vmatprep.subr.bf16.mxu0 0
      %1106 = vmatpush1.bf16.msra.mxu0 0
      %1107 = vmatprep.subr.bf16.mxu0 0
      %1108 = vmatpush1.bf16.msra.mxu0 0
      %1109 = vmatprep.subr.bf16.mxu0 0
      %1110 = vmatpush1.bf16.msra.mxu0 0
      %1111 = vmatprep.mubr.bf16.mxu0 0
      %1112 = vmatmul.mubr.bf16.gmra.mrb[0].mxu0 %v526
      %v1113 = vpop.f32.mrb[0].mxu0
      %v1114 = vadd.f32 %v953, %v1113
      %v1115 = vpop.f32.mrb[0].mxu0
      %v1116 = vpop.f32.mrb[0].mxu0
      %v1117 = vadd.f32 %v956, %v1116
      %v1118 = vpop.f32.mrb[0].mxu0
      %1119 = vmatprep.mubr.bf16.mxu0 0
      %1120 = vmatmul.mubr.bf16.gmra.mrb[0].mxu0 %v538
      %v1121 = vpop.f32.mrb[0].mxu0
      %v1122 = vadd.f32 %v961, %v1121
      %v1123 = vpop.f32.mrb[0].mxu0
      %v1124 = vpop.f32.mrb[0].mxu0
      %v1125 = vadd.f32 %v964, %v1124
      %v1126 = vpop.f32.mrb[0].mxu0
      %1127 = vmatprep.mubr.bf16.mxu0 0
      %1128 = vmatmul.mubr.bf16.gmra.mrb[0].mxu0 %v550
      %v1129 = vpop.f32.mrb[0].mxu0
      %v1130 = vadd.f32 %v969, %v1129
      %v1131 = vpop.f32.mrb[0].mxu0
      %v1132 = vpop.f32.mrb[0].mxu0
      %v1133 = vadd.f32 %v972, %v1132
      %v1134 = vpop.f32.mrb[0].mxu0
      %1135 = vmatprep.mubr.bf16.mxu0 0
      %1136 = vmatmul.mubr.bf16.gmra.mrb[0].mxu0 %v562
      %v1137 = vpop.f32.mrb[0].mxu0
      %v1138 = vadd.f32 %v977, %v1137
      %v1139 = vpop.f32.mrb[0].mxu0
      %v1140 = vpop.f32.mrb[0].mxu0
      %v1141 = vadd.f32 %v980, %v1140
      %v1142 = vpop.f32.mrb[0].mxu0
      %1143 = vmatprep.mubr.bf16.mxu0 0
      %1144 = vmatmul.mubr.bf16.gmra.mrb[0].mxu0 %v574
      %v1145 = vpop.f32.mrb[0].mxu0
      %v1146 = vadd.f32 %v985, %v1145
      %v1147 = vpop.f32.mrb[0].mxu0
      %v1148 = vpop.f32.mrb[0].mxu0
      %v1149 = vadd.f32 %v988, %v1148
      %v1150 = vpop.f32.mrb[0].mxu0
      %1151 = vmatprep.mubr.bf16.mxu0 0
      %1152 = vmatmul.mubr.bf16.gmra.mrb[0].mxu0 %v586
      %v1153 = vpop.f32.mrb[0].mxu0
      %v1154 = vadd.f32 %v993, %v1153
      %v1155 = vpop.f32.mrb[0].mxu0
      %v1156 = vpop.f32.mrb[0].mxu0
      %v1157 = vadd.f32 %v996, %v1156
      %v1158 = vpop.f32.mrb[0].mxu0
      %1159 = vmatprep.mubr.bf16.mxu0 0
      %1160 = vmatmul.mubr.bf16.gmra.mrb[0].mxu0 %v598
      %v1161 = vpop.f32.mrb[0].mxu0
      %v1162 = vadd.f32 %v1001, %v1161
      %v1163 = vpop.f32.mrb[0].mxu0
      %v1164 = vpop.f32.mrb[0].mxu0
      %v1165 = vadd.f32 %v1004, %v1164
      %v1166 = vpop.f32.mrb[0].mxu0
      %1167 = vmatprep.mubr.bf16.mxu0 0
      %1168 = vmatmul.mubr.bf16.gmra.mrb[0].mxu0 %v610
      %v1169 = vpop.f32.mrb[0].mxu0
      %v1170 = vadd.f32 %v1009, %v1169
      %v1171 = vpop.f32.mrb[0].mxu0
      %v1172 = vpop.f32.mrb[0].mxu0
      %v1173 = vadd.f32 %v1012, %v1172
      %v1174 = vpop.f32.mrb[0].mxu0
      %1175 = vmatprep.mubr.bf16.mxu0 0
      %1176 = vmatmul.mubr.bf16.gmra.mrb[0].mxu0 %v622
      %v1177 = vpop.f32.mrb[0].mxu0
      %v1178 = vadd.f32 %v1017, %v1177
      %v1179 = vpop.f32.mrb[0].mxu0
      %v1180 = vpop.f32.mrb[0].mxu0
      %v1181 = vadd.f32 %v1020, %v1180
      %v1182 = vpop.f32.mrb[0].mxu0
      %1183 = vmatprep.mubr.bf16.mxu0 0
      %1184 = vmatmul.mubr.bf16.gmra.mrb[0].mxu0 %v634
      %v1185 = vpop.f32.mrb[0].mxu0
      %v1186 = vadd.f32 %v1025, %v1185
      %v1187 = vpop.f32.mrb[0].mxu0
      %v1188 = vpop.f32.mrb[0].mxu0
      %v1189 = vadd.f32 %v1028, %v1188
      %v1190 = vpop.f32.mrb[0].mxu0
      %1191 = vmatprep.mubr.bf16.mxu0 0
      %1192 = vmatmul.mubr.bf16.gmra.mrb[0].mxu0 %v646
      %v1193 = vpop.f32.mrb[0].mxu0
      %v1194 = vadd.f32 %v1033, %v1193
      %v1195 = vpop.f32.mrb[0].mxu0
      %v1196 = vpop.f32.mrb[0].mxu0
      %v1197 = vadd.f32 %v1036, %v1196
      %v1198 = vpop.f32.mrb[0].mxu0
      %1199 = vmatprep.mubr.bf16.mxu0 0
      %1200 = vmatmul.mubr.bf16.gmra.mrb[0].mxu0 %v658
      %v1201 = vpop.f32.mrb[0].mxu0
      %v1202 = vadd.f32 %v1041, %v1201
      %v1203 = vpop.f32.mrb[0].mxu0
      %v1204 = vpop.f32.mrb[0].mxu0
      %v1205 = vadd.f32 %v1044, %v1204
      %v1206 = vpop.f32.mrb[0].mxu0
      %1207 = vmatprep.mubr.bf16.mxu0 0
      %1208 = vmatmul.mubr.bf16.gmra.mrb[0].mxu0 %v670
      %v1209 = vpop.f32.mrb[0].mxu0
      %v1210 = vadd.f32 %v1049, %v1209
      %v1211 = vpop.f32.mrb[0].mxu0
      %v1212 = vpop.f32.mrb[0].mxu0
      %v1213 = vadd.f32 %v1052, %v1212
      %v1214 = vpop.f32.mrb[0].mxu0
      %1215 = vmatprep.mubr.bf16.mxu0 0
      %1216 = vmatmul.mubr.bf16.gmra.mrb[0].mxu0 %v682
      %v1217 = vpop.f32.mrb[0].mxu0
      %v1218 = vadd.f32 %v1057, %v1217
      %v1219 = vpop.f32.mrb[0].mxu0
      %v1220 = vpop.f32.mrb[0].mxu0
      %v1221 = vadd.f32 %v1060, %v1220
      %v1222 = vpop.f32.mrb[0].mxu0
      %1223 = vmatprep.mubr.bf16.mxu0 0
      %1224 = vmatmul.mubr.bf16.gmra.mrb[0].mxu0 %v694
      %v1225 = vpop.f32.mrb[0].mxu0
      %v1226 = vadd.f32 %v1065, %v1225
      %v1227 = vpop.f32.mrb[0].mxu0
      %v1228 = vpop.f32.mrb[0].mxu0
      %v1229 = vadd.f32 %v1068, %v1228
      %v1230 = vpop.f32.mrb[0].mxu0
      %1231 = vmatprep.mubr.bf16.mxu0 0
      %1232 = vmatmul.mubr.bf16.gmra.mrb[0].mxu0 %v706
      %v1233 = vpop.f32.mrb[0].mxu0
      %v1234 = vadd.f32 %v1073, %v1233
      %v1235 = vpop.f32.mrb[0].mxu0
      %v1236 = vpop.f32.mrb[0].mxu0
      %v1237 = vadd.f32 %v1076, %v1236
      %v1238 = vpop.f32.mrb[0].mxu0
      %1239 = vdwg.mxu0
      %v1288 = vunpack.c.l.b16 %v442
      %v1289 = vunpack.c.l.b16 %v443
      %v1290 = vunpack.c.l.b16 %v444
      %v1291 = vunpack.c.l.b16 %v445
      %v1292 = vunpack.c.l.b16 %v446
      %v1293 = vunpack.c.l.b16 %v447
      %v1294 = vunpack.c.l.b16 %v448
      %v1295 = vunpack.c.l.b16 %v449
      %v1296 = vunpack.c.l.b16 %v450
      %v1297 = vunpack.c.l.b16 %v451
      %v1298 = vunpack.c.l.b16 %v452
      %v1299 = vunpack.c.l.b16 %v453
      %v1300 = vunpack.c.l.b16 %v454
      %v1301 = vunpack.c.l.b16 %v455
      %v1302 = vunpack.c.l.b16 %v456
      %v1303 = vunpack.c.l.b16 %v457
      %v1304 = vunpack.c.l.b16 %v458
      %v1305 = vunpack.c.l.b16 %v459
      %v1306 = vunpack.c.l.b16 %v460
      %v1307 = vunpack.c.l.b16 %v461
      %v1308 = vunpack.c.l.b16 %v462
      %v1309 = vunpack.c.l.b16 %v463
      %v1310 = vunpack.c.l.b16 %v464
      %v1311 = vunpack.c.l.b16 %v465
      %v1312 = vunpack.c.l.b16 %v466
      %v1313 = vunpack.c.l.b16 %v467
      %v1314 = vunpack.c.l.b16 %v468
      %v1315 = vunpack.c.l.b16 %v469
      %v1316 = vunpack.c.l.b16 %v470
      %v1317 = vunpack.c.l.b16 %v471
      %v1318 = vunpack.c.l.b16 %v472
      %v1319 = vunpack.c.l.b16 %v473
      %v1320 = vunpack.c.l.b16 %v474
      %v1321 = vunpack.c.l.b16 %v475
      %v1322 = vunpack.c.l.b16 %v476
      %v1323 = vunpack.c.l.b16 %v477
      %v1324 = vunpack.c.l.b16 %v478
      %v1325 = vunpack.c.l.b16 %v479
      %v1326 = vunpack.c.l.b16 %v480
      %v1327 = vunpack.c.l.b16 %v481
      %v1328 = vunpack.c.l.b16 %v482
      %v1329 = vunpack.c.l.b16 %v483
      %v1330 = vunpack.c.l.b16 %v484
      %v1331 = vunpack.c.l.b16 %v485
      %v1332 = vunpack.c.l.b16 %v486
      %v1333 = vunpack.c.l.b16 %v487
      %v1334 = vunpack.c.l.b16 %v488
      %v1335 = vunpack.c.l.b16 %v489
      %v1336 = vpack.c.b16 %v1289, %v1288
      %v1337 = vpack.c.b16 %v1291, %v1290
      %v1338 = vpack.c.b16 %v1293, %v1292
      %v1339 = vpack.c.b16 %v1295, %v1294
      %v1340 = vpack.c.b16 %v1297, %v1296
      %v1341 = vpack.c.b16 %v1299, %v1298
      %v1342 = vpack.c.b16 %v1301, %v1300
      %v1343 = vpack.c.b16 %v1303, %v1302
      %v1344 = vpack.c.b16 %v1305, %v1304
      %v1345 = vpack.c.b16 %v1307, %v1306
      %v1346 = vpack.c.b16 %v1309, %v1308
      %v1347 = vpack.c.b16 %v1311, %v1310
      %v1348 = vpack.c.b16 %v1313, %v1312
      %v1349 = vpack.c.b16 %v1315, %v1314
      %v1350 = vpack.c.b16 %v1317, %v1316
      %v1351 = vpack.c.b16 %v1319, %v1318
      %v1352 = vpack.c.b16 %v1321, %v1320
      %v1353 = vpack.c.b16 %v1323, %v1322
      %v1354 = vpack.c.b16 %v1325, %v1324
      %v1355 = vpack.c.b16 %v1327, %v1326
      %v1356 = vpack.c.b16 %v1329, %v1328
      %v1357 = vpack.c.b16 %v1331, %v1330
      %v1358 = vpack.c.b16 %v1333, %v1332
      %v1359 = vpack.c.b16 %v1335, %v1334
      %1384 = vmatprep.subr.bf16.mxu0 0
      %1385 = vmatpush1.bf16.msra.mxu0 %v1336
      %1386 = vmatprep.subr.bf16.mxu0 0
      %1387 = vmatpush1.bf16.msra.mxu0 %v1337
      %1388 = vmatprep.subr.bf16.mxu0 0
      %1389 = vmatpush1.bf16.msra.mxu0 %v1338
      %1390 = vmatprep.subr.bf16.mxu0 0
      %1391 = vmatpush1.bf16.msra.mxu0 %v1339
      %1392 = vmatprep.subr.bf16.mxu0 0
      %1393 = vmatpush1.bf16.msra.mxu0 %v1340
      %1394 = vmatprep.subr.bf16.mxu0 0
      %1395 = vmatpush1.bf16.msra.mxu0 %v1341
      %1396 = vmatprep.subr.bf16.mxu0 0
      %1397 = vmatpush1.bf16.msra.mxu0 %v1342
      %1398 = vmatprep.subr.bf16.mxu0 0
      %1399 = vmatpush1.bf16.msra.mxu0 %v1343
      %1400 = vmatprep.subr.bf16.mxu0 0
      %1401 = vmatpush1.bf16.msra.mxu0 %v1344
      %1402 = vmatprep.subr.bf16.mxu0 0
      %1403 = vmatpush1.bf16.msra.mxu0 %v1345
      %1404 = vmatprep.subr.bf16.mxu0 0
      %1405 = vmatpush1.bf16.msra.mxu0 %v1346
      %1406 = vmatprep.subr.bf16.mxu0 0
      %1407 = vmatpush1.bf16.msra.mxu0 %v1347
      %1408 = vmatprep.subr.bf16.mxu0 0
      %1409 = vmatpush1.bf16.msra.mxu0 %v1348
      %1410 = vmatprep.subr.bf16.mxu0 0
      %1411 = vmatpush1.bf16.msra.mxu0 %v1349
      %1412 = vmatprep.subr.bf16.mxu0 0
      %1413 = vmatpush1.bf16.msra.mxu0 %v1350
      %1414 = vmatprep.subr.bf16.mxu0 0
      %1415 = vmatpush1.bf16.msra.mxu0 %v1351
      %1416 = vmatprep.mubr.bf16.mxu0 %v378
      %1417 = vmatmul.mubr.bf16.gmra.mrb[0].mxu0 %v376
      %v1418 = vpop.f32.mrb[0].mxu0
      %v1419 = vadd.f32 %v1114, %v1418
      %v1420 = vpop.f32.mrb[0].mxu0
      %v1421 = vpop.f32.mrb[0].mxu0
      %v1422 = vadd.f32 %v1117, %v1421
      %v1423 = vpop.f32.mrb[0].mxu0
      %1424 = vmatprep.mubr.bf16.mxu0 %v380
      %1425 = vmatmul.mubr.bf16.gmra.mrb[0].mxu0 %v378
      %v1426 = vpop.f32.mrb[0].mxu0
      %v1427 = vadd.f32 %v1122, %v1426
      %v1428 = vpop.f32.mrb[0].mxu0
      %v1429 = vpop.f32.mrb[0].mxu0
      %v1430 = vadd.f32 %v1125, %v1429
      %v1431 = vpop.f32.mrb[0].mxu0
      %1432 = vmatprep.mubr.bf16.mxu0 %v382
      %1433 = vmatmul.mubr.bf16.gmra.mrb[0].mxu0 %v380
      %v1434 = vpop.f32.mrb[0].mxu0
      %v1435 = vadd.f32 %v1130, %v1434
      %v1436 = vpop.f32.mrb[0].mxu0
      %v1437 = vpop.f32.mrb[0].mxu0
      %v1438 = vadd.f32 %v1133, %v1437
      %v1439 = vpop.f32.mrb[0].mxu0
      %1440 = vmatprep.mubr.bf16.mxu0 %v384
      %1441 = vmatmul.mubr.bf16.gmra.mrb[0].mxu0 %v382
      %v1442 = vpop.f32.mrb[0].mxu0
      %v1443 = vadd.f32 %v1138, %v1442
      %v1444 = vpop.f32.mrb[0].mxu0
      %v1445 = vpop.f32.mrb[0].mxu0
      %v1446 = vadd.f32 %v1141, %v1445
      %v1447 = vpop.f32.mrb[0].mxu0
      %1448 = vmatprep.mubr.bf16.mxu0 %v386
      %1449 = vmatmul.mubr.bf16.gmra.mrb[0].mxu0 %v384
      %v1450 = vpop.f32.mrb[0].mxu0
      %v1451 = vadd.f32 %v1146, %v1450
      %v1452 = vpop.f32.mrb[0].mxu0
      %v1453 = vpop.f32.mrb[0].mxu0
      %v1454 = vadd.f32 %v1149, %v1453
      %v1455 = vpop.f32.mrb[0].mxu0
      %1456 = vmatprep.mubr.bf16.mxu0 %v388
      %1457 = vmatmul.mubr.bf16.gmra.mrb[0].mxu0 %v386
      %v1458 = vpop.f32.mrb[0].mxu0
      %v1459 = vadd.f32 %v1154, %v1458
      %v1460 = vpop.f32.mrb[0].mxu0
      %v1461 = vpop.f32.mrb[0].mxu0
      %v1462 = vadd.f32 %v1157, %v1461
      %v1463 = vpop.f32.mrb[0].mxu0
      %1464 = vmatprep.mubr.bf16.mxu0 %v390
      %1465 = vmatmul.mubr.bf16.gmra.mrb[0].mxu0 %v388
      %v1466 = vpop.f32.mrb[0].mxu0
      %v1467 = vadd.f32 %v1162, %v1466
      %v1468 = vpop.f32.mrb[0].mxu0
      %v1469 = vpop.f32.mrb[0].mxu0
      %v1470 = vadd.f32 %v1165, %v1469
      %v1471 = vpop.f32.mrb[0].mxu0
      %1472 = vmatprep.mubr.bf16.mxu0 %v392
      %1473 = vmatmul.mubr.bf16.gmra.mrb[0].mxu0 %v390
      %v1474 = vpop.f32.mrb[0].mxu0
      %v1475 = vadd.f32 %v1170, %v1474
      %v1476 = vpop.f32.mrb[0].mxu0
      %v1477 = vpop.f32.mrb[0].mxu0
      %v1478 = vadd.f32 %v1173, %v1477
      %v1479 = vpop.f32.mrb[0].mxu0
      %1480 = vmatprep.mubr.bf16.mxu0 %v394
      %1481 = vmatmul.mubr.bf16.gmra.mrb[0].mxu0 %v392
      %v1482 = vpop.f32.mrb[0].mxu0
      %v1483 = vadd.f32 %v1178, %v1482
      %v1484 = vpop.f32.mrb[0].mxu0
      %v1485 = vpop.f32.mrb[0].mxu0
      %v1486 = vadd.f32 %v1181, %v1485
      %v1487 = vpop.f32.mrb[0].mxu0
      %1488 = vmatprep.mubr.bf16.mxu0 %v396
      %1489 = vmatmul.mubr.bf16.gmra.mrb[0].mxu0 %v394
      %v1490 = vpop.f32.mrb[0].mxu0
      %v1491 = vadd.f32 %v1186, %v1490
      %v1492 = vpop.f32.mrb[0].mxu0
      %v1493 = vpop.f32.mrb[0].mxu0
      %v1494 = vadd.f32 %v1189, %v1493
      %v1495 = vpop.f32.mrb[0].mxu0
      %1496 = vmatprep.mubr.bf16.mxu0 %v398
      %1497 = vmatmul.mubr.bf16.gmra.mrb[0].mxu0 %v396
      %v1498 = vpop.f32.mrb[0].mxu0
      %v1499 = vadd.f32 %v1194, %v1498
      %v1500 = vpop.f32.mrb[0].mxu0
      %v1501 = vpop.f32.mrb[0].mxu0
      %v1502 = vadd.f32 %v1197, %v1501
      %v1503 = vpop.f32.mrb[0].mxu0
      %1504 = vmatprep.mubr.bf16.mxu0 %v400
      %1505 = vmatmul.mubr.bf16.gmra.mrb[0].mxu0 %v398
      %v1506 = vpop.f32.mrb[0].mxu0
      %v1507 = vadd.f32 %v1202, %v1506
      %v1508 = vpop.f32.mrb[0].mxu0
      %v1509 = vpop.f32.mrb[0].mxu0
      %v1510 = vadd.f32 %v1205, %v1509
      %v1511 = vpop.f32.mrb[0].mxu0
      %1512 = vmatprep.mubr.bf16.mxu0 %v402
      %1513 = vmatmul.mubr.bf16.gmra.mrb[0].mxu0 %v400
      %v1514 = vpop.f32.mrb[0].mxu0
      %v1515 = vadd.f32 %v1210, %v1514
      %v1516 = vpop.f32.mrb[0].mxu0
      %v1517 = vpop.f32.mrb[0].mxu0
      %v1518 = vadd.f32 %v1213, %v1517
      %v1519 = vpop.f32.mrb[0].mxu0
      %1520 = vmatprep.mubr.bf16.mxu0 %v404
      %1521 = vmatmul.mubr.bf16.gmra.mrb[0].mxu0 %v402
      %v1522 = vpop.f32.mrb[0].mxu0
      %v1523 = vadd.f32 %v1218, %v1522
      %v1524 = vpop.f32.mrb[0].mxu0
      %v1525 = vpop.f32.mrb[0].mxu0
      %v1526 = vadd.f32 %v1221, %v1525
      %v1527 = vpop.f32.mrb[0].mxu0
      %1528 = vmatprep.mubr.bf16.mxu0 %v406
      %1529 = vmatmul.mubr.bf16.gmra.mrb[0].mxu0 %v404
      %v1530 = vpop.f32.mrb[0].mxu0
      %v1531 = vadd.f32 %v1226, %v1530
      %v1532 = vpop.f32.mrb[0].mxu0
      %v1533 = vpop.f32.mrb[0].mxu0
      %v1534 = vadd.f32 %v1229, %v1533
      %v1535 = vpop.f32.mrb[0].mxu0
      %1536 = vmatprep.mubr.bf16.mxu0 %v430
      %1537 = vmatmul.mubr.bf16.gmra.mrb[0].mxu0 %v406
      %v1538 = vpop.f32.mrb[0].mxu0
      %v1539 = vadd.f32 %v1234, %v1538
      %v1540 = vpop.f32.mrb[0].mxu0
      %v1541 = vpop.f32.mrb[0].mxu0
      %v1542 = vadd.f32 %v1237, %v1541
      %v1543 = vpop.f32.mrb[0].mxu0
      %1544 = vdwg.mxu0
      %1545 = vmatprep.subr.bf16.mxu0 0
      %1546 = vmatpush1.bf16.msra.mxu0 %v1352
      %1547 = vmatprep.subr.bf16.mxu0 0
      %1548 = vmatpush1.bf16.msra.mxu0 %v1353
      %1549 = vmatprep.subr.bf16.mxu0 0
      %1550 = vmatpush1.bf16.msra.mxu0 %v1354
      %1551 = vmatprep.subr.bf16.mxu0 0
      %1552 = vmatpush1.bf16.msra.mxu0 %v1355
      %1553 = vmatprep.subr.bf16.mxu0 0
      %1554 = vmatpush1.bf16.msra.mxu0 %v1356
      %1555 = vmatprep.subr.bf16.mxu0 0
      %1556 = vmatpush1.bf16.msra.mxu0 %v1357
      %1557 = vmatprep.subr.bf16.mxu0 0
      %1558 = vmatpush1.bf16.msra.mxu0 %v1358
      %1559 = vmatprep.subr.bf16.mxu0 0
      %1560 = vmatpush1.bf16.msra.mxu0 %v1359
      %1561 = vmatprep.subr.bf16.mxu0 0
      %1562 = vmatpush1.bf16.msra.mxu0 0
      %1563 = vmatprep.subr.bf16.mxu0 0
      %1564 = vmatpush1.bf16.msra.mxu0 0
      %1565 = vmatprep.subr.bf16.mxu0 0
      %1566 = vmatpush1.bf16.msra.mxu0 0
      %1567 = vmatprep.subr.bf16.mxu0 0
      %1568 = vmatpush1.bf16.msra.mxu0 0
      %1569 = vmatprep.subr.bf16.mxu0 0
      %1570 = vmatpush1.bf16.msra.mxu0 0
      %1571 = vmatprep.subr.bf16.mxu0 0
      %1572 = vmatpush1.bf16.msra.mxu0 0
      %1573 = vmatprep.subr.bf16.mxu0 0
      %1574 = vmatpush1.bf16.msra.mxu0 0
      %1575 = vmatprep.subr.bf16.mxu0 0
      %1576 = vmatpush1.bf16.msra.mxu0 0
      %1577 = vmatprep.mubr.bf16.mxu0 0
      %1578 = vmatmul.mubr.bf16.gmra.mrb[0].mxu0 %v380
      %v1579 = vpop.f32.mrb[0].mxu0
      %v1580 = vadd.f32 %v1419, %v1579
      %v1581 = vpop.f32.mrb[0].mxu0
      %v1582 = vpop.f32.mrb[0].mxu0
      %v1583 = vadd.f32 %v1422, %v1582
      %v1584 = vpop.f32.mrb[0].mxu0
      %1585 = vmatprep.mubr.bf16.mxu0 0
      %1586 = vmatmul.mubr.bf16.gmra.mrb[0].mxu0 %v382
      %v1587 = vpop.f32.mrb[0].mxu0
      %v1588 = vadd.f32 %v1427, %v1587
      %v1589 = vpop.f32.mrb[0].mxu0
      %v1590 = vpop.f32.mrb[0].mxu0
      %v1591 = vadd.f32 %v1430, %v1590
      %v1592 = vpop.f32.mrb[0].mxu0
      %1593 = vmatprep.mubr.bf16.mxu0 0
      %1594 = vmatmul.mubr.bf16.gmra.mrb[0].mxu0 %v384
      %v1595 = vpop.f32.mrb[0].mxu0
      %v1596 = vadd.f32 %v1435, %v1595
      %v1597 = vpop.f32.mrb[0].mxu0
      %v1598 = vpop.f32.mrb[0].mxu0
      %v1599 = vadd.f32 %v1438, %v1598
      %v1600 = vpop.f32.mrb[0].mxu0
      %1601 = vmatprep.mubr.bf16.mxu0 0
      %1602 = vmatmul.mubr.bf16.gmra.mrb[0].mxu0 %v386
      %v1603 = vpop.f32.mrb[0].mxu0
      %v1604 = vadd.f32 %v1443, %v1603
      %v1605 = vpop.f32.mrb[0].mxu0
      %v1606 = vpop.f32.mrb[0].mxu0
      %v1607 = vadd.f32 %v1446, %v1606
      %v1608 = vpop.f32.mrb[0].mxu0
      %1609 = vmatprep.mubr.bf16.mxu0 0
      %1610 = vmatmul.mubr.bf16.gmra.mrb[0].mxu0 %v388
      %v1611 = vpop.f32.mrb[0].mxu0
      %v1612 = vadd.f32 %v1451, %v1611
      %v1613 = vpop.f32.mrb[0].mxu0
      %v1614 = vpop.f32.mrb[0].mxu0
      %v1615 = vadd.f32 %v1454, %v1614
      %v1616 = vpop.f32.mrb[0].mxu0
      %1617 = vmatprep.mubr.bf16.mxu0 0
      %1618 = vmatmul.mubr.bf16.gmra.mrb[0].mxu0 %v390
      %v1619 = vpop.f32.mrb[0].mxu0
      %v1620 = vadd.f32 %v1459, %v1619
      %v1621 = vpop.f32.mrb[0].mxu0
      %v1622 = vpop.f32.mrb[0].mxu0
      %v1623 = vadd.f32 %v1462, %v1622
      %v1624 = vpop.f32.mrb[0].mxu0
      %1625 = vmatprep.mubr.bf16.mxu0 0
      %1626 = vmatmul.mubr.bf16.gmra.mrb[0].mxu0 %v392
      %v1627 = vpop.f32.mrb[0].mxu0
      %v1628 = vadd.f32 %v1467, %v1627
      %v1629 = vpop.f32.mrb[0].mxu0
      %v1630 = vpop.f32.mrb[0].mxu0
      %v1631 = vadd.f32 %v1470, %v1630
      %v1632 = vpop.f32.mrb[0].mxu0
      %1633 = vmatprep.mubr.bf16.mxu0 0
      %1634 = vmatmul.mubr.bf16.gmra.mrb[0].mxu0 %v394
      %v1635 = vpop.f32.mrb[0].mxu0
      %v1636 = vadd.f32 %v1475, %v1635
      %v1637 = vpop.f32.mrb[0].mxu0
      %v1638 = vpop.f32.mrb[0].mxu0
      %v1639 = vadd.f32 %v1478, %v1638
      %v1640 = vpop.f32.mrb[0].mxu0
      %1641 = vmatprep.mubr.bf16.mxu0 0
      %1642 = vmatmul.mubr.bf16.gmra.mrb[0].mxu0 %v396
      %v1643 = vpop.f32.mrb[0].mxu0
      %v1644 = vadd.f32 %v1483, %v1643
      %v1645 = vpop.f32.mrb[0].mxu0
      %v1646 = vpop.f32.mrb[0].mxu0
      %v1647 = vadd.f32 %v1486, %v1646
      %v1648 = vpop.f32.mrb[0].mxu0
      %1649 = vmatprep.mubr.bf16.mxu0 0
      %1650 = vmatmul.mubr.bf16.gmra.mrb[0].mxu0 %v398
      %v1651 = vpop.f32.mrb[0].mxu0
      %v1652 = vadd.f32 %v1491, %v1651
      %v1653 = vpop.f32.mrb[0].mxu0
      %v1654 = vpop.f32.mrb[0].mxu0
      %v1655 = vadd.f32 %v1494, %v1654
      %v1656 = vpop.f32.mrb[0].mxu0
      %1657 = vmatprep.mubr.bf16.mxu0 0
      %1658 = vmatmul.mubr.bf16.gmra.mrb[0].mxu0 %v400
      %v1659 = vpop.f32.mrb[0].mxu0
      %v1660 = vadd.f32 %v1499, %v1659
      %v1661 = vpop.f32.mrb[0].mxu0
      %v1662 = vpop.f32.mrb[0].mxu0
      %v1663 = vadd.f32 %v1502, %v1662
      %v1664 = vpop.f32.mrb[0].mxu0
      %1665 = vmatprep.mubr.bf16.mxu0 0
      %1666 = vmatmul.mubr.bf16.gmra.mrb[0].mxu0 %v402
      %v1667 = vpop.f32.mrb[0].mxu0
      %v1668 = vadd.f32 %v1507, %v1667
      %v1669 = vpop.f32.mrb[0].mxu0
      %v1670 = vpop.f32.mrb[0].mxu0
      %v1671 = vadd.f32 %v1510, %v1670
      %v1672 = vpop.f32.mrb[0].mxu0
      %1673 = vmatprep.mubr.bf16.mxu0 0
      %1674 = vmatmul.mubr.bf16.gmra.mrb[0].mxu0 %v404
      %v1675 = vpop.f32.mrb[0].mxu0
      %v1676 = vadd.f32 %v1515, %v1675
      %v1677 = vpop.f32.mrb[0].mxu0
      %v1678 = vpop.f32.mrb[0].mxu0
      %v1679 = vadd.f32 %v1518, %v1678
      %v1680 = vpop.f32.mrb[0].mxu0
      %1681 = vmatprep.mubr.bf16.mxu0 0
      %1682 = vmatmul.mubr.bf16.gmra.mrb[0].mxu0 %v406
      %v1683 = vpop.f32.mrb[0].mxu0
      %v1684 = vadd.f32 %v1523, %v1683
      %v1685 = vpop.f32.mrb[0].mxu0
      %v1686 = vpop.f32.mrb[0].mxu0
      %v1687 = vadd.f32 %v1526, %v1686
      %v1688 = vpop.f32.mrb[0].mxu0
      %1689 = vmatprep.mubr.bf16.mxu0 0
      %1690 = vmatmul.mubr.bf16.gmra.mrb[0].mxu0 %v430
      %v1691 = vpop.f32.mrb[0].mxu0
      %v1692 = vadd.f32 %v1531, %v1691
      %v1693 = vpop.f32.mrb[0].mxu0
      %v1694 = vpop.f32.mrb[0].mxu0
      %v1695 = vadd.f32 %v1534, %v1694
      %v1696 = vpop.f32.mrb[0].mxu0
      %1697 = vmatprep.mubr.bf16.mxu0 0
      %1698 = vmatmul.mubr.bf16.gmra.mrb[0].mxu0 %v439
      %v1699 = vpop.f32.mrb[0].mxu0
      %v1700 = vadd.f32 %v1539, %v1699
      %v1701 = vpop.f32.mrb[0].mxu0
      %v1702 = vpop.f32.mrb[0].mxu0
      %v1703 = vadd.f32 %v1542, %v1702
      %v1704 = vpop.f32.mrb[0].mxu0
      %1705 = vdwg.mxu0
      %vm1706 = vcmask 1046528
      %v1707 = vrot.slane %v376, 1
      %v1708 = vrot.slane %v377, 1
      %v1709 = vsel %vm1706, %v1707, %v1708
      %v1710 = vrot.slane %v378, 1
      %v1711 = vrot.slane %v379, 1
      %v1712 = vsel %vm1706, %v1710, %v1711
      %v1713 = vrot.slane %v380, 1
      %v1714 = vrot.slane %v381, 1
      %v1715 = vsel %vm1706, %v1713, %v1714
      %v1716 = vrot.slane %v382, 1
      %v1717 = vrot.slane %v383, 1
      %v1718 = vsel %vm1706, %v1716, %v1717
      %v1719 = vrot.slane %v384, 1
      %v1720 = vrot.slane %v385, 1
      %v1721 = vsel %vm1706, %v1719, %v1720
      %v1722 = vrot.slane %v386, 1
      %v1723 = vrot.slane %v387, 1
      %v1724 = vsel %vm1706, %v1722, %v1723
      %v1725 = vrot.slane %v388, 1
      %v1726 = vrot.slane %v389, 1
      %v1727 = vsel %vm1706, %v1725, %v1726
      %v1728 = vrot.slane %v390, 1
      %v1729 = vrot.slane %v391, 1
      %v1730 = vsel %vm1706, %v1728, %v1729
      %v1731 = vrot.slane %v392, 1
      %v1732 = vrot.slane %v393, 1
      %v1733 = vsel %vm1706, %v1731, %v1732
      %v1734 = vrot.slane %v394, 1
      %v1735 = vrot.slane %v395, 1
      %v1736 = vsel %vm1706, %v1734, %v1735
      %v1737 = vrot.slane %v396, 1
      %v1738 = vrot.slane %v397, 1
      %v1739 = vsel %vm1706, %v1737, %v1738
      %v1740 = vrot.slane %v398, 1
      %v1741 = vrot.slane %v399, 1
      %v1742 = vsel %vm1706, %v1740, %v1741
      %v1743 = vrot.slane %v400, 1
      %v1744 = vrot.slane %v401, 1
      %v1745 = vsel %vm1706, %v1743, %v1744
      %v1746 = vrot.slane %v402, 1
      %v1747 = vrot.slane %v403, 1
      %v1748 = vsel %vm1706, %v1746, %v1747
      %v1749 = vrot.slane %v404, 1
      %v1750 = vrot.slane %v405, 1
      %v1751 = vsel %vm1706, %v1749, %v1750
      %v1752 = vrot.slane %v406, 1
      %v1753 = vrot.slane %v407, 1
      %v1754 = vsel %vm1706, %v1752, %v1753
      %v1755 = vrot.slane %v430, 1
      %v1756 = vrot.slane %v431, 1
      %v1757 = vsel %vm1706, %v1755, %v1756
      %v1758 = vrot.slane %v439, 1
      %v1759 = vrot.slane %v440, 1
      %v1760 = vsel %vm1706, %v1758, %v1759
      %s1779 = scalar_lea.vmem %s1, 384
      %v1780 = vld [vmem:[%s1779] sm:$0xf]
      %v1781 = vld [vmem:[%s1779 + $0x4] sm:$0xf]
      %v1782 = vld [vmem:[%s1779 + $0x8] sm:$0xf]
      %v1783 = vld [vmem:[%s1779 + $0xc] sm:$0xf]
      %v1784 = vld [vmem:[%s1779 + $0x10] sm:$0xf]
      %v1785 = vld [vmem:[%s1779 + $0x14] sm:$0xf]
      %v1786 = vld [vmem:[%s1779 + $0x18] sm:$0xf]
      %v1787 = vld [vmem:[%s1779 + $0x1c] sm:$0xf]
      %v1788 = vld [vmem:[%s1779 + $0x20] sm:$0xf]
      %v1789 = vld [vmem:[%s1779 + $0x24] sm:$0xf]
      %v1790 = vld [vmem:[%s1779 + $0x28] sm:$0xf]
      %v1791 = vld [vmem:[%s1779 + $0x2c] sm:$0xf]
      %v1792 = vld [vmem:[%s1779 + $0x30] sm:$0xf]
      %v1793 = vld [vmem:[%s1779 + $0x34] sm:$0xf]
      %v1794 = vld [vmem:[%s1779 + $0x38] sm:$0xf]
      %v1795 = vld [vmem:[%s1779 + $0x3c] sm:$0xf]
      %v1796 = vld [vmem:[%s1779 + $0x40] sm:$0xf]
      %v1797 = vld [vmem:[%s1779 + $0x44] sm:$0xf]
      %v1798 = vld [vmem:[%s1779 + $0x48] sm:$0xf]
      %v1799 = vld [vmem:[%s1779 + $0x4c] sm:$0xf]
      %v1800 = vld [vmem:[%s1779 + $0x50] sm:$0xf]
      %v1801 = vld [vmem:[%s1779 + $0x54] sm:$0xf]
      %v1802 = vld [vmem:[%s1779 + $0x58] sm:$0xf]
      %v1803 = vld [vmem:[%s1779 + $0x5c] sm:$0xf]
      %v1804 = vld [vmem:[%s1779 + $0x60] sm:$0xf]
      %v1805 = vld [vmem:[%s1779 + $0x64] sm:$0xf]
      %v1806 = vld [vmem:[%s1779 + $0x68] sm:$0xf]
      %v1807 = vld [vmem:[%s1779 + $0x6c] sm:$0xf]
      %v1808 = vld [vmem:[%s1779 + $0x70] sm:$0xf]
      %v1809 = vld [vmem:[%s1779 + $0x74] sm:$0xf]
      %v1810 = vld [vmem:[%s1779 + $0x78] sm:$0xf]
      %v1811 = vld [vmem:[%s1779 + $0x7c] sm:$0xf]
      %v1812 = vld [vmem:[%s1779 + $0x80] sm:$0xf]
      %v1813 = vld [vmem:[%s1779 + $0x84] sm:$0xf]
      %v1814 = vld [vmem:[%s1779 + $0x88] sm:$0xf]
      %v1815 = vld [vmem:[%s1779 + $0x8c] sm:$0xf]
      %v1816 = vld [vmem:[%s1779 + $0x90] sm:$0xf]
      %v1817 = vld [vmem:[%s1779 + $0x94] sm:$0xf]
      %v1818 = vld [vmem:[%s1779 + $0x98] sm:$0xf]
      %v1819 = vld [vmem:[%s1779 + $0x9c] sm:$0xf]
      %v1820 = vld [vmem:[%s1779 + $0xa0] sm:$0xf]
      %v1821 = vld [vmem:[%s1779 + $0xa4] sm:$0xf]
      %v1822 = vld [vmem:[%s1779 + $0xa8] sm:$0xf]
      %v1823 = vld [vmem:[%s1779 + $0xac] sm:$0xf]
      %v1824 = vld [vmem:[%s1779 + $0xb0] sm:$0xf]
      %v1825 = vld [vmem:[%s1779 + $0xb4] sm:$0xf]
      %v1826 = vld [vmem:[%s1779 + $0xb8] sm:$0xf]
      %v1827 = vld [vmem:[%s1779 + $0xbc] sm:$0xf]
      %v1876 = vunpack.c.l.b16 %v1780
      %v1877 = vunpack.c.l.b16 %v1781
      %v1878 = vunpack.c.l.b16 %v1782
      %v1879 = vunpack.c.l.b16 %v1783
      %v1880 = vunpack.c.l.b16 %v1784
      %v1881 = vunpack.c.l.b16 %v1785
      %v1882 = vunpack.c.l.b16 %v1786
      %v1883 = vunpack.c.l.b16 %v1787
      %v1884 = vunpack.c.l.b16 %v1788
      %v1885 = vunpack.c.l.b16 %v1789
      %v1886 = vunpack.c.l.b16 %v1790
      %v1887 = vunpack.c.l.b16 %v1791
      %v1888 = vunpack.c.l.b16 %v1792
      %v1889 = vunpack.c.l.b16 %v1793
      %v1890 = vunpack.c.l.b16 %v1794
      %v1891 = vunpack.c.l.b16 %v1795
      %v1892 = vunpack.c.l.b16 %v1796
      %v1893 = vunpack.c.l.b16 %v1797
      %v1894 = vunpack.c.l.b16 %v1798
      %v1895 = vunpack.c.l.b16 %v1799
      %v1896 = vunpack.c.l.b16 %v1800
      %v1897 = vunpack.c.l.b16 %v1801
      %v1898 = vunpack.c.l.b16 %v1802
      %v1899 = vunpack.c.l.b16 %v1803
      %v1900 = vunpack.c.l.b16 %v1804
      %v1901 = vunpack.c.l.b16 %v1805
      %v1902 = vunpack.c.l.b16 %v1806
      %v1903 = vunpack.c.l.b16 %v1807
      %v1904 = vunpack.c.l.b16 %v1808
      %v1905 = vunpack.c.l.b16 %v1809
      %v1906 = vunpack.c.l.b16 %v1810
      %v1907 = vunpack.c.l.b16 %v1811
      %v1908 = vunpack.c.l.b16 %v1812
      %v1909 = vunpack.c.l.b16 %v1813
      %v1910 = vunpack.c.l.b16 %v1814
      %v1911 = vunpack.c.l.b16 %v1815
      %v1912 = vunpack.c.l.b16 %v1816
      %v1913 = vunpack.c.l.b16 %v1817
      %v1914 = vunpack.c.l.b16 %v1818
      %v1915 = vunpack.c.l.b16 %v1819
      %v1916 = vunpack.c.l.b16 %v1820
      %v1917 = vunpack.c.l.b16 %v1821
      %v1918 = vunpack.c.l.b16 %v1822
      %v1919 = vunpack.c.l.b16 %v1823
      %v1920 = vunpack.c.l.b16 %v1824
      %v1921 = vunpack.c.l.b16 %v1825
      %v1922 = vunpack.c.l.b16 %v1826
      %v1923 = vunpack.c.l.b16 %v1827
      %v1924 = vpack.c.b16 %v1877, %v1876
      %v1925 = vpack.c.b16 %v1879, %v1878
      %v1926 = vpack.c.b16 %v1881, %v1880
      %v1927 = vpack.c.b16 %v1883, %v1882
      %v1928 = vpack.c.b16 %v1885, %v1884
      %v1929 = vpack.c.b16 %v1887, %v1886
      %v1930 = vpack.c.b16 %v1889, %v1888
      %v1931 = vpack.c.b16 %v1891, %v1890
      %v1932 = vpack.c.b16 %v1893, %v1892
      %v1933 = vpack.c.b16 %v1895, %v1894
      %v1934 = vpack.c.b16 %v1897, %v1896
      %v1935 = vpack.c.b16 %v1899, %v1898
      %v1936 = vpack.c.b16 %v1901, %v1900
      %v1937 = vpack.c.b16 %v1903, %v1902
      %v1938 = vpack.c.b16 %v1905, %v1904
      %v1939 = vpack.c.b16 %v1907, %v1906
      %v1940 = vpack.c.b16 %v1909, %v1908
      %v1941 = vpack.c.b16 %v1911, %v1910
      %v1942 = vpack.c.b16 %v1913, %v1912
      %v1943 = vpack.c.b16 %v1915, %v1914
      %v1944 = vpack.c.b16 %v1917, %v1916
      %v1945 = vpack.c.b16 %v1919, %v1918
      %v1946 = vpack.c.b16 %v1921, %v1920
      %v1947 = vpack.c.b16 %v1923, %v1922
      %1972 = vmatprep.subr.bf16.mxu0 0
      %1973 = vmatpush1.bf16.msra.mxu0 %v1924
      %1974 = vmatprep.subr.bf16.mxu0 0
      %1975 = vmatpush1.bf16.msra.mxu0 %v1925
      %1976 = vmatprep.subr.bf16.mxu0 0
      %1977 = vmatpush1.bf16.msra.mxu0 %v1926
      %1978 = vmatprep.subr.bf16.mxu0 0
      %1979 = vmatpush1.bf16.msra.mxu0 %v1927
      %1980 = vmatprep.subr.bf16.mxu0 0
      %1981 = vmatpush1.bf16.msra.mxu0 %v1928
      %1982 = vmatprep.subr.bf16.mxu0 0
      %1983 = vmatpush1.bf16.msra.mxu0 %v1929
      %1984 = vmatprep.subr.bf16.mxu0 0
      %1985 = vmatpush1.bf16.msra.mxu0 %v1930
      %1986 = vmatprep.subr.bf16.mxu0 0
      %1987 = vmatpush1.bf16.msra.mxu0 %v1931
      %1988 = vmatprep.subr.bf16.mxu0 0
      %1989 = vmatpush1.bf16.msra.mxu0 %v1932
      %1990 = vmatprep.subr.bf16.mxu0 0
      %1991 = vmatpush1.bf16.msra.mxu0 %v1933
      %1992 = vmatprep.subr.bf16.mxu0 0
      %1993 = vmatpush1.bf16.msra.mxu0 %v1934
      %1994 = vmatprep.subr.bf16.mxu0 0
      %1995 = vmatpush1.bf16.msra.mxu0 %v1935
      %1996 = vmatprep.subr.bf16.mxu0 0
      %1997 = vmatpush1.bf16.msra.mxu0 %v1936
      %1998 = vmatprep.subr.bf16.mxu0 0
      %1999 = vmatpush1.bf16.msra.mxu0 %v1937
      %2000 = vmatprep.subr.bf16.mxu0 0
      %2001 = vmatpush1.bf16.msra.mxu0 %v1938
      %2002 = vmatprep.subr.bf16.mxu0 0
      %2003 = vmatpush1.bf16.msra.mxu0 %v1939
      %2004 = vmatprep.mubr.bf16.mxu0 %v1712
      %2005 = vmatmul.mubr.bf16.gmra.mrb[0].mxu0 %v1709
      %v2006 = vpop.f32.mrb[0].mxu0
      %v2007 = vadd.f32 0.0, %v2006
      %v2008 = vpop.f32.mrb[0].mxu0
      %v2009 = vpop.f32.mrb[0].mxu0
      %v2010 = vadd.f32 0.0, %v2009
      %v2011 = vpop.f32.mrb[0].mxu0
      %2012 = vmatprep.mubr.bf16.mxu0 %v1715
      %2013 = vmatmul.mubr.bf16.gmra.mrb[0].mxu0 %v1712
      %v2014 = vpop.f32.mrb[0].mxu0
      %v2015 = vadd.f32 0.0, %v2014
      %v2016 = vpop.f32.mrb[0].mxu0
      %v2017 = vpop.f32.mrb[0].mxu0
      %v2018 = vadd.f32 0.0, %v2017
      %v2019 = vpop.f32.mrb[0].mxu0
      %2020 = vmatprep.mubr.bf16.mxu0 %v1718
      %2021 = vmatmul.mubr.bf16.gmra.mrb[0].mxu0 %v1715
      %v2022 = vpop.f32.mrb[0].mxu0
      %v2023 = vadd.f32 0.0, %v2022
      %v2024 = vpop.f32.mrb[0].mxu0
      %v2025 = vpop.f32.mrb[0].mxu0
      %v2026 = vadd.f32 0.0, %v2025
      %v2027 = vpop.f32.mrb[0].mxu0
      %2028 = vmatprep.mubr.bf16.mxu0 %v1721
      %2029 = vmatmul.mubr.bf16.gmra.mrb[0].mxu0 %v1718
      %v2030 = vpop.f32.mrb[0].mxu0
      %v2031 = vadd.f32 0.0, %v2030
      %v2032 = vpop.f32.mrb[0].mxu0
      %v2033 = vpop.f32.mrb[0].mxu0
      %v2034 = vadd.f32 0.0, %v2033
      %v2035 = vpop.f32.mrb[0].mxu0
      %2036 = vmatprep.mubr.bf16.mxu0 %v1724
      %2037 = vmatmul.mubr.bf16.gmra.mrb[0].mxu0 %v1721
      %v2038 = vpop.f32.mrb[0].mxu0
      %v2039 = vadd.f32 0.0, %v2038
      %v2040 = vpop.f32.mrb[0].mxu0
      %v2041 = vpop.f32.mrb[0].mxu0
      %v2042 = vadd.f32 0.0, %v2041
      %v2043 = vpop.f32.mrb[0].mxu0
      %2044 = vmatprep.mubr.bf16.mxu0 %v1727
      %2045 = vmatmul.mubr.bf16.gmra.mrb[0].mxu0 %v1724
      %v2046 = vpop.f32.mrb[0].mxu0
      %v2047 = vadd.f32 0.0, %v2046
      %v2048 = vpop.f32.mrb[0].mxu0
      %v2049 = vpop.f32.mrb[0].mxu0
      %v2050 = vadd.f32 0.0, %v2049
      %v2051 = vpop.f32.mrb[0].mxu0
      %2052 = vmatprep.mubr.bf16.mxu0 %v1730
      %2053 = vmatmul.mubr.bf16.gmra.mrb[0].mxu0 %v1727
      %v2054 = vpop.f32.mrb[0].mxu0
      %v2055 = vadd.f32 0.0, %v2054
      %v2056 = vpop.f32.mrb[0].mxu0
      %v2057 = vpop.f32.mrb[0].mxu0
      %v2058 = vadd.f32 0.0, %v2057
      %v2059 = vpop.f32.mrb[0].mxu0
      %2060 = vmatprep.mubr.bf16.mxu0 %v1733
      %2061 = vmatmul.mubr.bf16.gmra.mrb[0].mxu0 %v1730
      %v2062 = vpop.f32.mrb[0].mxu0
      %v2063 = vadd.f32 0.0, %v2062
      %v2064 = vpop.f32.mrb[0].mxu0
      %v2065 = vpop.f32.mrb[0].mxu0
      %v2066 = vadd.f32 0.0, %v2065
      %v2067 = vpop.f32.mrb[0].mxu0
      %2068 = vmatprep.mubr.bf16.mxu0 %v1736
      %2069 = vmatmul.mubr.bf16.gmra.mrb[0].mxu0 %v1733
      %v2070 = vpop.f32.mrb[0].mxu0
      %v2071 = vadd.f32 0.0, %v2070
      %v2072 = vpop.f32.mrb[0].mxu0
      %v2073 = vpop.f32.mrb[0].mxu0
      %v2074 = vadd.f32 0.0, %v2073
      %v2075 = vpop.f32.mrb[0].mxu0
      %2076 = vmatprep.mubr.bf16.mxu0 %v1739
      %2077 = vmatmul.mubr.bf16.gmra.mrb[0].mxu0 %v1736
      %v2078 = vpop.f32.mrb[0].mxu0
      %v2079 = vadd.f32 0.0, %v2078
      %v2080 = vpop.f32.mrb[0].mxu0
      %v2081 = vpop.f32.mrb[0].mxu0
      %v2082 = vadd.f32 0.0, %v2081
      %v2083 = vpop.f32.mrb[0].mxu0
      %2084 = vmatprep.mubr.bf16.mxu0 %v1742
      %2085 = vmatmul.mubr.bf16.gmra.mrb[0].mxu0 %v1739
      %v2086 = vpop.f32.mrb[0].mxu0
      %v2087 = vadd.f32 0.0, %v2086
      %v2088 = vpop.f32.mrb[0].mxu0
      %v2089 = vpop.f32.mrb[0].mxu0
      %v2090 = vadd.f32 0.0, %v2089
      %v2091 = vpop.f32.mrb[0].mxu0
      %2092 = vmatprep.mubr.bf16.mxu0 %v1745
      %2093 = vmatmul.mubr.bf16.gmra.mrb[0].mxu0 %v1742
      %v2094 = vpop.f32.mrb[0].mxu0
      %v2095 = vadd.f32 0.0, %v2094
      %v2096 = vpop.f32.mrb[0].mxu0
      %v2097 = vpop.f32.mrb[0].mxu0
      %v2098 = vadd.f32 0.0, %v2097
      %v2099 = vpop.f32.mrb[0].mxu0
      %2100 = vmatprep.mubr.bf16.mxu0 %v1748
      %2101 = vmatmul.mubr.bf16.gmra.mrb[0].mxu0 %v1745
      %v2102 = vpop.f32.mrb[0].mxu0
      %v2103 = vadd.f32 0.0, %v2102
      %v2104 = vpop.f32.mrb[0].mxu0
      %v2105 = vpop.f32.mrb[0].mxu0
      %v2106 = vadd.f32 0.0, %v2105
      %v2107 = vpop.f32.mrb[0].mxu0
      %2108 = vmatprep.mubr.bf16.mxu0 %v1751
      %2109 = vmatmul.mubr.bf16.gmra.mrb[0].mxu0 %v1748
      %v2110 = vpop.f32.mrb[0].mxu0
      %v2111 = vadd.f32 0.0, %v2110
      %v2112 = vpop.f32.mrb[0].mxu0
      %v2113 = vpop.f32.mrb[0].mxu0
      %v2114 = vadd.f32 0.0, %v2113
      %v2115 = vpop.f32.mrb[0].mxu0
      %2116 = vmatprep.mubr.bf16.mxu0 %v1754
      %2117 = vmatmul.mubr.bf16.gmra.mrb[0].mxu0 %v1751
      %v2118 = vpop.f32.mrb[0].mxu0
      %v2119 = vadd.f32 0.0, %v2118
      %v2120 = vpop.f32.mrb[0].mxu0
      %v2121 = vpop.f32.mrb[0].mxu0
      %v2122 = vadd.f32 0.0, %v2121
      %v2123 = vpop.f32.mrb[0].mxu0
      %2124 = vmatprep.mubr.bf16.mxu0 %v1757
      %2125 = vmatmul.mubr.bf16.gmra.mrb[0].mxu0 %v1754
      %v2126 = vpop.f32.mrb[0].mxu0
      %v2127 = vadd.f32 0.0, %v2126
      %v2128 = vpop.f32.mrb[0].mxu0
      %v2129 = vpop.f32.mrb[0].mxu0
      %v2130 = vadd.f32 0.0, %v2129
      %v2131 = vpop.f32.mrb[0].mxu0
      %2132 = vdwg.mxu0
      %2133 = vmatprep.subr.bf16.mxu0 0
      %2134 = vmatpush1.bf16.msra.mxu0 %v1940
      %2135 = vmatprep.subr.bf16.mxu0 0
      %2136 = vmatpush1.bf16.msra.mxu0 %v1941
      %2137 = vmatprep.subr.bf16.mxu0 0
      %2138 = vmatpush1.bf16.msra.mxu0 %v1942
      %2139 = vmatprep.subr.bf16.mxu0 0
      %2140 = vmatpush1.bf16.msra.mxu0 %v1943
      %2141 = vmatprep.subr.bf16.mxu0 0
      %2142 = vmatpush1.bf16.msra.mxu0 %v1944
      %2143 = vmatprep.subr.bf16.mxu0 0
      %2144 = vmatpush1.bf16.msra.mxu0 %v1945
      %2145 = vmatprep.subr.bf16.mxu0 0
      %2146 = vmatpush1.bf16.msra.mxu0 %v1946
      %2147 = vmatprep.subr.bf16.mxu0 0
      %2148 = vmatpush1.bf16.msra.mxu0 %v1947
      %2149 = vmatprep.subr.bf16.mxu0 0
      %2150 = vmatpush1.bf16.msra.mxu0 0
      %2151 = vmatprep.subr.bf16.mxu0 0
      %2152 = vmatpush1.bf16.msra.mxu0 0
      %2153 = vmatprep.subr.bf16.mxu0 0
      %2154 = vmatpush1.bf16.msra.mxu0 0
      %2155 = vmatprep.subr.bf16.mxu0 0
      %2156 = vmatpush1.bf16.msra.mxu0 0
      %2157 = vmatprep.subr.bf16.mxu0 0
      %2158 = vmatpush1.bf16.msra.mxu0 0
      %2159 = vmatprep.subr.bf16.mxu0 0
      %2160 = vmatpush1.bf16.msra.mxu0 0
      %2161 = vmatprep.subr.bf16.mxu0 0
      %2162 = vmatpush1.bf16.msra.mxu0 0
      %2163 = vmatprep.subr.bf16.mxu0 0
      %2164 = vmatpush1.bf16.msra.mxu0 0
      %2165 = vmatprep.mubr.bf16.mxu0 0
      %2166 = vmatmul.mubr.bf16.gmra.mrb[0].mxu0 %v1715
      %v2167 = vpop.f32.mrb[0].mxu0
      %v2168 = vadd.f32 %v2007, %v2167
      %v2169 = vpop.f32.mrb[0].mxu0
      %v2170 = vpop.f32.mrb[0].mxu0
      %v2171 = vadd.f32 %v2010, %v2170
      %v2172 = vpop.f32.mrb[0].mxu0
      %2173 = vmatprep.mubr.bf16.mxu0 0
      %2174 = vmatmul.mubr.bf16.gmra.mrb[0].mxu0 %v1718
      %v2175 = vpop.f32.mrb[0].mxu0
      %v2176 = vadd.f32 %v2015, %v2175
      %v2177 = vpop.f32.mrb[0].mxu0
      %v2178 = vpop.f32.mrb[0].mxu0
      %v2179 = vadd.f32 %v2018, %v2178
      %v2180 = vpop.f32.mrb[0].mxu0
      %2181 = vmatprep.mubr.bf16.mxu0 0
      %2182 = vmatmul.mubr.bf16.gmra.mrb[0].mxu0 %v1721
      %v2183 = vpop.f32.mrb[0].mxu0
      %v2184 = vadd.f32 %v2023, %v2183
      %v2185 = vpop.f32.mrb[0].mxu0
      %v2186 = vpop.f32.mrb[0].mxu0
      %v2187 = vadd.f32 %v2026, %v2186
      %v2188 = vpop.f32.mrb[0].mxu0
      %2189 = vmatprep.mubr.bf16.mxu0 0
      %2190 = vmatmul.mubr.bf16.gmra.mrb[0].mxu0 %v1724
      %v2191 = vpop.f32.mrb[0].mxu0
      %v2192 = vadd.f32 %v2031, %v2191
      %v2193 = vpop.f32.mrb[0].mxu0
      %v2194 = vpop.f32.mrb[0].mxu0
      %v2195 = vadd.f32 %v2034, %v2194
      %v2196 = vpop.f32.mrb[0].mxu0
      %2197 = vmatprep.mubr.bf16.mxu0 0
      %2198 = vmatmul.mubr.bf16.gmra.mrb[0].mxu0 %v1727
      %v2199 = vpop.f32.mrb[0].mxu0
      %v2200 = vadd.f32 %v2039, %v2199
      %v2201 = vpop.f32.mrb[0].mxu0
      %v2202 = vpop.f32.mrb[0].mxu0
      %v2203 = vadd.f32 %v2042, %v2202
      %v2204 = vpop.f32.mrb[0].mxu0
      %2205 = vmatprep.mubr.bf16.mxu0 0
      %2206 = vmatmul.mubr.bf16.gmra.mrb[0].mxu0 %v1730
      %v2207 = vpop.f32.mrb[0].mxu0
      %v2208 = vadd.f32 %v2047, %v2207
      %v2209 = vpop.f32.mrb[0].mxu0
      %v2210 = vpop.f32.mrb[0].mxu0
      %v2211 = vadd.f32 %v2050, %v2210
      %v2212 = vpop.f32.mrb[0].mxu0
      %2213 = vmatprep.mubr.bf16.mxu0 0
      %2214 = vmatmul.mubr.bf16.gmra.mrb[0].mxu0 %v1733
      %v2215 = vpop.f32.mrb[0].mxu0
      %v2216 = vadd.f32 %v2055, %v2215
      %v2217 = vpop.f32.mrb[0].mxu0
      %v2218 = vpop.f32.mrb[0].mxu0
      %v2219 = vadd.f32 %v2058, %v2218
      %v2220 = vpop.f32.mrb[0].mxu0
      %2221 = vmatprep.mubr.bf16.mxu0 0
      %2222 = vmatmul.mubr.bf16.gmra.mrb[0].mxu0 %v1736
      %v2223 = vpop.f32.mrb[0].mxu0
      %v2224 = vadd.f32 %v2063, %v2223
      %v2225 = vpop.f32.mrb[0].mxu0
      %v2226 = vpop.f32.mrb[0].mxu0
      %v2227 = vadd.f32 %v2066, %v2226
      %v2228 = vpop.f32.mrb[0].mxu0
      %2229 = vmatprep.mubr.bf16.mxu0 0
      %2230 = vmatmul.mubr.bf16.gmra.mrb[0].mxu0 %v1739
      %v2231 = vpop.f32.mrb[0].mxu0
      %v2232 = vadd.f32 %v2071, %v2231
      %v2233 = vpop.f32.mrb[0].mxu0
      %v2234 = vpop.f32.mrb[0].mxu0
      %v2235 = vadd.f32 %v2074, %v2234
      %v2236 = vpop.f32.mrb[0].mxu0
      %2237 = vmatprep.mubr.bf16.mxu0 0
      %2238 = vmatmul.mubr.bf16.gmra.mrb[0].mxu0 %v1742
      %v2239 = vpop.f32.mrb[0].mxu0
      %v2240 = vadd.f32 %v2079, %v2239
      %v2241 = vpop.f32.mrb[0].mxu0
      %v2242 = vpop.f32.mrb[0].mxu0
      %v2243 = vadd.f32 %v2082, %v2242
      %v2244 = vpop.f32.mrb[0].mxu0
      %2245 = vmatprep.mubr.bf16.mxu0 0
      %2246 = vmatmul.mubr.bf16.gmra.mrb[0].mxu0 %v1745
      %v2247 = vpop.f32.mrb[0].mxu0
      %v2248 = vadd.f32 %v2087, %v2247
      %v2249 = vpop.f32.mrb[0].mxu0
      %v2250 = vpop.f32.mrb[0].mxu0
      %v2251 = vadd.f32 %v2090, %v2250
      %v2252 = vpop.f32.mrb[0].mxu0
      %2253 = vmatprep.mubr.bf16.mxu0 0
      %2254 = vmatmul.mubr.bf16.gmra.mrb[0].mxu0 %v1748
      %v2255 = vpop.f32.mrb[0].mxu0
      %v2256 = vadd.f32 %v2095, %v2255
      %v2257 = vpop.f32.mrb[0].mxu0
      %v2258 = vpop.f32.mrb[0].mxu0
      %v2259 = vadd.f32 %v2098, %v2258
      %v2260 = vpop.f32.mrb[0].mxu0
      %2261 = vmatprep.mubr.bf16.mxu0 0
      %2262 = vmatmul.mubr.bf16.gmra.mrb[0].mxu0 %v1751
      %v2263 = vpop.f32.mrb[0].mxu0
      %v2264 = vadd.f32 %v2103, %v2263
      %v2265 = vpop.f32.mrb[0].mxu0
      %v2266 = vpop.f32.mrb[0].mxu0
      %v2267 = vadd.f32 %v2106, %v2266
      %v2268 = vpop.f32.mrb[0].mxu0
      %2269 = vmatprep.mubr.bf16.mxu0 0
      %2270 = vmatmul.mubr.bf16.gmra.mrb[0].mxu0 %v1754
      %v2271 = vpop.f32.mrb[0].mxu0
      %v2272 = vadd.f32 %v2111, %v2271
      %v2273 = vpop.f32.mrb[0].mxu0
      %v2274 = vpop.f32.mrb[0].mxu0
      %v2275 = vadd.f32 %v2114, %v2274
      %v2276 = vpop.f32.mrb[0].mxu0
      %2277 = vmatprep.mubr.bf16.mxu0 0
      %2278 = vmatmul.mubr.bf16.gmra.mrb[0].mxu0 %v1757
      %v2279 = vpop.f32.mrb[0].mxu0
      %v2280 = vadd.f32 %v2119, %v2279
      %v2281 = vpop.f32.mrb[0].mxu0
      %v2282 = vpop.f32.mrb[0].mxu0
      %v2283 = vadd.f32 %v2122, %v2282
      %v2284 = vpop.f32.mrb[0].mxu0
      %2285 = vmatprep.mubr.bf16.mxu0 0
      %2286 = vmatmul.mubr.bf16.gmra.mrb[0].mxu0 %v1760
      %v2287 = vpop.f32.mrb[0].mxu0
      %v2288 = vadd.f32 %v2127, %v2287
      %v2289 = vpop.f32.mrb[0].mxu0
      %v2290 = vpop.f32.mrb[0].mxu0
      %v2291 = vadd.f32 %v2130, %v2290
      %v2292 = vpop.f32.mrb[0].mxu0
      %2293 = vdwg.mxu0
      %v2294 = vadd.f32 %v1580, %v2168
      %v2295 = vadd.f32 %v1583, %v2171
      %v2296 = vadd.f32 %v1588, %v2176
      %v2297 = vadd.f32 %v1591, %v2179
      %v2298 = vadd.f32 %v1596, %v2184
      %v2299 = vadd.f32 %v1599, %v2187
      %v2300 = vadd.f32 %v1604, %v2192
      %v2301 = vadd.f32 %v1607, %v2195
      %v2302 = vadd.f32 %v1612, %v2200
      %v2303 = vadd.f32 %v1615, %v2203
      %v2304 = vadd.f32 %v1620, %v2208
      %v2305 = vadd.f32 %v1623, %v2211
      %v2306 = vadd.f32 %v1628, %v2216
      %v2307 = vadd.f32 %v1631, %v2219
      %v2308 = vadd.f32 %v1636, %v2224
      %v2309 = vadd.f32 %v1639, %v2227
      %v2310 = vadd.f32 %v1644, %v2232
      %v2311 = vadd.f32 %v1647, %v2235
      %v2312 = vadd.f32 %v1652, %v2240
      %v2313 = vadd.f32 %v1655, %v2243
      %v2314 = vadd.f32 %v1660, %v2248
      %v2315 = vadd.f32 %v1663, %v2251
      %v2316 = vadd.f32 %v1668, %v2256
      %v2317 = vadd.f32 %v1671, %v2259
      %v2318 = vadd.f32 %v1676, %v2264
      %v2319 = vadd.f32 %v1679, %v2267
      %v2320 = vadd.f32 %v1684, %v2272
      %v2321 = vadd.f32 %v1687, %v2275
      %v2322 = vadd.f32 %v1692, %v2280
      %v2323 = vadd.f32 %v1695, %v2283
      %v2324 = vadd.f32 %v1700, %v2288
      %v2325 = vadd.f32 %v1703, %v2291
      %v2326 = vld [vmem:[%s2] sm:$0x1]
      %v2328 = vlaneseq
      %v2329 = vshrl.u32 %v2328, 7
      %v2330 = vsub.s32 0, %v2329
      %v2331 = vrot.slane %v2326, %v2330
      %v2333 = vadd.f32 %v2294, %v2331
      %v2334 = vadd.f32 %v2295, %v2331
      %v2335 = vadd.f32 %v2296, %v2331
      %v2336 = vadd.f32 %v2297, %v2331
      %v2337 = vadd.f32 %v2298, %v2331
      %v2338 = vadd.f32 %v2299, %v2331
      %v2339 = vadd.f32 %v2300, %v2331
      %v2340 = vadd.f32 %v2301, %v2331
      %v2341 = vadd.f32 %v2302, %v2331
      %v2342 = vadd.f32 %v2303, %v2331
      %v2343 = vadd.f32 %v2304, %v2331
      %v2344 = vadd.f32 %v2305, %v2331
      %v2345 = vadd.f32 %v2306, %v2331
      %v2346 = vadd.f32 %v2307, %v2331
      %v2347 = vadd.f32 %v2308, %v2331
      %v2348 = vadd.f32 %v2309, %v2331
      %v2349 = vadd.f32 %v2310, %v2331
      %v2350 = vadd.f32 %v2311, %v2331
      %v2351 = vadd.f32 %v2312, %v2331
      %v2352 = vadd.f32 %v2313, %v2331
      %v2353 = vadd.f32 %v2314, %v2331
      %v2354 = vadd.f32 %v2315, %v2331
      %v2355 = vadd.f32 %v2316, %v2331
      %v2356 = vadd.f32 %v2317, %v2331
      %v2357 = vadd.f32 %v2318, %v2331
      %v2358 = vadd.f32 %v2319, %v2331
      %v2359 = vadd.f32 %v2320, %v2331
      %v2360 = vadd.f32 %v2321, %v2331
      %v2361 = vadd.f32 %v2322, %v2331
      %v2362 = vadd.f32 %v2323, %v2331
      %v2363 = vadd.f32 %v2324, %v2331
      %v2364 = vadd.f32 %v2325, %v2331
      %v2365 = vmax.f32 %v2333, 0.0
      %v2366 = vmax.f32 %v2334, 0.0
      %v2367 = vmax.f32 %v2335, 0.0
      %v2368 = vmax.f32 %v2336, 0.0
      %v2369 = vmax.f32 %v2337, 0.0
      %v2370 = vmax.f32 %v2338, 0.0
      %v2371 = vmax.f32 %v2339, 0.0
      %v2372 = vmax.f32 %v2340, 0.0
      %v2373 = vmax.f32 %v2341, 0.0
      %v2374 = vmax.f32 %v2342, 0.0
      %v2375 = vmax.f32 %v2343, 0.0
      %v2376 = vmax.f32 %v2344, 0.0
      %v2377 = vmax.f32 %v2345, 0.0
      %v2378 = vmax.f32 %v2346, 0.0
      %v2379 = vmax.f32 %v2347, 0.0
      %v2380 = vmax.f32 %v2348, 0.0
      %v2381 = vmax.f32 %v2349, 0.0
      %v2382 = vmax.f32 %v2350, 0.0
      %v2383 = vmax.f32 %v2351, 0.0
      %v2384 = vmax.f32 %v2352, 0.0
      %v2385 = vmax.f32 %v2353, 0.0
      %v2386 = vmax.f32 %v2354, 0.0
      %v2387 = vmax.f32 %v2355, 0.0
      %v2388 = vmax.f32 %v2356, 0.0
      %v2389 = vmax.f32 %v2357, 0.0
      %v2390 = vmax.f32 %v2358, 0.0
      %v2391 = vmax.f32 %v2359, 0.0
      %v2392 = vmax.f32 %v2360, 0.0
      %v2393 = vmax.f32 %v2361, 0.0
      %v2394 = vmax.f32 %v2362, 0.0
      %v2395 = vmax.f32 %v2363, 0.0
      %v2396 = vmax.f32 %v2364, 0.0
      %2397 = vst [vmem:[#allocation2] sm:$0xf] 0
      %2398 = vst [vmem:[#allocation2 + $0x4] sm:$0xf] 0
      %2399 = vst [vmem:[#allocation2 + $0x8] sm:$0x1] 0
      %s2400 = scalar_lea.vmem [#allocation2], 204
      %2401 = vst [vmem:[%s2400] sm:$0xf] 0
      %2402 = vst [vmem:[%s2400 + $0x4] sm:$0xf] 0
      %2403 = vst [vmem:[%s2400 + $0x8] sm:$0x1] 0
      %v2404 = vpack.c.bf16 %v2366, %v2365
      %v2405 = vpack.c.bf16 %v2368, %v2367
      %v2406 = vpack.c.bf16 %v2370, %v2369
      %v2407 = vpack.c.bf16 %v2372, %v2371
      %v2408 = vpack.c.bf16 %v2374, %v2373
      %v2409 = vpack.c.bf16 %v2376, %v2375
      %v2410 = vpack.c.bf16 %v2378, %v2377
      %v2411 = vpack.c.bf16 %v2380, %v2379
      %v2412 = vpack.c.bf16 %v2382, %v2381
      %v2413 = vpack.c.bf16 %v2384, %v2383
      %v2414 = vpack.c.bf16 %v2386, %v2385
      %v2415 = vpack.c.bf16 %v2388, %v2387
      %v2416 = vpack.c.bf16 %v2390, %v2389
      %v2417 = vpack.c.bf16 %v2392, %v2391
      %v2418 = vpack.c.bf16 %v2394, %v2393
      %v2419 = vpack.c.bf16 %v2396, %v2395
      %v2421 = vshrl.u32 %v2404, 16
      %v2423 = vrot.slane %v2421, 7
      %v2424 = vshll.u32 %v2404, 16
      %v2426 = vor.u32 %v2423, %v2424
      %v2428 = vshrl.u32 %v2405, 16
      %v2430 = vrot.slane %v2428, 7
      %v2431 = vshll.u32 %v2405, 16
      %v2433 = vor.u32 %v2430, %v2431
      %v2435 = vshrl.u32 %v2406, 16
      %v2437 = vrot.slane %v2435, 7
      %v2438 = vshll.u32 %v2406, 16
      %v2440 = vor.u32 %v2437, %v2438
      %v2442 = vshrl.u32 %v2407, 16
      %v2444 = vrot.slane %v2442, 7
      %v2445 = vshll.u32 %v2407, 16
      %v2447 = vor.u32 %v2444, %v2445
      %v2449 = vshrl.u32 %v2408, 16
      %v2451 = vrot.slane %v2449, 7
      %v2452 = vshll.u32 %v2408, 16
      %v2454 = vor.u32 %v2451, %v2452
      %v2456 = vshrl.u32 %v2409, 16
      %v2458 = vrot.slane %v2456, 7
      %v2459 = vshll.u32 %v2409, 16
      %v2461 = vor.u32 %v2458, %v2459
      %v2463 = vshrl.u32 %v2410, 16
      %v2465 = vrot.slane %v2463, 7
      %v2466 = vshll.u32 %v2410, 16
      %v2468 = vor.u32 %v2465, %v2466
      %v2470 = vshrl.u32 %v2411, 16
      %v2472 = vrot.slane %v2470, 7
      %v2473 = vshll.u32 %v2411, 16
      %v2475 = vor.u32 %v2472, %v2473
      %v2477 = vshrl.u32 %v2412, 16
      %v2479 = vrot.slane %v2477, 7
      %v2480 = vshll.u32 %v2412, 16
      %v2482 = vor.u32 %v2479, %v2480
      %v2484 = vshrl.u32 %v2413, 16
      %v2486 = vrot.slane %v2484, 7
      %v2487 = vshll.u32 %v2413, 16
      %v2489 = vor.u32 %v2486, %v2487
      %v2491 = vshrl.u32 %v2414, 16
      %v2493 = vrot.slane %v2491, 7
      %v2494 = vshll.u32 %v2414, 16
      %v2496 = vor.u32 %v2493, %v2494
      %v2498 = vshrl.u32 %v2415, 16
      %v2500 = vrot.slane %v2498, 7
      %v2501 = vshll.u32 %v2415, 16
      %v2503 = vor.u32 %v2500, %v2501
      %v2505 = vshrl.u32 %v2416, 16
      %v2507 = vrot.slane %v2505, 7
      %v2508 = vshll.u32 %v2416, 16
      %v2510 = vor.u32 %v2507, %v2508
      %v2512 = vshrl.u32 %v2417, 16
      %v2514 = vrot.slane %v2512, 7
      %v2515 = vshll.u32 %v2417, 16
      %v2517 = vor.u32 %v2514, %v2515
      %v2519 = vshrl.u32 %v2418, 16
      %v2521 = vrot.slane %v2519, 7
      %v2522 = vshll.u32 %v2418, 16
      %v2524 = vor.u32 %v2521, %v2522
      %v2526 = vshrl.u32 %v2419, 16
      %v2528 = vrot.slane %v2526, 7
      %v2529 = vshll.u32 %v2419, 16
      %v2531 = vor.u32 %v2528, %v2529
      %vm2564 = vcmask 1040384
      %vm2565 = vsmask.f32 256
      %vm2566 = vmand %vm2564, %vm2565
      %v2567 = vsel %vm2566, 0, %v2426
      %v2568 = vsel %vm2566, 0, %v2433
      %v2569 = vsel %vm2566, 0, %v2440
      %v2570 = vsel %vm2566, 0, %v2447
      %v2571 = vsel %vm2566, 0, %v2454
      %v2572 = vsel %vm2566, 0, %v2461
      %v2573 = vsel %vm2566, 0, %v2468
      %v2574 = vsel %vm2566, 0, %v2475
      %v2575 = vsel %vm2566, 0, %v2482
      %v2576 = vsel %vm2566, 0, %v2489
      %v2577 = vsel %vm2566, 0, %v2496
      %v2578 = vsel %vm2566, 0, %v2503
      %v2579 = vsel %vm2566, 0, %v2510
      %v2580 = vsel %vm2566, 0, %v2517
      %v2581 = vsel %vm2566, 0, %v2524
      %v2582 = vsel %vm2566, 0, %v2531
      %v2583 = vsel %vm2566, %v2423, 0
      %v2584 = vsel %vm2566, %v2430, 0
      %v2585 = vsel %vm2566, %v2437, 0
      %v2586 = vsel %vm2566, %v2444, 0
      %v2587 = vsel %vm2566, %v2451, 0
      %v2588 = vsel %vm2566, %v2458, 0
      %v2589 = vsel %vm2566, %v2465, 0
      %v2590 = vsel %vm2566, %v2472, 0
      %v2591 = vsel %vm2566, %v2479, 0
      %v2592 = vsel %vm2566, %v2486, 0
      %v2593 = vsel %vm2566, %v2493, 0
      %v2594 = vsel %vm2566, %v2500, 0
      %v2595 = vsel %vm2566, %v2507, 0
      %v2596 = vsel %vm2566, %v2514, 0
      %v2597 = vsel %vm2566, %v2521, 0
      %v2598 = vsel %vm2566, %v2528, 0
      %v2631 = vunpack.c.l.b16 %v2567
      %v2632 = vunpack.c.h.b16 %v2567
      %v2633 = vunpack.c.l.b16 %v2583
      %v2634 = vunpack.c.l.b16 %v2568
      %v2635 = vunpack.c.h.b16 %v2568
      %v2636 = vunpack.c.l.b16 %v2584
      %v2637 = vunpack.c.l.b16 %v2569
      %v2638 = vunpack.c.h.b16 %v2569
      %v2639 = vunpack.c.l.b16 %v2585
      %v2640 = vunpack.c.l.b16 %v2570
      %v2641 = vunpack.c.h.b16 %v2570
      %v2642 = vunpack.c.l.b16 %v2586
      %v2643 = vunpack.c.l.b16 %v2571
      %v2644 = vunpack.c.h.b16 %v2571
      %v2645 = vunpack.c.l.b16 %v2587
      %v2646 = vunpack.c.l.b16 %v2572
      %v2647 = vunpack.c.h.b16 %v2572
      %v2648 = vunpack.c.l.b16 %v2588
      %v2649 = vunpack.c.l.b16 %v2573
      %v2650 = vunpack.c.h.b16 %v2573
      %v2651 = vunpack.c.l.b16 %v2589
      %v2652 = vunpack.c.l.b16 %v2574
      %v2653 = vunpack.c.h.b16 %v2574
      %v2654 = vunpack.c.l.b16 %v2590
      %v2655 = vunpack.c.l.b16 %v2575
      %v2656 = vunpack.c.h.b16 %v2575
      %v2657 = vunpack.c.l.b16 %v2591
      %v2658 = vunpack.c.l.b16 %v2576
      %v2659 = vunpack.c.h.b16 %v2576
      %v2660 = vunpack.c.l.b16 %v2592
      %v2661 = vunpack.c.l.b16 %v2577
      %v2662 = vunpack.c.h.b16 %v2577
      %v2663 = vunpack.c.l.b16 %v2593
      %v2664 = vunpack.c.l.b16 %v2578
      %v2665 = vunpack.c.h.b16 %v2578
      %v2666 = vunpack.c.l.b16 %v2594
      %v2667 = vunpack.c.l.b16 %v2579
      %v2668 = vunpack.c.h.b16 %v2579
      %v2669 = vunpack.c.l.b16 %v2595
      %v2670 = vunpack.c.l.b16 %v2580
      %v2671 = vunpack.c.h.b16 %v2580
      %v2672 = vunpack.c.l.b16 %v2596
      %v2673 = vunpack.c.l.b16 %v2581
      %v2674 = vunpack.c.h.b16 %v2581
      %v2675 = vunpack.c.l.b16 %v2597
      %v2676 = vunpack.c.l.b16 %v2582
      %v2677 = vunpack.c.h.b16 %v2582
      %v2678 = vunpack.c.l.b16 %v2598
      %v2679 = vpack.c.b16 %v2631, %v2631
      %v2680 = vpack.c.b16 %v2632, %v2632
      %v2681 = vpack.c.b16 %v2633, %v2633
      %v2682 = vpack.c.b16 %v2634, %v2634
      %v2683 = vpack.c.b16 %v2635, %v2635
      %v2684 = vpack.c.b16 %v2636, %v2636
      %v2685 = vpack.c.b16 %v2637, %v2637
      %v2686 = vpack.c.b16 %v2638, %v2638
      %v2687 = vpack.c.b16 %v2639, %v2639
      %v2688 = vpack.c.b16 %v2640, %v2640
      %v2689 = vpack.c.b16 %v2641, %v2641
      %v2690 = vpack.c.b16 %v2642, %v2642
      %v2691 = vpack.c.b16 %v2643, %v2643
      %v2692 = vpack.c.b16 %v2644, %v2644
      %v2693 = vpack.c.b16 %v2645, %v2645
      %v2694 = vpack.c.b16 %v2646, %v2646
      %v2695 = vpack.c.b16 %v2647, %v2647
      %v2696 = vpack.c.b16 %v2648, %v2648
      %v2697 = vpack.c.b16 %v2649, %v2649
      %v2698 = vpack.c.b16 %v2650, %v2650
      %v2699 = vpack.c.b16 %v2651, %v2651
      %v2700 = vpack.c.b16 %v2652, %v2652
      %v2701 = vpack.c.b16 %v2653, %v2653
      %v2702 = vpack.c.b16 %v2654, %v2654
      %v2703 = vpack.c.b16 %v2655, %v2655
      %v2704 = vpack.c.b16 %v2656, %v2656
      %v2705 = vpack.c.b16 %v2657, %v2657
      %v2706 = vpack.c.b16 %v2658, %v2658
      %v2707 = vpack.c.b16 %v2659, %v2659
      %v2708 = vpack.c.b16 %v2660, %v2660
      %v2709 = vpack.c.b16 %v2661, %v2661
      %v2710 = vpack.c.b16 %v2662, %v2662
      %v2711 = vpack.c.b16 %v2663, %v2663
      %v2712 = vpack.c.b16 %v2664, %v2664
      %v2713 = vpack.c.b16 %v2665, %v2665
      %v2714 = vpack.c.b16 %v2666, %v2666
      %v2715 = vpack.c.b16 %v2667, %v2667
      %v2716 = vpack.c.b16 %v2668, %v2668
      %v2717 = vpack.c.b16 %v2669, %v2669
      %v2718 = vpack.c.b16 %v2670, %v2670
      %v2719 = vpack.c.b16 %v2671, %v2671
      %v2720 = vpack.c.b16 %v2672, %v2672
      %v2721 = vpack.c.b16 %v2673, %v2673
      %v2722 = vpack.c.b16 %v2674, %v2674
      %v2723 = vpack.c.b16 %v2675, %v2675
      %v2724 = vpack.c.b16 %v2676, %v2676
      %v2725 = vpack.c.b16 %v2677, %v2677
      %v2726 = vpack.c.b16 %v2678, %v2678
      %s2775 = scalar_lea.vmem [#allocation2], 12
      %2776 = vst [vmem:[%s2775] sm:$0xf] %v2679
      %2777 = vst [vmem:[%s2775 + $0x4] sm:$0xf] %v2680
      %2778 = vst [vmem:[%s2775 + $0x8] sm:$0x1] %v2681
      %2779 = vst [vmem:[%s2775 + $0xc] sm:$0xf] %v2682
      %2780 = vst [vmem:[%s2775 + $0x10] sm:$0xf] %v2683
      %2781 = vst [vmem:[%s2775 + $0x14] sm:$0x1] %v2684
      %2782 = vst [vmem:[%s2775 + $0x18] sm:$0xf] %v2685
      %2783 = vst [vmem:[%s2775 + $0x1c] sm:$0xf] %v2686
      %2784 = vst [vmem:[%s2775 + $0x20] sm:$0x1] %v2687
      %2785 = vst [vmem:[%s2775 + $0x24] sm:$0xf] %v2688
      %2786 = vst [vmem:[%s2775 + $0x28] sm:$0xf] %v2689
      %2787 = vst [vmem:[%s2775 + $0x2c] sm:$0x1] %v2690
      %2788 = vst [vmem:[%s2775 + $0x30] sm:$0xf] %v2691
      %2789 = vst [vmem:[%s2775 + $0x34] sm:$0xf] %v2692
      %2790 = vst [vmem:[%s2775 + $0x38] sm:$0x1] %v2693
      %2791 = vst [vmem:[%s2775 + $0x3c] sm:$0xf] %v2694
      %2792 = vst [vmem:[%s2775 + $0x40] sm:$0xf] %v2695
      %2793 = vst [vmem:[%s2775 + $0x44] sm:$0x1] %v2696
      %2794 = vst [vmem:[%s2775 + $0x48] sm:$0xf] %v2697
      %2795 = vst [vmem:[%s2775 + $0x4c] sm:$0xf] %v2698
      %2796 = vst [vmem:[%s2775 + $0x50] sm:$0x1] %v2699
      %2797 = vst [vmem:[%s2775 + $0x54] sm:$0xf] %v2700
      %2798 = vst [vmem:[%s2775 + $0x58] sm:$0xf] %v2701
      %2799 = vst [vmem:[%s2775 + $0x5c] sm:$0x1] %v2702
      %2800 = vst [vmem:[%s2775 + $0x60] sm:$0xf] %v2703
      %2801 = vst [vmem:[%s2775 + $0x64] sm:$0xf] %v2704
      %2802 = vst [vmem:[%s2775 + $0x68] sm:$0x1] %v2705
      %2803 = vst [vmem:[%s2775 + $0x6c] sm:$0xf] %v2706
      %2804 = vst [vmem:[%s2775 + $0x70] sm:$0xf] %v2707
      %2805 = vst [vmem:[%s2775 + $0x74] sm:$0x1] %v2708
      %2806 = vst [vmem:[%s2775 + $0x78] sm:$0xf] %v2709
      %2807 = vst [vmem:[%s2775 + $0x7c] sm:$0xf] %v2710
      %2808 = vst [vmem:[%s2775 + $0x80] sm:$0x1] %v2711
      %2809 = vst [vmem:[%s2775 + $0x84] sm:$0xf] %v2712
      %2810 = vst [vmem:[%s2775 + $0x88] sm:$0xf] %v2713
      %2811 = vst [vmem:[%s2775 + $0x8c] sm:$0x1] %v2714
      %2812 = vst [vmem:[%s2775 + $0x90] sm:$0xf] %v2715
      %2813 = vst [vmem:[%s2775 + $0x94] sm:$0xf] %v2716
      %2814 = vst [vmem:[%s2775 + $0x98] sm:$0x1] %v2717
      %2815 = vst [vmem:[%s2775 + $0x9c] sm:$0xf] %v2718
      %2816 = vst [vmem:[%s2775 + $0xa0] sm:$0xf] %v2719
      %2817 = vst [vmem:[%s2775 + $0xa4] sm:$0x1] %v2720
      %2818 = vst [vmem:[%s2775 + $0xa8] sm:$0xf] %v2721
      %2819 = vst [vmem:[%s2775 + $0xac] sm:$0xf] %v2722
      %2820 = vst [vmem:[%s2775 + $0xb0] sm:$0x1] %v2723
      %2821 = vst [vmem:[%s2775 + $0xb4] sm:$0xf] %v2724
      %2822 = vst [vmem:[%s2775 + $0xb8] sm:$0xf] %v2725
      %2823 = vst [vmem:[%s2775 + $0xbc] sm:$0x1] %v2726
      %v2824 = vld [vmem:[#allocation2] sm:$0xf]
      %v2825 = vld [vmem:[#allocation2 + $0x4] sm:$0xf]
      %v2826 = vld [vmem:[#allocation2 + $0x8] sm:$0x1]
      %v2827 = vld [vmem:[#allocation2 + $0xc] sm:$0xf]
      %v2828 = vld [vmem:[#allocation2 + $0x10] sm:$0xf]
      %v2829 = vld [vmem:[#allocation2 + $0x14] sm:$0x1]
      %v2830 = vld [vmem:[#allocation2 + $0x18] sm:$0xf]
      %v2831 = vld [vmem:[#allocation2 + $0x1c] sm:$0xf]
      %v2832 = vld [vmem:[#allocation2 + $0x20] sm:$0x1]
      %v2833 = vld [vmem:[#allocation2 + $0x24] sm:$0xf]
      %v2834 = vld [vmem:[#allocation2 + $0x28] sm:$0xf]
      %v2835 = vld [vmem:[#allocation2 + $0x2c] sm:$0x1]
      %v2836 = vld [vmem:[#allocation2 + $0x30] sm:$0xf]
      %v2837 = vld [vmem:[#allocation2 + $0x34] sm:$0xf]
      %v2838 = vld [vmem:[#allocation2 + $0x38] sm:$0x1]
      %v2839 = vld [vmem:[#allocation2 + $0x3c] sm:$0xf]
      %v2840 = vld [vmem:[#allocation2 + $0x40] sm:$0xf]
      %v2841 = vld [vmem:[#allocation2 + $0x44] sm:$0x1]
      %v2842 = vld [vmem:[#allocation2 + $0x48] sm:$0xf]
      %v2843 = vld [vmem:[#allocation2 + $0x4c] sm:$0xf]
      %v2844 = vld [vmem:[#allocation2 + $0x50] sm:$0x1]
      %v2845 = vld [vmem:[#allocation2 + $0x54] sm:$0xf]
      %v2846 = vld [vmem:[#allocation2 + $0x58] sm:$0xf]
      %v2847 = vld [vmem:[#allocation2 + $0x5c] sm:$0x1]
      %v2848 = vld [vmem:[#allocation2 + $0x60] sm:$0xf]
      %v2849 = vld [vmem:[#allocation2 + $0x64] sm:$0xf]
      %v2850 = vld [vmem:[#allocation2 + $0x68] sm:$0x1]
      %v2851 = vld [vmem:[#allocation2 + $0x6c] sm:$0xf]
      %v2852 = vld [vmem:[#allocation2 + $0x70] sm:$0xf]
      %v2853 = vld [vmem:[#allocation2 + $0x74] sm:$0x1]
      %v2854 = vld [vmem:[#allocation2 + $0x78] sm:$0xf]
      %v2855 = vld [vmem:[#allocation2 + $0x7c] sm:$0xf]
      %v2856 = vld [vmem:[#allocation2 + $0x80] sm:$0x1]
      %v2857 = vld [vmem:[#allocation2 + $0x84] sm:$0xf]
      %v2858 = vld [vmem:[#allocation2 + $0x88] sm:$0xf]
      %v2859 = vld [vmem:[#allocation2 + $0x8c] sm:$0x1]
      %v2860 = vld [vmem:[#allocation2 + $0x90] sm:$0xf]
      %v2861 = vld [vmem:[#allocation2 + $0x94] sm:$0xf]
      %v2862 = vld [vmem:[#allocation2 + $0x98] sm:$0x1]
      %v2863 = vld [vmem:[#allocation2 + $0x9c] sm:$0xf]
      %v2864 = vld [vmem:[#allocation2 + $0xa0] sm:$0xf]
      %v2865 = vld [vmem:[#allocation2 + $0xa4] sm:$0x1]
      %v2866 = vld [vmem:[#allocation2 + $0xa8] sm:$0xf]
      %v2867 = vld [vmem:[#allocation2 + $0xac] sm:$0xf]
      %v2868 = vld [vmem:[#allocation2 + $0xb0] sm:$0x1]
      %v2869 = vld [vmem:[#allocation2 + $0xb4] sm:$0xf]
      %v2870 = vld [vmem:[#allocation2 + $0xb8] sm:$0xf]
      %v2871 = vld [vmem:[#allocation2 + $0xbc] sm:$0x1]
      %v2872 = vld [vmem:[#allocation2 + $0xc0] sm:$0xf]
      %v2873 = vld [vmem:[#allocation2 + $0xc4] sm:$0xf]
      %v2874 = vld [vmem:[#allocation2 + $0xc8] sm:$0x1]
      %v2875 = vld [vmem:[#allocation2 + $0xcc] sm:$0xf]
      %v2876 = vld [vmem:[#allocation2 + $0xd0] sm:$0xf]
      %v2877 = vld [vmem:[#allocation2 + $0xd4] sm:$0x1]
      %v2926 = vunpack.c.l.b16 %v2824
      %v2927 = vunpack.c.l.b16 %v2825
      %v2928 = vunpack.c.l.b16 %v2826
      %v2929 = vunpack.c.l.b16 %v2827
      %v2930 = vunpack.c.l.b16 %v2828
      %v2931 = vunpack.c.l.b16 %v2829
      %v2932 = vunpack.c.l.b16 %v2830
      %v2933 = vunpack.c.l.b16 %v2831
      %v2934 = vunpack.c.l.b16 %v2832
      %v2935 = vunpack.c.l.b16 %v2833
      %v2936 = vunpack.c.l.b16 %v2834
      %v2937 = vunpack.c.l.b16 %v2835
      %v2938 = vunpack.c.l.b16 %v2836
      %v2939 = vunpack.c.l.b16 %v2837
      %v2940 = vunpack.c.l.b16 %v2838
      %v2941 = vunpack.c.l.b16 %v2839
      %v2942 = vunpack.c.l.b16 %v2840
      %v2943 = vunpack.c.l.b16 %v2841
      %v2944 = vunpack.c.l.b16 %v2842
      %v2945 = vunpack.c.l.b16 %v2843
      %v2946 = vunpack.c.l.b16 %v2844
      %v2947 = vunpack.c.l.b16 %v2845
      %v2948 = vunpack.c.l.b16 %v2846
      %v2949 = vunpack.c.l.b16 %v2847
      %v2950 = vunpack.c.l.b16 %v2848
      %v2951 = vunpack.c.l.b16 %v2849
      %v2952 = vunpack.c.l.b16 %v2850
      %v2953 = vunpack.c.l.b16 %v2851
      %v2954 = vunpack.c.l.b16 %v2852
      %v2955 = vunpack.c.l.b16 %v2853
      %v2956 = vunpack.c.l.b16 %v2854
      %v2957 = vunpack.c.l.b16 %v2855
      %v2958 = vunpack.c.l.b16 %v2856
      %v2959 = vunpack.c.l.b16 %v2857
      %v2960 = vunpack.c.l.b16 %v2858
      %v2961 = vunpack.c.l.b16 %v2859
      %v2962 = vunpack.c.l.b16 %v2860
      %v2963 = vunpack.c.l.b16 %v2861
      %v2964 = vunpack.c.l.b16 %v2862
      %v2965 = vunpack.c.l.b16 %v2863
      %v2966 = vunpack.c.l.b16 %v2864
      %v2967 = vunpack.c.l.b16 %v2865
      %v2968 = vunpack.c.l.b16 %v2866
      %v2969 = vunpack.c.l.b16 %v2867
      %v2970 = vunpack.c.l.b16 %v2868
      %v2971 = vunpack.c.l.b16 %v2869
      %v2972 = vunpack.c.l.b16 %v2870
      %v2973 = vunpack.c.l.b16 %v2871
      %v2974 = vpack.c.b16 %v2927, %v2926
      %v2975 = vpack.c.b16 %v2928, %v2928
      %v2976 = vpack.c.b16 %v2930, %v2929
      %v2977 = vpack.c.b16 %v2931, %v2931
      %v2978 = vpack.c.b16 %v2933, %v2932
      %v2979 = vpack.c.b16 %v2934, %v2934
      %v2980 = vpack.c.b16 %v2936, %v2935
      %v2981 = vpack.c.b16 %v2937, %v2937
      %v2982 = vpack.c.b16 %v2939, %v2938
      %v2983 = vpack.c.b16 %v2940, %v2940
      %v2984 = vpack.c.b16 %v2942, %v2941
      %v2985 = vpack.c.b16 %v2943, %v2943
      %v2986 = vpack.c.b16 %v2945, %v2944
      %v2987 = vpack.c.b16 %v2946, %v2946
      %v2988 = vpack.c.b16 %v2948, %v2947
      %v2989 = vpack.c.b16 %v2949, %v2949
      %v2990 = vpack.c.b16 %v2951, %v2950
      %v2991 = vpack.c.b16 %v2952, %v2952
      %v2992 = vpack.c.b16 %v2954, %v2953
      %v2993 = vpack.c.b16 %v2955, %v2955
      %v2994 = vpack.c.b16 %v2957, %v2956
      %v2995 = vpack.c.b16 %v2958, %v2958
      %v2996 = vpack.c.b16 %v2960, %v2959
      %v2997 = vpack.c.b16 %v2961, %v2961
      %v2998 = vpack.c.b16 %v2963, %v2962
      %v2999 = vpack.c.b16 %v2964, %v2964
      %v3000 = vpack.c.b16 %v2966, %v2965
      %v3001 = vpack.c.b16 %v2967, %v2967
      %v3002 = vpack.c.b16 %v2969, %v2968
      %v3003 = vpack.c.b16 %v2970, %v2970
      %v3004 = vpack.c.b16 %v2972, %v2971
      %v3005 = vpack.c.b16 %v2973, %v2973
      %v3025 = vunpack.c.l.b16 %v2872
      %v3026 = vunpack.c.l.b16 %v2873
      %v3027 = vunpack.c.l.b16 %v2874
      %v3028 = vpack.c.b16 %v3026, %v3025
      %v3029 = vpack.c.b16 %v3027, %v3027
      %v3034 = vunpack.c.l.b16 %v2875
      %v3035 = vunpack.c.l.b16 %v2876
      %v3036 = vunpack.c.l.b16 %v2877
      %v3037 = vpack.c.b16 %v3035, %v3034
      %v3038 = vpack.c.b16 %v3036, %v3036
      %v3040 = vld [vmem:[%s3] sm:$0xf]
      %v3041 = vld [vmem:[%s3 + $0x4] sm:$0xf]
      %v3042 = vld [vmem:[%s3 + $0x8] sm:$0xf]
      %v3043 = vld [vmem:[%s3 + $0xc] sm:$0xf]
      %v3044 = vld [vmem:[%s3 + $0x10] sm:$0xf]
      %v3045 = vld [vmem:[%s3 + $0x14] sm:$0xf]
      %v3046 = vld [vmem:[%s3 + $0x18] sm:$0xf]
      %v3047 = vld [vmem:[%s3 + $0x1c] sm:$0xf]
      %v3048 = vld [vmem:[%s3 + $0x20] sm:$0xf]
      %v3049 = vld [vmem:[%s3 + $0x24] sm:$0xf]
      %v3050 = vld [vmem:[%s3 + $0x28] sm:$0xf]
      %v3051 = vld [vmem:[%s3 + $0x2c] sm:$0xf]
      %v3052 = vld [vmem:[%s3 + $0x30] sm:$0xf]
      %v3053 = vld [vmem:[%s3 + $0x34] sm:$0xf]
      %v3054 = vld [vmem:[%s3 + $0x38] sm:$0xf]
      %v3055 = vld [vmem:[%s3 + $0x3c] sm:$0xf]
      %v3056 = vld [vmem:[%s3 + $0x40] sm:$0xf]
      %v3057 = vld [vmem:[%s3 + $0x44] sm:$0xf]
      %v3058 = vld [vmem:[%s3 + $0x48] sm:$0xf]
      %v3059 = vld [vmem:[%s3 + $0x4c] sm:$0xf]
      %v3060 = vld [vmem:[%s3 + $0x50] sm:$0xf]
      %v3061 = vld [vmem:[%s3 + $0x54] sm:$0xf]
      %v3062 = vld [vmem:[%s3 + $0x58] sm:$0xf]
      %v3063 = vld [vmem:[%s3 + $0x5c] sm:$0xf]
      %v3064 = vld [vmem:[%s3 + $0x60] sm:$0xf]
      %v3065 = vld [vmem:[%s3 + $0x64] sm:$0xf]
      %v3066 = vld [vmem:[%s3 + $0x68] sm:$0xf]
      %v3067 = vld [vmem:[%s3 + $0x6c] sm:$0xf]
      %v3068 = vld [vmem:[%s3 + $0x70] sm:$0xf]
      %v3069 = vld [vmem:[%s3 + $0x74] sm:$0xf]
      %v3070 = vld [vmem:[%s3 + $0x78] sm:$0xf]
      %v3071 = vld [vmem:[%s3 + $0x7c] sm:$0xf]
      %v3072 = vld [vmem:[%s3 + $0x80] sm:$0xf]
      %v3073 = vld [vmem:[%s3 + $0x84] sm:$0xf]
      %v3074 = vld [vmem:[%s3 + $0x88] sm:$0xf]
      %v3075 = vld [vmem:[%s3 + $0x8c] sm:$0xf]
      %v3076 = vld [vmem:[%s3 + $0x90] sm:$0xf]
      %v3077 = vld [vmem:[%s3 + $0x94] sm:$0xf]
      %v3078 = vld [vmem:[%s3 + $0x98] sm:$0xf]
      %v3079 = vld [vmem:[%s3 + $0x9c] sm:$0xf]
      %v3080 = vld [vmem:[%s3 + $0xa0] sm:$0xf]
      %v3081 = vld [vmem:[%s3 + $0xa4] sm:$0xf]
      %v3082 = vld [vmem:[%s3 + $0xa8] sm:$0xf]
      %v3083 = vld [vmem:[%s3 + $0xac] sm:$0xf]
      %v3084 = vld [vmem:[%s3 + $0xb0] sm:$0xf]
      %v3085 = vld [vmem:[%s3 + $0xb4] sm:$0xf]
      %v3086 = vld [vmem:[%s3 + $0xb8] sm:$0xf]
      %v3087 = vld [vmem:[%s3 + $0xbc] sm:$0xf]
      %v3089 = vshrl.u32 %v2974, 16
      %v3091 = vshll.u32 %v2974, 16
      %v3093 = vrot.slane %v3091, 1
      %v3094 = vor.u32 %v3089, %v3093
      %v3096 = vshll.u32 %v2975, 16
      %v3098 = vrot.slane %v3096, 1
      %v3099 = vsel %vm490, %v3094, %v3098
      %v3101 = vshrl.u32 %v2976, 16
      %v3103 = vshll.u32 %v2976, 16
      %v3105 = vrot.slane %v3103, 1
      %v3106 = vor.u32 %v3101, %v3105
      %v3108 = vshll.u32 %v2977, 16
      %v3110 = vrot.slane %v3108, 1
      %v3111 = vsel %vm490, %v3106, %v3110
      %v3113 = vshrl.u32 %v2978, 16
      %v3115 = vshll.u32 %v2978, 16
      %v3117 = vrot.slane %v3115, 1
      %v3118 = vor.u32 %v3113, %v3117
      %v3120 = vshll.u32 %v2979, 16
      %v3122 = vrot.slane %v3120, 1
      %v3123 = vsel %vm490, %v3118, %v3122
      %v3125 = vshrl.u32 %v2980, 16
      %v3127 = vshll.u32 %v2980, 16
      %v3129 = vrot.slane %v3127, 1
      %v3130 = vor.u32 %v3125, %v3129
      %v3132 = vshll.u32 %v2981, 16
      %v3134 = vrot.slane %v3132, 1
      %v3135 = vsel %vm490, %v3130, %v3134
      %v3137 = vshrl.u32 %v2982, 16
      %v3139 = vshll.u32 %v2982, 16
      %v3141 = vrot.slane %v3139, 1
      %v3142 = vor.u32 %v3137, %v3141
      %v3144 = vshll.u32 %v2983, 16
      %v3146 = vrot.slane %v3144, 1
      %v3147 = vsel %vm490, %v3142, %v3146
      %v3149 = vshrl.u32 %v2984, 16
      %v3151 = vshll.u32 %v2984, 16
      %v3153 = vrot.slane %v3151, 1
      %v3154 = vor.u32 %v3149, %v3153
      %v3156 = vshll.u32 %v2985, 16
      %v3158 = vrot.slane %v3156, 1
      %v3159 = vsel %vm490, %v3154, %v3158
      %v3161 = vshrl.u32 %v2986, 16
      %v3163 = vshll.u32 %v2986, 16
      %v3165 = vrot.slane %v3163, 1
      %v3166 = vor.u32 %v3161, %v3165
      %v3168 = vshll.u32 %v2987, 16
      %v3170 = vrot.slane %v3168, 1
      %v3171 = vsel %vm490, %v3166, %v3170
      %v3173 = vshrl.u32 %v2988, 16
      %v3175 = vshll.u32 %v2988, 16
      %v3177 = vrot.slane %v3175, 1
      %v3178 = vor.u32 %v3173, %v3177
      %v3180 = vshll.u32 %v2989, 16
      %v3182 = vrot.slane %v3180, 1
      %v3183 = vsel %vm490, %v3178, %v3182
      %v3185 = vshrl.u32 %v2990, 16
      %v3187 = vshll.u32 %v2990, 16
      %v3189 = vrot.slane %v3187, 1
      %v3190 = vor.u32 %v3185, %v3189
      %v3192 = vshll.u32 %v2991, 16
      %v3194 = vrot.slane %v3192, 1
      %v3195 = vsel %vm490, %v3190, %v3194
      %v3197 = vshrl.u32 %v2992, 16
      %v3199 = vshll.u32 %v2992, 16
      %v3201 = vrot.slane %v3199, 1
      %v3202 = vor.u32 %v3197, %v3201
      %v3204 = vshll.u32 %v2993, 16
      %v3206 = vrot.slane %v3204, 1
      %v3207 = vsel %vm490, %v3202, %v3206
      %v3209 = vshrl.u32 %v2994, 16
      %v3211 = vshll.u32 %v2994, 16
      %v3213 = vrot.slane %v3211, 1
      %v3214 = vor.u32 %v3209, %v3213
      %v3216 = vshll.u32 %v2995, 16
      %v3218 = vrot.slane %v3216, 1
      %v3219 = vsel %vm490, %v3214, %v3218
      %v3221 = vshrl.u32 %v2996, 16
      %v3223 = vshll.u32 %v2996, 16
      %v3225 = vrot.slane %v3223, 1
      %v3226 = vor.u32 %v3221, %v3225
      %v3228 = vshll.u32 %v2997, 16
      %v3230 = vrot.slane %v3228, 1
      %v3231 = vsel %vm490, %v3226, %v3230
      %v3233 = vshrl.u32 %v2998, 16
      %v3235 = vshll.u32 %v2998, 16
      %v3237 = vrot.slane %v3235, 1
      %v3238 = vor.u32 %v3233, %v3237
      %v3240 = vshll.u32 %v2999, 16
      %v3242 = vrot.slane %v3240, 1
      %v3243 = vsel %vm490, %v3238, %v3242
      %v3245 = vshrl.u32 %v3000, 16
      %v3247 = vshll.u32 %v3000, 16
      %v3249 = vrot.slane %v3247, 1
      %v3250 = vor.u32 %v3245, %v3249
      %v3252 = vshll.u32 %v3001, 16
      %v3254 = vrot.slane %v3252, 1
      %v3255 = vsel %vm490, %v3250, %v3254
      %v3257 = vshrl.u32 %v3002, 16
      %v3259 = vshll.u32 %v3002, 16
      %v3261 = vrot.slane %v3259, 1
      %v3262 = vor.u32 %v3257, %v3261
      %v3264 = vshll.u32 %v3003, 16
      %v3266 = vrot.slane %v3264, 1
      %v3267 = vsel %vm490, %v3262, %v3266
      %v3269 = vshrl.u32 %v3004, 16
      %v3271 = vshll.u32 %v3004, 16
      %v3273 = vrot.slane %v3271, 1
      %v3274 = vor.u32 %v3269, %v3273
      %v3276 = vshll.u32 %v3005, 16
      %v3278 = vrot.slane %v3276, 1
      %v3279 = vsel %vm490, %v3274, %v3278
      %v3281 = vshrl.u32 %v3028, 16
      %v3283 = vshll.u32 %v3028, 16
      %v3285 = vrot.slane %v3283, 1
      %v3286 = vor.u32 %v3281, %v3285
      %v3288 = vshll.u32 %v3029, 16
      %v3290 = vrot.slane %v3288, 1
      %v3291 = vsel %vm490, %v3286, %v3290
      %v3293 = vshrl.u32 %v3037, 16
      %v3295 = vshll.u32 %v3037, 16
      %v3297 = vrot.slane %v3295, 1
      %v3298 = vor.u32 %v3293, %v3297
      %v3300 = vshll.u32 %v3038, 16
      %v3302 = vrot.slane %v3300, 1
      %v3303 = vsel %vm490, %v3298, %v3302
      %s3322 = scalar_lea.vmem %s3, 192
      %v3323 = vld [vmem:[%s3322] sm:$0xf]
      %v3324 = vld [vmem:[%s3322 + $0x4] sm:$0xf]
      %v3325 = vld [vmem:[%s3322 + $0x8] sm:$0xf]
      %v3326 = vld [vmem:[%s3322 + $0xc] sm:$0xf]
      %v3327 = vld [vmem:[%s3322 + $0x10] sm:$0xf]
      %v3328 = vld [vmem:[%s3322 + $0x14] sm:$0xf]
      %v3329 = vld [vmem:[%s3322 + $0x18] sm:$0xf]
      %v3330 = vld [vmem:[%s3322 + $0x1c] sm:$0xf]
      %v3331 = vld [vmem:[%s3322 + $0x20] sm:$0xf]
      %v3332 = vld [vmem:[%s3322 + $0x24] sm:$0xf]
      %v3333 = vld [vmem:[%s3322 + $0x28] sm:$0xf]
      %v3334 = vld [vmem:[%s3322 + $0x2c] sm:$0xf]
      %v3335 = vld [vmem:[%s3322 + $0x30] sm:$0xf]
      %v3336 = vld [vmem:[%s3322 + $0x34] sm:$0xf]
      %v3337 = vld [vmem:[%s3322 + $0x38] sm:$0xf]
      %v3338 = vld [vmem:[%s3322 + $0x3c] sm:$0xf]
      %v3339 = vld [vmem:[%s3322 + $0x40] sm:$0xf]
      %v3340 = vld [vmem:[%s3322 + $0x44] sm:$0xf]
      %v3341 = vld [vmem:[%s3322 + $0x48] sm:$0xf]
      %v3342 = vld [vmem:[%s3322 + $0x4c] sm:$0xf]
      %v3343 = vld [vmem:[%s3322 + $0x50] sm:$0xf]
      %v3344 = vld [vmem:[%s3322 + $0x54] sm:$0xf]
      %v3345 = vld [vmem:[%s3322 + $0x58] sm:$0xf]
      %v3346 = vld [vmem:[%s3322 + $0x5c] sm:$0xf]
      %v3347 = vld [vmem:[%s3322 + $0x60] sm:$0xf]
      %v3348 = vld [vmem:[%s3322 + $0x64] sm:$0xf]
      %v3349 = vld [vmem:[%s3322 + $0x68] sm:$0xf]
      %v3350 = vld [vmem:[%s3322 + $0x6c] sm:$0xf]
      %v3351 = vld [vmem:[%s3322 + $0x70] sm:$0xf]
      %v3352 = vld [vmem:[%s3322 + $0x74] sm:$0xf]
      %v3353 = vld [vmem:[%s3322 + $0x78] sm:$0xf]
      %v3354 = vld [vmem:[%s3322 + $0x7c] sm:$0xf]
      %v3355 = vld [vmem:[%s3322 + $0x80] sm:$0xf]
      %v3356 = vld [vmem:[%s3322 + $0x84] sm:$0xf]
      %v3357 = vld [vmem:[%s3322 + $0x88] sm:$0xf]
      %v3358 = vld [vmem:[%s3322 + $0x8c] sm:$0xf]
      %v3359 = vld [vmem:[%s3322 + $0x90] sm:$0xf]
      %v3360 = vld [vmem:[%s3322 + $0x94] sm:$0xf]
      %v3361 = vld [vmem:[%s3322 + $0x98] sm:$0xf]
      %v3362 = vld [vmem:[%s3322 + $0x9c] sm:$0xf]
      %v3363 = vld [vmem:[%s3322 + $0xa0] sm:$0xf]
      %v3364 = vld [vmem:[%s3322 + $0xa4] sm:$0xf]
      %v3365 = vld [vmem:[%s3322 + $0xa8] sm:$0xf]
      %v3366 = vld [vmem:[%s3322 + $0xac] sm:$0xf]
      %v3367 = vld [vmem:[%s3322 + $0xb0] sm:$0xf]
      %v3368 = vld [vmem:[%s3322 + $0xb4] sm:$0xf]
      %v3369 = vld [vmem:[%s3322 + $0xb8] sm:$0xf]
      %v3370 = vld [vmem:[%s3322 + $0xbc] sm:$0xf]
      %v3419 = vunpack.c.l.b16 %v3323
      %v3420 = vunpack.c.l.b16 %v3324
      %v3421 = vunpack.c.l.b16 %v3325
      %v3422 = vunpack.c.l.b16 %v3326
      %v3423 = vunpack.c.l.b16 %v3327
      %v3424 = vunpack.c.l.b16 %v3328
      %v3425 = vunpack.c.l.b16 %v3329
      %v3426 = vunpack.c.l.b16 %v3330
      %v3427 = vunpack.c.l.b16 %v3331
      %v3428 = vunpack.c.l.b16 %v3332
      %v3429 = vunpack.c.l.b16 %v3333
      %v3430 = vunpack.c.l.b16 %v3334
      %v3431 = vunpack.c.l.b16 %v3335
      %v3432 = vunpack.c.l.b16 %v3336
      %v3433 = vunpack.c.l.b16 %v3337
      %v3434 = vunpack.c.l.b16 %v3338
      %v3435 = vunpack.c.l.b16 %v3339
      %v3436 = vunpack.c.l.b16 %v3340
      %v3437 = vunpack.c.l.b16 %v3341
      %v3438 = vunpack.c.l.b16 %v3342
      %v3439 = vunpack.c.l.b16 %v3343
      %v3440 = vunpack.c.l.b16 %v3344
      %v3441 = vunpack.c.l.b16 %v3345
      %v3442 = vunpack.c.l.b16 %v3346
      %v3443 = vunpack.c.l.b16 %v3347
      %v3444 = vunpack.c.l.b16 %v3348
      %v3445 = vunpack.c.l.b16 %v3349
      %v3446 = vunpack.c.l.b16 %v3350
      %v3447 = vunpack.c.l.b16 %v3351
      %v3448 = vunpack.c.l.b16 %v3352
      %v3449 = vunpack.c.l.b16 %v3353
      %v3450 = vunpack.c.l.b16 %v3354
      %v3451 = vunpack.c.l.b16 %v3355
      %v3452 = vunpack.c.l.b16 %v3356
      %v3453 = vunpack.c.l.b16 %v3357
      %v3454 = vunpack.c.l.b16 %v3358
      %v3455 = vunpack.c.l.b16 %v3359
      %v3456 = vunpack.c.l.b16 %v3360
      %v3457 = vunpack.c.l.b16 %v3361
      %v3458 = vunpack.c.l.b16 %v3362
      %v3459 = vunpack.c.l.b16 %v3363
      %v3460 = vunpack.c.l.b16 %v3364
      %v3461 = vunpack.c.l.b16 %v3365
      %v3462 = vunpack.c.l.b16 %v3366
      %v3463 = vunpack.c.l.b16 %v3367
      %v3464 = vunpack.c.l.b16 %v3368
      %v3465 = vunpack.c.l.b16 %v3369
      %v3466 = vunpack.c.l.b16 %v3370
      %v3467 = vpack.c.b16 %v3420, %v3419
      %v3468 = vpack.c.b16 %v3422, %v3421
      %v3469 = vpack.c.b16 %v3424, %v3423
      %v3470 = vpack.c.b16 %v3426, %v3425
      %v3471 = vpack.c.b16 %v3428, %v3427
      %v3472 = vpack.c.b16 %v3430, %v3429
      %v3473 = vpack.c.b16 %v3432, %v3431
      %v3474 = vpack.c.b16 %v3434, %v3433
      %v3475 = vpack.c.b16 %v3436, %v3435
      %v3476 = vpack.c.b16 %v3438, %v3437
      %v3477 = vpack.c.b16 %v3440, %v3439
      %v3478 = vpack.c.b16 %v3442, %v3441
      %v3479 = vpack.c.b16 %v3444, %v3443
      %v3480 = vpack.c.b16 %v3446, %v3445
      %v3481 = vpack.c.b16 %v3448, %v3447
      %v3482 = vpack.c.b16 %v3450, %v3449
      %v3483 = vpack.c.b16 %v3452, %v3451
      %v3484 = vpack.c.b16 %v3454, %v3453
      %v3485 = vpack.c.b16 %v3456, %v3455
      %v3486 = vpack.c.b16 %v3458, %v3457
      %v3487 = vpack.c.b16 %v3460, %v3459
      %v3488 = vpack.c.b16 %v3462, %v3461
      %v3489 = vpack.c.b16 %v3464, %v3463
      %v3490 = vpack.c.b16 %v3466, %v3465
      %3515 = vmatprep.subr.bf16.mxu0 0
      %3516 = vmatpush1.bf16.msra.mxu0 %v3467
      %3517 = vmatprep.subr.bf16.mxu0 0
      %3518 = vmatpush1.bf16.msra.mxu0 %v3468
      %3519 = vmatprep.subr.bf16.mxu0 0
      %3520 = vmatpush1.bf16.msra.mxu0 %v3469
      %3521 = vmatprep.subr.bf16.mxu0 0
      %3522 = vmatpush1.bf16.msra.mxu0 %v3470
      %3523 = vmatprep.subr.bf16.mxu0 0
      %3524 = vmatpush1.bf16.msra.mxu0 %v3471
      %3525 = vmatprep.subr.bf16.mxu0 0
      %3526 = vmatpush1.bf16.msra.mxu0 %v3472
      %3527 = vmatprep.subr.bf16.mxu0 0
      %3528 = vmatpush1.bf16.msra.mxu0 %v3473
      %3529 = vmatprep.subr.bf16.mxu0 0
      %3530 = vmatpush1.bf16.msra.mxu0 %v3474
      %3531 = vmatprep.subr.bf16.mxu0 0
      %3532 = vmatpush1.bf16.msra.mxu0 %v3475
      %3533 = vmatprep.subr.bf16.mxu0 0
      %3534 = vmatpush1.bf16.msra.mxu0 %v3476
      %3535 = vmatprep.subr.bf16.mxu0 0
      %3536 = vmatpush1.bf16.msra.mxu0 %v3477
      %3537 = vmatprep.subr.bf16.mxu0 0
      %3538 = vmatpush1.bf16.msra.mxu0 %v3478
      %3539 = vmatprep.subr.bf16.mxu0 0
      %3540 = vmatpush1.bf16.msra.mxu0 %v3479
      %3541 = vmatprep.subr.bf16.mxu0 0
      %3542 = vmatpush1.bf16.msra.mxu0 %v3480
      %3543 = vmatprep.subr.bf16.mxu0 0
      %3544 = vmatpush1.bf16.msra.mxu0 %v3481
      %3545 = vmatprep.subr.bf16.mxu0 0
      %3546 = vmatpush1.bf16.msra.mxu0 %v3482
      %3547 = vmatprep.mubr.bf16.mxu0 %v3111
      %3548 = vmatmul.mubr.bf16.gmra.mrb[0].mxu0 %v3099
      %v3549 = vpop.f32.mrb[0].mxu0
      %v3550 = vadd.f32 0.0, %v3549
      %v3551 = vpop.f32.mrb[0].mxu0
      %v3552 = vpop.f32.mrb[0].mxu0
      %v3553 = vadd.f32 0.0, %v3552
      %v3554 = vpop.f32.mrb[0].mxu0
      %3555 = vmatprep.mubr.bf16.mxu0 %v3123
      %3556 = vmatmul.mubr.bf16.gmra.mrb[0].mxu0 %v3111
      %v3557 = vpop.f32.mrb[0].mxu0
      %v3558 = vadd.f32 0.0, %v3557
      %v3559 = vpop.f32.mrb[0].mxu0
      %v3560 = vpop.f32.mrb[0].mxu0
      %v3561 = vadd.f32 0.0, %v3560
      %v3562 = vpop.f32.mrb[0].mxu0
      %3563 = vmatprep.mubr.bf16.mxu0 %v3135
      %3564 = vmatmul.mubr.bf16.gmra.mrb[0].mxu0 %v3123
      %v3565 = vpop.f32.mrb[0].mxu0
      %v3566 = vadd.f32 0.0, %v3565
      %v3567 = vpop.f32.mrb[0].mxu0
      %v3568 = vpop.f32.mrb[0].mxu0
      %v3569 = vadd.f32 0.0, %v3568
      %v3570 = vpop.f32.mrb[0].mxu0
      %3571 = vmatprep.mubr.bf16.mxu0 %v3147
      %3572 = vmatmul.mubr.bf16.gmra.mrb[0].mxu0 %v3135
      %v3573 = vpop.f32.mrb[0].mxu0
      %v3574 = vadd.f32 0.0, %v3573
      %v3575 = vpop.f32.mrb[0].mxu0
      %v3576 = vpop.f32.mrb[0].mxu0
      %v3577 = vadd.f32 0.0, %v3576
      %v3578 = vpop.f32.mrb[0].mxu0
      %3579 = vmatprep.mubr.bf16.mxu0 %v3159
      %3580 = vmatmul.mubr.bf16.gmra.mrb[0].mxu0 %v3147
      %v3581 = vpop.f32.mrb[0].mxu0
      %v3582 = vadd.f32 0.0, %v3581
      %v3583 = vpop.f32.mrb[0].mxu0
      %v3584 = vpop.f32.mrb[0].mxu0
      %v3585 = vadd.f32 0.0, %v3584
      %v3586 = vpop.f32.mrb[0].mxu0
      %3587 = vmatprep.mubr.bf16.mxu0 %v3171
      %3588 = vmatmul.mubr.bf16.gmra.mrb[0].mxu0 %v3159
      %v3589 = vpop.f32.mrb[0].mxu0
      %v3590 = vadd.f32 0.0, %v3589
      %v3591 = vpop.f32.mrb[0].mxu0
      %v3592 = vpop.f32.mrb[0].mxu0
      %v3593 = vadd.f32 0.0, %v3592
      %v3594 = vpop.f32.mrb[0].mxu0
      %3595 = vmatprep.mubr.bf16.mxu0 %v3183
      %3596 = vmatmul.mubr.bf16.gmra.mrb[0].mxu0 %v3171
      %v3597 = vpop.f32.mrb[0].mxu0
      %v3598 = vadd.f32 0.0, %v3597
      %v3599 = vpop.f32.mrb[0].mxu0
      %v3600 = vpop.f32.mrb[0].mxu0
      %v3601 = vadd.f32 0.0, %v3600
      %v3602 = vpop.f32.mrb[0].mxu0
      %3603 = vmatprep.mubr.bf16.mxu0 %v3195
      %3604 = vmatmul.mubr.bf16.gmra.mrb[0].mxu0 %v3183
      %v3605 = vpop.f32.mrb[0].mxu0
      %v3606 = vadd.f32 0.0, %v3605
      %v3607 = vpop.f32.mrb[0].mxu0
      %v3608 = vpop.f32.mrb[0].mxu0
      %v3609 = vadd.f32 0.0, %v3608
      %v3610 = vpop.f32.mrb[0].mxu0
      %3611 = vmatprep.mubr.bf16.mxu0 %v3207
      %3612 = vmatmul.mubr.bf16.gmra.mrb[0].mxu0 %v3195
      %v3613 = vpop.f32.mrb[0].mxu0
      %v3614 = vadd.f32 0.0, %v3613
      %v3615 = vpop.f32.mrb[0].mxu0
      %v3616 = vpop.f32.mrb[0].mxu0
      %v3617 = vadd.f32 0.0, %v3616
      %v3618 = vpop.f32.mrb[0].mxu0
      %3619 = vmatprep.mubr.bf16.mxu0 %v3219
      %3620 = vmatmul.mubr.bf16.gmra.mrb[0].mxu0 %v3207
      %v3621 = vpop.f32.mrb[0].mxu0
      %v3622 = vadd.f32 0.0, %v3621
      %v3623 = vpop.f32.mrb[0].mxu0
      %v3624 = vpop.f32.mrb[0].mxu0
      %v3625 = vadd.f32 0.0, %v3624
      %v3626 = vpop.f32.mrb[0].mxu0
      %3627 = vmatprep.mubr.bf16.mxu0 %v3231
      %3628 = vmatmul.mubr.bf16.gmra.mrb[0].mxu0 %v3219
      %v3629 = vpop.f32.mrb[0].mxu0
      %v3630 = vadd.f32 0.0, %v3629
      %v3631 = vpop.f32.mrb[0].mxu0
      %v3632 = vpop.f32.mrb[0].mxu0
      %v3633 = vadd.f32 0.0, %v3632
      %v3634 = vpop.f32.mrb[0].mxu0
      %3635 = vmatprep.mubr.bf16.mxu0 %v3243
      %3636 = vmatmul.mubr.bf16.gmra.mrb[0].mxu0 %v3231
      %v3637 = vpop.f32.mrb[0].mxu0
      %v3638 = vadd.f32 0.0, %v3637
      %v3639 = vpop.f32.mrb[0].mxu0
      %v3640 = vpop.f32.mrb[0].mxu0
      %v3641 = vadd.f32 0.0, %v3640
      %v3642 = vpop.f32.mrb[0].mxu0
      %3643 = vmatprep.mubr.bf16.mxu0 %v3255
      %3644 = vmatmul.mubr.bf16.gmra.mrb[0].mxu0 %v3243
      %v3645 = vpop.f32.mrb[0].mxu0
      %v3646 = vadd.f32 0.0, %v3645
      %v3647 = vpop.f32.mrb[0].mxu0
      %v3648 = vpop.f32.mrb[0].mxu0
      %v3649 = vadd.f32 0.0, %v3648
      %v3650 = vpop.f32.mrb[0].mxu0
      %3651 = vmatprep.mubr.bf16.mxu0 %v3267
      %3652 = vmatmul.mubr.bf16.gmra.mrb[0].mxu0 %v3255
      %v3653 = vpop.f32.mrb[0].mxu0
      %v3654 = vadd.f32 0.0, %v3653
      %v3655 = vpop.f32.mrb[0].mxu0
      %v3656 = vpop.f32.mrb[0].mxu0
      %v3657 = vadd.f32 0.0, %v3656
      %v3658 = vpop.f32.mrb[0].mxu0
      %3659 = vmatprep.mubr.bf16.mxu0 %v3279
      %3660 = vmatmul.mubr.bf16.gmra.mrb[0].mxu0 %v3267
      %v3661 = vpop.f32.mrb[0].mxu0
      %v3662 = vadd.f32 0.0, %v3661
      %v3663 = vpop.f32.mrb[0].mxu0
      %v3664 = vpop.f32.mrb[0].mxu0
      %v3665 = vadd.f32 0.0, %v3664
      %v3666 = vpop.f32.mrb[0].mxu0
      %3667 = vmatprep.mubr.bf16.mxu0 %v3291
      %3668 = vmatmul.mubr.bf16.gmra.mrb[0].mxu0 %v3279
      %v3669 = vpop.f32.mrb[0].mxu0
      %v3670 = vadd.f32 0.0, %v3669
      %v3671 = vpop.f32.mrb[0].mxu0
      %v3672 = vpop.f32.mrb[0].mxu0
      %v3673 = vadd.f32 0.0, %v3672
      %v3674 = vpop.f32.mrb[0].mxu0
      %3675 = vdwg.mxu0
      %3676 = vmatprep.subr.bf16.mxu0 0
      %3677 = vmatpush1.bf16.msra.mxu0 %v3483
      %3678 = vmatprep.subr.bf16.mxu0 0
      %3679 = vmatpush1.bf16.msra.mxu0 %v3484
      %3680 = vmatprep.subr.bf16.mxu0 0
      %3681 = vmatpush1.bf16.msra.mxu0 %v3485
      %3682 = vmatprep.subr.bf16.mxu0 0
      %3683 = vmatpush1.bf16.msra.mxu0 %v3486
      %3684 = vmatprep.subr.bf16.mxu0 0
      %3685 = vmatpush1.bf16.msra.mxu0 %v3487
      %3686 = vmatprep.subr.bf16.mxu0 0
      %3687 = vmatpush1.bf16.msra.mxu0 %v3488
      %3688 = vmatprep.subr.bf16.mxu0 0
      %3689 = vmatpush1.bf16.msra.mxu0 %v3489
      %3690 = vmatprep.subr.bf16.mxu0 0
      %3691 = vmatpush1.bf16.msra.mxu0 %v3490
      %3692 = vmatprep.subr.bf16.mxu0 0
      %3693 = vmatpush1.bf16.msra.mxu0 0
      %3694 = vmatprep.subr.bf16.mxu0 0
      %3695 = vmatpush1.bf16.msra.mxu0 0
      %3696 = vmatprep.subr.bf16.mxu0 0
      %3697 = vmatpush1.bf16.msra.mxu0 0
      %3698 = vmatprep.subr.bf16.mxu0 0
      %3699 = vmatpush1.bf16.msra.mxu0 0
      %3700 = vmatprep.subr.bf16.mxu0 0
      %3701 = vmatpush1.bf16.msra.mxu0 0
      %3702 = vmatprep.subr.bf16.mxu0 0
      %3703 = vmatpush1.bf16.msra.mxu0 0
      %3704 = vmatprep.subr.bf16.mxu0 0
      %3705 = vmatpush1.bf16.msra.mxu0 0
      %3706 = vmatprep.subr.bf16.mxu0 0
      %3707 = vmatpush1.bf16.msra.mxu0 0
      %3708 = vmatprep.mubr.bf16.mxu0 0
      %3709 = vmatmul.mubr.bf16.gmra.mrb[0].mxu0 %v3123
      %v3710 = vpop.f32.mrb[0].mxu0
      %v3711 = vadd.f32 %v3550, %v3710
      %v3712 = vpop.f32.mrb[0].mxu0
      %v3713 = vpop.f32.mrb[0].mxu0
      %v3714 = vadd.f32 %v3553, %v3713
      %v3715 = vpop.f32.mrb[0].mxu0
      %3716 = vmatprep.mubr.bf16.mxu0 0
      %3717 = vmatmul.mubr.bf16.gmra.mrb[0].mxu0 %v3135
      %v3718 = vpop.f32.mrb[0].mxu0
      %v3719 = vadd.f32 %v3558, %v3718
      %v3720 = vpop.f32.mrb[0].mxu0
      %v3721 = vpop.f32.mrb[0].mxu0
      %v3722 = vadd.f32 %v3561, %v3721
      %v3723 = vpop.f32.mrb[0].mxu0
      %3724 = vmatprep.mubr.bf16.mxu0 0
      %3725 = vmatmul.mubr.bf16.gmra.mrb[0].mxu0 %v3147
      %v3726 = vpop.f32.mrb[0].mxu0
      %v3727 = vadd.f32 %v3566, %v3726
      %v3728 = vpop.f32.mrb[0].mxu0
      %v3729 = vpop.f32.mrb[0].mxu0
      %v3730 = vadd.f32 %v3569, %v3729
      %v3731 = vpop.f32.mrb[0].mxu0
      %3732 = vmatprep.mubr.bf16.mxu0 0
      %3733 = vmatmul.mubr.bf16.gmra.mrb[0].mxu0 %v3159
      %v3734 = vpop.f32.mrb[0].mxu0
      %v3735 = vadd.f32 %v3574, %v3734
      %v3736 = vpop.f32.mrb[0].mxu0
      %v3737 = vpop.f32.mrb[0].mxu0
      %v3738 = vadd.f32 %v3577, %v3737
      %v3739 = vpop.f32.mrb[0].mxu0
      %3740 = vmatprep.mubr.bf16.mxu0 0
      %3741 = vmatmul.mubr.bf16.gmra.mrb[0].mxu0 %v3171
      %v3742 = vpop.f32.mrb[0].mxu0
      %v3743 = vadd.f32 %v3582, %v3742
      %v3744 = vpop.f32.mrb[0].mxu0
      %v3745 = vpop.f32.mrb[0].mxu0
      %v3746 = vadd.f32 %v3585, %v3745
      %v3747 = vpop.f32.mrb[0].mxu0
      %3748 = vmatprep.mubr.bf16.mxu0 0
      %3749 = vmatmul.mubr.bf16.gmra.mrb[0].mxu0 %v3183
      %v3750 = vpop.f32.mrb[0].mxu0
      %v3751 = vadd.f32 %v3590, %v3750
      %v3752 = vpop.f32.mrb[0].mxu0
      %v3753 = vpop.f32.mrb[0].mxu0
      %v3754 = vadd.f32 %v3593, %v3753
      %v3755 = vpop.f32.mrb[0].mxu0
      %3756 = vmatprep.mubr.bf16.mxu0 0
      %3757 = vmatmul.mubr.bf16.gmra.mrb[0].mxu0 %v3195
      %v3758 = vpop.f32.mrb[0].mxu0
      %v3759 = vadd.f32 %v3598, %v3758
      %v3760 = vpop.f32.mrb[0].mxu0
      %v3761 = vpop.f32.mrb[0].mxu0
      %v3762 = vadd.f32 %v3601, %v3761
      %v3763 = vpop.f32.mrb[0].mxu0
      %3764 = vmatprep.mubr.bf16.mxu0 0
      %3765 = vmatmul.mubr.bf16.gmra.mrb[0].mxu0 %v3207
      %v3766 = vpop.f32.mrb[0].mxu0
      %v3767 = vadd.f32 %v3606, %v3766
      %v3768 = vpop.f32.mrb[0].mxu0
      %v3769 = vpop.f32.mrb[0].mxu0
      %v3770 = vadd.f32 %v3609, %v3769
      %v3771 = vpop.f32.mrb[0].mxu0
      %3772 = vmatprep.mubr.bf16.mxu0 0
      %3773 = vmatmul.mubr.bf16.gmra.mrb[0].mxu0 %v3219
      %v3774 = vpop.f32.mrb[0].mxu0
      %v3775 = vadd.f32 %v3614, %v3774
      %v3776 = vpop.f32.mrb[0].mxu0
      %v3777 = vpop.f32.mrb[0].mxu0
      %v3778 = vadd.f32 %v3617, %v3777
      %v3779 = vpop.f32.mrb[0].mxu0
      %3780 = vmatprep.mubr.bf16.mxu0 0
      %3781 = vmatmul.mubr.bf16.gmra.mrb[0].mxu0 %v3231
      %v3782 = vpop.f32.mrb[0].mxu0
      %v3783 = vadd.f32 %v3622, %v3782
      %v3784 = vpop.f32.mrb[0].mxu0
      %v3785 = vpop.f32.mrb[0].mxu0
      %v3786 = vadd.f32 %v3625, %v3785
      %v3787 = vpop.f32.mrb[0].mxu0
      %3788 = vmatprep.mubr.bf16.mxu0 0
      %3789 = vmatmul.mubr.bf16.gmra.mrb[0].mxu0 %v3243
      %v3790 = vpop.f32.mrb[0].mxu0
      %v3791 = vadd.f32 %v3630, %v3790
      %v3792 = vpop.f32.mrb[0].mxu0
      %v3793 = vpop.f32.mrb[0].mxu0
      %v3794 = vadd.f32 %v3633, %v3793
      %v3795 = vpop.f32.mrb[0].mxu0
      %3796 = vmatprep.mubr.bf16.mxu0 0
      %3797 = vmatmul.mubr.bf16.gmra.mrb[0].mxu0 %v3255
      %v3798 = vpop.f32.mrb[0].mxu0
      %v3799 = vadd.f32 %v3638, %v3798
      %v3800 = vpop.f32.mrb[0].mxu0
      %v3801 = vpop.f32.mrb[0].mxu0
      %v3802 = vadd.f32 %v3641, %v3801
      %v3803 = vpop.f32.mrb[0].mxu0
      %3804 = vmatprep.mubr.bf16.mxu0 0
      %3805 = vmatmul.mubr.bf16.gmra.mrb[0].mxu0 %v3267
      %v3806 = vpop.f32.mrb[0].mxu0
      %v3807 = vadd.f32 %v3646, %v3806
      %v3808 = vpop.f32.mrb[0].mxu0
      %v3809 = vpop.f32.mrb[0].mxu0
      %v3810 = vadd.f32 %v3649, %v3809
      %v3811 = vpop.f32.mrb[0].mxu0
      %3812 = vmatprep.mubr.bf16.mxu0 0
      %3813 = vmatmul.mubr.bf16.gmra.mrb[0].mxu0 %v3279
      %v3814 = vpop.f32.mrb[0].mxu0
      %v3815 = vadd.f32 %v3654, %v3814
      %v3816 = vpop.f32.mrb[0].mxu0
      %v3817 = vpop.f32.mrb[0].mxu0
      %v3818 = vadd.f32 %v3657, %v3817
      %v3819 = vpop.f32.mrb[0].mxu0
      %3820 = vmatprep.mubr.bf16.mxu0 0
      %3821 = vmatmul.mubr.bf16.gmra.mrb[0].mxu0 %v3291
      %v3822 = vpop.f32.mrb[0].mxu0
      %v3823 = vadd.f32 %v3662, %v3822
      %v3824 = vpop.f32.mrb[0].mxu0
      %v3825 = vpop.f32.mrb[0].mxu0
      %v3826 = vadd.f32 %v3665, %v3825
      %v3827 = vpop.f32.mrb[0].mxu0
      %3828 = vmatprep.mubr.bf16.mxu0 0
      %3829 = vmatmul.mubr.bf16.gmra.mrb[0].mxu0 %v3303
      %v3830 = vpop.f32.mrb[0].mxu0
      %v3831 = vadd.f32 %v3670, %v3830
      %v3832 = vpop.f32.mrb[0].mxu0
      %v3833 = vpop.f32.mrb[0].mxu0
      %v3834 = vadd.f32 %v3673, %v3833
      %v3835 = vpop.f32.mrb[0].mxu0
      %3836 = vdwg.mxu0
      %v3885 = vunpack.c.l.b16 %v3040
      %v3886 = vunpack.c.l.b16 %v3041
      %v3887 = vunpack.c.l.b16 %v3042
      %v3888 = vunpack.c.l.b16 %v3043
      %v3889 = vunpack.c.l.b16 %v3044
      %v3890 = vunpack.c.l.b16 %v3045
      %v3891 = vunpack.c.l.b16 %v3046
      %v3892 = vunpack.c.l.b16 %v3047
      %v3893 = vunpack.c.l.b16 %v3048
      %v3894 = vunpack.c.l.b16 %v3049
      %v3895 = vunpack.c.l.b16 %v3050
      %v3896 = vunpack.c.l.b16 %v3051
      %v3897 = vunpack.c.l.b16 %v3052
      %v3898 = vunpack.c.l.b16 %v3053
      %v3899 = vunpack.c.l.b16 %v3054
      %v3900 = vunpack.c.l.b16 %v3055
      %v3901 = vunpack.c.l.b16 %v3056
      %v3902 = vunpack.c.l.b16 %v3057
      %v3903 = vunpack.c.l.b16 %v3058
      %v3904 = vunpack.c.l.b16 %v3059
      %v3905 = vunpack.c.l.b16 %v3060
      %v3906 = vunpack.c.l.b16 %v3061
      %v3907 = vunpack.c.l.b16 %v3062
      %v3908 = vunpack.c.l.b16 %v3063
      %v3909 = vunpack.c.l.b16 %v3064
      %v3910 = vunpack.c.l.b16 %v3065
      %v3911 = vunpack.c.l.b16 %v3066
      %v3912 = vunpack.c.l.b16 %v3067
      %v3913 = vunpack.c.l.b16 %v3068
      %v3914 = vunpack.c.l.b16 %v3069
      %v3915 = vunpack.c.l.b16 %v3070
      %v3916 = vunpack.c.l.b16 %v3071
      %v3917 = vunpack.c.l.b16 %v3072
      %v3918 = vunpack.c.l.b16 %v3073
      %v3919 = vunpack.c.l.b16 %v3074
      %v3920 = vunpack.c.l.b16 %v3075
      %v3921 = vunpack.c.l.b16 %v3076
      %v3922 = vunpack.c.l.b16 %v3077
      %v3923 = vunpack.c.l.b16 %v3078
      %v3924 = vunpack.c.l.b16 %v3079
      %v3925 = vunpack.c.l.b16 %v3080
      %v3926 = vunpack.c.l.b16 %v3081
      %v3927 = vunpack.c.l.b16 %v3082
      %v3928 = vunpack.c.l.b16 %v3083
      %v3929 = vunpack.c.l.b16 %v3084
      %v3930 = vunpack.c.l.b16 %v3085
      %v3931 = vunpack.c.l.b16 %v3086
      %v3932 = vunpack.c.l.b16 %v3087
      %v3933 = vpack.c.b16 %v3886, %v3885
      %v3934 = vpack.c.b16 %v3888, %v3887
      %v3935 = vpack.c.b16 %v3890, %v3889
      %v3936 = vpack.c.b16 %v3892, %v3891
      %v3937 = vpack.c.b16 %v3894, %v3893
      %v3938 = vpack.c.b16 %v3896, %v3895
      %v3939 = vpack.c.b16 %v3898, %v3897
      %v3940 = vpack.c.b16 %v3900, %v3899
      %v3941 = vpack.c.b16 %v3902, %v3901
      %v3942 = vpack.c.b16 %v3904, %v3903
      %v3943 = vpack.c.b16 %v3906, %v3905
      %v3944 = vpack.c.b16 %v3908, %v3907
      %v3945 = vpack.c.b16 %v3910, %v3909
      %v3946 = vpack.c.b16 %v3912, %v3911
      %v3947 = vpack.c.b16 %v3914, %v3913
      %v3948 = vpack.c.b16 %v3916, %v3915
      %v3949 = vpack.c.b16 %v3918, %v3917
      %v3950 = vpack.c.b16 %v3920, %v3919
      %v3951 = vpack.c.b16 %v3922, %v3921
      %v3952 = vpack.c.b16 %v3924, %v3923
      %v3953 = vpack.c.b16 %v3926, %v3925
      %v3954 = vpack.c.b16 %v3928, %v3927
      %v3955 = vpack.c.b16 %v3930, %v3929
      %v3956 = vpack.c.b16 %v3932, %v3931
      %3981 = vmatprep.subr.bf16.mxu0 0
      %3982 = vmatpush1.bf16.msra.mxu0 %v3933
      %3983 = vmatprep.subr.bf16.mxu0 0
      %3984 = vmatpush1.bf16.msra.mxu0 %v3934
      %3985 = vmatprep.subr.bf16.mxu0 0
      %3986 = vmatpush1.bf16.msra.mxu0 %v3935
      %3987 = vmatprep.subr.bf16.mxu0 0
      %3988 = vmatpush1.bf16.msra.mxu0 %v3936
      %3989 = vmatprep.subr.bf16.mxu0 0
      %3990 = vmatpush1.bf16.msra.mxu0 %v3937
      %3991 = vmatprep.subr.bf16.mxu0 0
      %3992 = vmatpush1.bf16.msra.mxu0 %v3938
      %3993 = vmatprep.subr.bf16.mxu0 0
      %3994 = vmatpush1.bf16.msra.mxu0 %v3939
      %3995 = vmatprep.subr.bf16.mxu0 0
      %3996 = vmatpush1.bf16.msra.mxu0 %v3940
      %3997 = vmatprep.subr.bf16.mxu0 0
      %3998 = vmatpush1.bf16.msra.mxu0 %v3941
      %3999 = vmatprep.subr.bf16.mxu0 0
      %4000 = vmatpush1.bf16.msra.mxu0 %v3942
      %4001 = vmatprep.subr.bf16.mxu0 0
      %4002 = vmatpush1.bf16.msra.mxu0 %v3943
      %4003 = vmatprep.subr.bf16.mxu0 0
      %4004 = vmatpush1.bf16.msra.mxu0 %v3944
      %4005 = vmatprep.subr.bf16.mxu0 0
      %4006 = vmatpush1.bf16.msra.mxu0 %v3945
      %4007 = vmatprep.subr.bf16.mxu0 0
      %4008 = vmatpush1.bf16.msra.mxu0 %v3946
      %4009 = vmatprep.subr.bf16.mxu0 0
      %4010 = vmatpush1.bf16.msra.mxu0 %v3947
      %4011 = vmatprep.subr.bf16.mxu0 0
      %4012 = vmatpush1.bf16.msra.mxu0 %v3948
      %4013 = vmatprep.mubr.bf16.mxu0 %v2976
      %4014 = vmatmul.mubr.bf16.gmra.mrb[0].mxu0 %v2974
      %v4015 = vpop.f32.mrb[0].mxu0
      %v4016 = vadd.f32 %v3711, %v4015
      %v4017 = vpop.f32.mrb[0].mxu0
      %v4018 = vpop.f32.mrb[0].mxu0
      %v4019 = vadd.f32 %v3714, %v4018
      %v4020 = vpop.f32.mrb[0].mxu0
      %4021 = vmatprep.mubr.bf16.mxu0 %v2978
      %4022 = vmatmul.mubr.bf16.gmra.mrb[0].mxu0 %v2976
      %v4023 = vpop.f32.mrb[0].mxu0
      %v4024 = vadd.f32 %v3719, %v4023
      %v4025 = vpop.f32.mrb[0].mxu0
      %v4026 = vpop.f32.mrb[0].mxu0
      %v4027 = vadd.f32 %v3722, %v4026
      %v4028 = vpop.f32.mrb[0].mxu0
      %4029 = vmatprep.mubr.bf16.mxu0 %v2980
      %4030 = vmatmul.mubr.bf16.gmra.mrb[0].mxu0 %v2978
      %v4031 = vpop.f32.mrb[0].mxu0
      %v4032 = vadd.f32 %v3727, %v4031
      %v4033 = vpop.f32.mrb[0].mxu0
      %v4034 = vpop.f32.mrb[0].mxu0
      %v4035 = vadd.f32 %v3730, %v4034
      %v4036 = vpop.f32.mrb[0].mxu0
      %4037 = vmatprep.mubr.bf16.mxu0 %v2982
      %4038 = vmatmul.mubr.bf16.gmra.mrb[0].mxu0 %v2980
      %v4039 = vpop.f32.mrb[0].mxu0
      %v4040 = vadd.f32 %v3735, %v4039
      %v4041 = vpop.f32.mrb[0].mxu0
      %v4042 = vpop.f32.mrb[0].mxu0
      %v4043 = vadd.f32 %v3738, %v4042
      %v4044 = vpop.f32.mrb[0].mxu0
      %4045 = vmatprep.mubr.bf16.mxu0 %v2984
      %4046 = vmatmul.mubr.bf16.gmra.mrb[0].mxu0 %v2982
      %v4047 = vpop.f32.mrb[0].mxu0
      %v4048 = vadd.f32 %v3743, %v4047
      %v4049 = vpop.f32.mrb[0].mxu0
      %v4050 = vpop.f32.mrb[0].mxu0
      %v4051 = vadd.f32 %v3746, %v4050
      %v4052 = vpop.f32.mrb[0].mxu0
      %4053 = vmatprep.mubr.bf16.mxu0 %v2986
      %4054 = vmatmul.mubr.bf16.gmra.mrb[0].mxu0 %v2984
      %v4055 = vpop.f32.mrb[0].mxu0
      %v4056 = vadd.f32 %v3751, %v4055
      %v4057 = vpop.f32.mrb[0].mxu0
      %v4058 = vpop.f32.mrb[0].mxu0
      %v4059 = vadd.f32 %v3754, %v4058
      %v4060 = vpop.f32.mrb[0].mxu0
      %4061 = vmatprep.mubr.bf16.mxu0 %v2988
      %4062 = vmatmul.mubr.bf16.gmra.mrb[0].mxu0 %v2986
      %v4063 = vpop.f32.mrb[0].mxu0
      %v4064 = vadd.f32 %v3759, %v4063
      %v4065 = vpop.f32.mrb[0].mxu0
      %v4066 = vpop.f32.mrb[0].mxu0
      %v4067 = vadd.f32 %v3762, %v4066
      %v4068 = vpop.f32.mrb[0].mxu0
      %4069 = vmatprep.mubr.bf16.mxu0 %v2990
      %4070 = vmatmul.mubr.bf16.gmra.mrb[0].mxu0 %v2988
      %v4071 = vpop.f32.mrb[0].mxu0
      %v4072 = vadd.f32 %v3767, %v4071
      %v4073 = vpop.f32.mrb[0].mxu0
      %v4074 = vpop.f32.mrb[0].mxu0
      %v4075 = vadd.f32 %v3770, %v4074
      %v4076 = vpop.f32.mrb[0].mxu0
      %4077 = vmatprep.mubr.bf16.mxu0 %v2992
      %4078 = vmatmul.mubr.bf16.gmra.mrb[0].mxu0 %v2990
      %v4079 = vpop.f32.mrb[0].mxu0
      %v4080 = vadd.f32 %v3775, %v4079
      %v4081 = vpop.f32.mrb[0].mxu0
      %v4082 = vpop.f32.mrb[0].mxu0
      %v4083 = vadd.f32 %v3778, %v4082
      %v4084 = vpop.f32.mrb[0].mxu0
      %4085 = vmatprep.mubr.bf16.mxu0 %v2994
      %4086 = vmatmul.mubr.bf16.gmra.mrb[0].mxu0 %v2992
      %v4087 = vpop.f32.mrb[0].mxu0
      %v4088 = vadd.f32 %v3783, %v4087
      %v4089 = vpop.f32.mrb[0].mxu0
      %v4090 = vpop.f32.mrb[0].mxu0
      %v4091 = vadd.f32 %v3786, %v4090
      %v4092 = vpop.f32.mrb[0].mxu0
      %4093 = vmatprep.mubr.bf16.mxu0 %v2996
      %4094 = vmatmul.mubr.bf16.gmra.mrb[0].mxu0 %v2994
      %v4095 = vpop.f32.mrb[0].mxu0
      %v4096 = vadd.f32 %v3791, %v4095
      %v4097 = vpop.f32.mrb[0].mxu0
      %v4098 = vpop.f32.mrb[0].mxu0
      %v4099 = vadd.f32 %v3794, %v4098
      %v4100 = vpop.f32.mrb[0].mxu0
      %4101 = vmatprep.mubr.bf16.mxu0 %v2998
      %4102 = vmatmul.mubr.bf16.gmra.mrb[0].mxu0 %v2996
      %v4103 = vpop.f32.mrb[0].mxu0
      %v4104 = vadd.f32 %v3799, %v4103
      %v4105 = vpop.f32.mrb[0].mxu0
      %v4106 = vpop.f32.mrb[0].mxu0
      %v4107 = vadd.f32 %v3802, %v4106
      %v4108 = vpop.f32.mrb[0].mxu0
      %4109 = vmatprep.mubr.bf16.mxu0 %v3000
      %4110 = vmatmul.mubr.bf16.gmra.mrb[0].mxu0 %v2998
      %v4111 = vpop.f32.mrb[0].mxu0
      %v4112 = vadd.f32 %v3807, %v4111
      %v4113 = vpop.f32.mrb[0].mxu0
      %v4114 = vpop.f32.mrb[0].mxu0
      %v4115 = vadd.f32 %v3810, %v4114
      %v4116 = vpop.f32.mrb[0].mxu0
      %4117 = vmatprep.mubr.bf16.mxu0 %v3002
      %4118 = vmatmul.mubr.bf16.gmra.mrb[0].mxu0 %v3000
      %v4119 = vpop.f32.mrb[0].mxu0
      %v4120 = vadd.f32 %v3815, %v4119
      %v4121 = vpop.f32.mrb[0].mxu0
      %v4122 = vpop.f32.mrb[0].mxu0
      %v4123 = vadd.f32 %v3818, %v4122
      %v4124 = vpop.f32.mrb[0].mxu0
      %4125 = vmatprep.mubr.bf16.mxu0 %v3004
      %4126 = vmatmul.mubr.bf16.gmra.mrb[0].mxu0 %v3002
      %v4127 = vpop.f32.mrb[0].mxu0
      %v4128 = vadd.f32 %v3823, %v4127
      %v4129 = vpop.f32.mrb[0].mxu0
      %v4130 = vpop.f32.mrb[0].mxu0
      %v4131 = vadd.f32 %v3826, %v4130
      %v4132 = vpop.f32.mrb[0].mxu0
      %4133 = vmatprep.mubr.bf16.mxu0 %v3028
      %4134 = vmatmul.mubr.bf16.gmra.mrb[0].mxu0 %v3004
      %v4135 = vpop.f32.mrb[0].mxu0
      %v4136 = vadd.f32 %v3831, %v4135
      %v4137 = vpop.f32.mrb[0].mxu0
      %v4138 = vpop.f32.mrb[0].mxu0
      %v4139 = vadd.f32 %v3834, %v4138
      %v4140 = vpop.f32.mrb[0].mxu0
      %4141 = vdwg.mxu0
      %4142 = vmatprep.subr.bf16.mxu0 0
      %4143 = vmatpush1.bf16.msra.mxu0 %v3949
      %4144 = vmatprep.subr.bf16.mxu0 0
      %4145 = vmatpush1.bf16.msra.mxu0 %v3950
      %4146 = vmatprep.subr.bf16.mxu0 0
      %4147 = vmatpush1.bf16.msra.mxu0 %v3951
      %4148 = vmatprep.subr.bf16.mxu0 0
      %4149 = vmatpush1.bf16.msra.mxu0 %v3952
      %4150 = vmatprep.subr.bf16.mxu0 0
      %4151 = vmatpush1.bf16.msra.mxu0 %v3953
      %4152 = vmatprep.subr.bf16.mxu0 0
      %4153 = vmatpush1.bf16.msra.mxu0 %v3954
      %4154 = vmatprep.subr.bf16.mxu0 0
      %4155 = vmatpush1.bf16.msra.mxu0 %v3955
      %4156 = vmatprep.subr.bf16.mxu0 0
      %4157 = vmatpush1.bf16.msra.mxu0 %v3956
      %4158 = vmatprep.subr.bf16.mxu0 0
      %4159 = vmatpush1.bf16.msra.mxu0 0
      %4160 = vmatprep.subr.bf16.mxu0 0
      %4161 = vmatpush1.bf16.msra.mxu0 0
      %4162 = vmatprep.subr.bf16.mxu0 0
      %4163 = vmatpush1.bf16.msra.mxu0 0
      %4164 = vmatprep.subr.bf16.mxu0 0
      %4165 = vmatpush1.bf16.msra.mxu0 0
      %4166 = vmatprep.subr.bf16.mxu0 0
      %4167 = vmatpush1.bf16.msra.mxu0 0
      %4168 = vmatprep.subr.bf16.mxu0 0
      %4169 = vmatpush1.bf16.msra.mxu0 0
      %4170 = vmatprep.subr.bf16.mxu0 0
      %4171 = vmatpush1.bf16.msra.mxu0 0
      %4172 = vmatprep.subr.bf16.mxu0 0
      %4173 = vmatpush1.bf16.msra.mxu0 0
      %4174 = vmatprep.mubr.bf16.mxu0 0
      %4175 = vmatmul.mubr.bf16.gmra.mrb[0].mxu0 %v2978
      %v4176 = vpop.f32.mrb[0].mxu0
      %v4177 = vadd.f32 %v4016, %v4176
      %v4178 = vpop.f32.mrb[0].mxu0
      %v4179 = vpop.f32.mrb[0].mxu0
      %v4180 = vadd.f32 %v4019, %v4179
      %v4181 = vpop.f32.mrb[0].mxu0
      %4182 = vmatprep.mubr.bf16.mxu0 0
      %4183 = vmatmul.mubr.bf16.gmra.mrb[0].mxu0 %v2980
      %v4184 = vpop.f32.mrb[0].mxu0
      %v4185 = vadd.f32 %v4024, %v4184
      %v4186 = vpop.f32.mrb[0].mxu0
      %v4187 = vpop.f32.mrb[0].mxu0
      %v4188 = vadd.f32 %v4027, %v4187
      %v4189 = vpop.f32.mrb[0].mxu0
      %4190 = vmatprep.mubr.bf16.mxu0 0
      %4191 = vmatmul.mubr.bf16.gmra.mrb[0].mxu0 %v2982
      %v4192 = vpop.f32.mrb[0].mxu0
      %v4193 = vadd.f32 %v4032, %v4192
      %v4194 = vpop.f32.mrb[0].mxu0
      %v4195 = vpop.f32.mrb[0].mxu0
      %v4196 = vadd.f32 %v4035, %v4195
      %v4197 = vpop.f32.mrb[0].mxu0
      %4198 = vmatprep.mubr.bf16.mxu0 0
      %4199 = vmatmul.mubr.bf16.gmra.mrb[0].mxu0 %v2984
      %v4200 = vpop.f32.mrb[0].mxu0
      %v4201 = vadd.f32 %v4040, %v4200
      %v4202 = vpop.f32.mrb[0].mxu0
      %v4203 = vpop.f32.mrb[0].mxu0
      %v4204 = vadd.f32 %v4043, %v4203
      %v4205 = vpop.f32.mrb[0].mxu0
      %4206 = vmatprep.mubr.bf16.mxu0 0
      %4207 = vmatmul.mubr.bf16.gmra.mrb[0].mxu0 %v2986
      %v4208 = vpop.f32.mrb[0].mxu0
      %v4209 = vadd.f32 %v4048, %v4208
      %v4210 = vpop.f32.mrb[0].mxu0
      %v4211 = vpop.f32.mrb[0].mxu0
      %v4212 = vadd.f32 %v4051, %v4211
      %v4213 = vpop.f32.mrb[0].mxu0
      %4214 = vmatprep.mubr.bf16.mxu0 0
      %4215 = vmatmul.mubr.bf16.gmra.mrb[0].mxu0 %v2988
      %v4216 = vpop.f32.mrb[0].mxu0
      %v4217 = vadd.f32 %v4056, %v4216
      %v4218 = vpop.f32.mrb[0].mxu0
      %v4219 = vpop.f32.mrb[0].mxu0
      %v4220 = vadd.f32 %v4059, %v4219
      %v4221 = vpop.f32.mrb[0].mxu0
      %4222 = vmatprep.mubr.bf16.mxu0 0
      %4223 = vmatmul.mubr.bf16.gmra.mrb[0].mxu0 %v2990
      %v4224 = vpop.f32.mrb[0].mxu0
      %v4225 = vadd.f32 %v4064, %v4224
      %v4226 = vpop.f32.mrb[0].mxu0
      %v4227 = vpop.f32.mrb[0].mxu0
      %v4228 = vadd.f32 %v4067, %v4227
      %v4229 = vpop.f32.mrb[0].mxu0
      %4230 = vmatprep.mubr.bf16.mxu0 0
      %4231 = vmatmul.mubr.bf16.gmra.mrb[0].mxu0 %v2992
      %v4232 = vpop.f32.mrb[0].mxu0
      %v4233 = vadd.f32 %v4072, %v4232
      %v4234 = vpop.f32.mrb[0].mxu0
      %v4235 = vpop.f32.mrb[0].mxu0
      %v4236 = vadd.f32 %v4075, %v4235
      %v4237 = vpop.f32.mrb[0].mxu0
      %4238 = vmatprep.mubr.bf16.mxu0 0
      %4239 = vmatmul.mubr.bf16.gmra.mrb[0].mxu0 %v2994
      %v4240 = vpop.f32.mrb[0].mxu0
      %v4241 = vadd.f32 %v4080, %v4240
      %v4242 = vpop.f32.mrb[0].mxu0
      %v4243 = vpop.f32.mrb[0].mxu0
      %v4244 = vadd.f32 %v4083, %v4243
      %v4245 = vpop.f32.mrb[0].mxu0
      %4246 = vmatprep.mubr.bf16.mxu0 0
      %4247 = vmatmul.mubr.bf16.gmra.mrb[0].mxu0 %v2996
      %v4248 = vpop.f32.mrb[0].mxu0
      %v4249 = vadd.f32 %v4088, %v4248
      %v4250 = vpop.f32.mrb[0].mxu0
      %v4251 = vpop.f32.mrb[0].mxu0
      %v4252 = vadd.f32 %v4091, %v4251
      %v4253 = vpop.f32.mrb[0].mxu0
      %4254 = vmatprep.mubr.bf16.mxu0 0
      %4255 = vmatmul.mubr.bf16.gmra.mrb[0].mxu0 %v2998
      %v4256 = vpop.f32.mrb[0].mxu0
      %v4257 = vadd.f32 %v4096, %v4256
      %v4258 = vpop.f32.mrb[0].mxu0
      %v4259 = vpop.f32.mrb[0].mxu0
      %v4260 = vadd.f32 %v4099, %v4259
      %v4261 = vpop.f32.mrb[0].mxu0
      %4262 = vmatprep.mubr.bf16.mxu0 0
      %4263 = vmatmul.mubr.bf16.gmra.mrb[0].mxu0 %v3000
      %v4264 = vpop.f32.mrb[0].mxu0
      %v4265 = vadd.f32 %v4104, %v4264
      %v4266 = vpop.f32.mrb[0].mxu0
      %v4267 = vpop.f32.mrb[0].mxu0
      %v4268 = vadd.f32 %v4107, %v4267
      %v4269 = vpop.f32.mrb[0].mxu0
      %4270 = vmatprep.mubr.bf16.mxu0 0
      %4271 = vmatmul.mubr.bf16.gmra.mrb[0].mxu0 %v3002
      %v4272 = vpop.f32.mrb[0].mxu0
      %v4273 = vadd.f32 %v4112, %v4272
      %v4274 = vpop.f32.mrb[0].mxu0
      %v4275 = vpop.f32.mrb[0].mxu0
      %v4276 = vadd.f32 %v4115, %v4275
      %v4277 = vpop.f32.mrb[0].mxu0
      %4278 = vmatprep.mubr.bf16.mxu0 0
      %4279 = vmatmul.mubr.bf16.gmra.mrb[0].mxu0 %v3004
      %v4280 = vpop.f32.mrb[0].mxu0
      %v4281 = vadd.f32 %v4120, %v4280
      %v4282 = vpop.f32.mrb[0].mxu0
      %v4283 = vpop.f32.mrb[0].mxu0
      %v4284 = vadd.f32 %v4123, %v4283
      %v4285 = vpop.f32.mrb[0].mxu0
      %4286 = vmatprep.mubr.bf16.mxu0 0
      %4287 = vmatmul.mubr.bf16.gmra.mrb[0].mxu0 %v3028
      %v4288 = vpop.f32.mrb[0].mxu0
      %v4289 = vadd.f32 %v4128, %v4288
      %v4290 = vpop.f32.mrb[0].mxu0
      %v4291 = vpop.f32.mrb[0].mxu0
      %v4292 = vadd.f32 %v4131, %v4291
      %v4293 = vpop.f32.mrb[0].mxu0
      %4294 = vmatprep.mubr.bf16.mxu0 0
      %4295 = vmatmul.mubr.bf16.gmra.mrb[0].mxu0 %v3037
      %v4296 = vpop.f32.mrb[0].mxu0
      %v4297 = vadd.f32 %v4136, %v4296
      %v4298 = vpop.f32.mrb[0].mxu0
      %v4299 = vpop.f32.mrb[0].mxu0
      %v4300 = vadd.f32 %v4139, %v4299
      %v4301 = vpop.f32.mrb[0].mxu0
      %4302 = vdwg.mxu0
      %v4303 = vrot.slane %v2974, 1
      %v4304 = vrot.slane %v2975, 1
      %v4305 = vsel %vm1706, %v4303, %v4304
      %v4306 = vrot.slane %v2976, 1
      %v4307 = vrot.slane %v2977, 1
      %v4308 = vsel %vm1706, %v4306, %v4307
      %v4309 = vrot.slane %v2978, 1
      %v4310 = vrot.slane %v2979, 1
      %v4311 = vsel %vm1706, %v4309, %v4310
      %v4312 = vrot.slane %v2980, 1
      %v4313 = vrot.slane %v2981, 1
      %v4314 = vsel %vm1706, %v4312, %v4313
      %v4315 = vrot.slane %v2982, 1
      %v4316 = vrot.slane %v2983, 1
      %v4317 = vsel %vm1706, %v4315, %v4316
      %v4318 = vrot.slane %v2984, 1
      %v4319 = vrot.slane %v2985, 1
      %v4320 = vsel %vm1706, %v4318, %v4319
      %v4321 = vrot.slane %v2986, 1
      %v4322 = vrot.slane %v2987, 1
      %v4323 = vsel %vm1706, %v4321, %v4322
      %v4324 = vrot.slane %v2988, 1
      %v4325 = vrot.slane %v2989, 1
      %v4326 = vsel %vm1706, %v4324, %v4325
      %v4327 = vrot.slane %v2990, 1
      %v4328 = vrot.slane %v2991, 1
      %v4329 = vsel %vm1706, %v4327, %v4328
      %v4330 = vrot.slane %v2992, 1
      %v4331 = vrot.slane %v2993, 1
      %v4332 = vsel %vm1706, %v4330, %v4331
      %v4333 = vrot.slane %v2994, 1
      %v4334 = vrot.slane %v2995, 1
      %v4335 = vsel %vm1706, %v4333, %v4334
      %v4336 = vrot.slane %v2996, 1
      %v4337 = vrot.slane %v2997, 1
      %v4338 = vsel %vm1706, %v4336, %v4337
      %v4339 = vrot.slane %v2998, 1
      %v4340 = vrot.slane %v2999, 1
      %v4341 = vsel %vm1706, %v4339, %v4340
      %v4342 = vrot.slane %v3000, 1
      %v4343 = vrot.slane %v3001, 1
      %v4344 = vsel %vm1706, %v4342, %v4343
      %v4345 = vrot.slane %v3002, 1
      %v4346 = vrot.slane %v3003, 1
      %v4347 = vsel %vm1706, %v4345, %v4346
      %v4348 = vrot.slane %v3004, 1
      %v4349 = vrot.slane %v3005, 1
      %v4350 = vsel %vm1706, %v4348, %v4349
      %v4351 = vrot.slane %v3028, 1
      %v4352 = vrot.slane %v3029, 1
      %v4353 = vsel %vm1706, %v4351, %v4352
      %v4354 = vrot.slane %v3037, 1
      %v4355 = vrot.slane %v3038, 1
      %v4356 = vsel %vm1706, %v4354, %v4355
      %s4375 = scalar_lea.vmem %s3, 384
      %v4376 = vld [vmem:[%s4375] sm:$0xf]
      %v4377 = vld [vmem:[%s4375 + $0x4] sm:$0xf]
      %v4378 = vld [vmem:[%s4375 + $0x8] sm:$0xf]
      %v4379 = vld [vmem:[%s4375 + $0xc] sm:$0xf]
      %v4380 = vld [vmem:[%s4375 + $0x10] sm:$0xf]
      %v4381 = vld [vmem:[%s4375 + $0x14] sm:$0xf]
      %v4382 = vld [vmem:[%s4375 + $0x18] sm:$0xf]
      %v4383 = vld [vmem:[%s4375 + $0x1c] sm:$0xf]
      %v4384 = vld [vmem:[%s4375 + $0x20] sm:$0xf]
      %v4385 = vld [vmem:[%s4375 + $0x24] sm:$0xf]
      %v4386 = vld [vmem:[%s4375 + $0x28] sm:$0xf]
      %v4387 = vld [vmem:[%s4375 + $0x2c] sm:$0xf]
      %v4388 = vld [vmem:[%s4375 + $0x30] sm:$0xf]
      %v4389 = vld [vmem:[%s4375 + $0x34] sm:$0xf]
      %v4390 = vld [vmem:[%s4375 + $0x38] sm:$0xf]
      %v4391 = vld [vmem:[%s4375 + $0x3c] sm:$0xf]
      %v4392 = vld [vmem:[%s4375 + $0x40] sm:$0xf]
      %v4393 = vld [vmem:[%s4375 + $0x44] sm:$0xf]
      %v4394 = vld [vmem:[%s4375 + $0x48] sm:$0xf]
      %v4395 = vld [vmem:[%s4375 + $0x4c] sm:$0xf]
      %v4396 = vld [vmem:[%s4375 + $0x50] sm:$0xf]
      %v4397 = vld [vmem:[%s4375 + $0x54] sm:$0xf]
      %v4398 = vld [vmem:[%s4375 + $0x58] sm:$0xf]
      %v4399 = vld [vmem:[%s4375 + $0x5c] sm:$0xf]
      %v4400 = vld [vmem:[%s4375 + $0x60] sm:$0xf]
      %v4401 = vld [vmem:[%s4375 + $0x64] sm:$0xf]
      %v4402 = vld [vmem:[%s4375 + $0x68] sm:$0xf]
      %v4403 = vld [vmem:[%s4375 + $0x6c] sm:$0xf]
      %v4404 = vld [vmem:[%s4375 + $0x70] sm:$0xf]
      %v4405 = vld [vmem:[%s4375 + $0x74] sm:$0xf]
      %v4406 = vld [vmem:[%s4375 + $0x78] sm:$0xf]
      %v4407 = vld [vmem:[%s4375 + $0x7c] sm:$0xf]
      %v4408 = vld [vmem:[%s4375 + $0x80] sm:$0xf]
      %v4409 = vld [vmem:[%s4375 + $0x84] sm:$0xf]
      %v4410 = vld [vmem:[%s4375 + $0x88] sm:$0xf]
      %v4411 = vld [vmem:[%s4375 + $0x8c] sm:$0xf]
      %v4412 = vld [vmem:[%s4375 + $0x90] sm:$0xf]
      %v4413 = vld [vmem:[%s4375 + $0x94] sm:$0xf]
      %v4414 = vld [vmem:[%s4375 + $0x98] sm:$0xf]
      %v4415 = vld [vmem:[%s4375 + $0x9c] sm:$0xf]
      %v4416 = vld [vmem:[%s4375 + $0xa0] sm:$0xf]
      %v4417 = vld [vmem:[%s4375 + $0xa4] sm:$0xf]
      %v4418 = vld [vmem:[%s4375 + $0xa8] sm:$0xf]
      %v4419 = vld [vmem:[%s4375 + $0xac] sm:$0xf]
      %v4420 = vld [vmem:[%s4375 + $0xb0] sm:$0xf]
      %v4421 = vld [vmem:[%s4375 + $0xb4] sm:$0xf]
      %v4422 = vld [vmem:[%s4375 + $0xb8] sm:$0xf]
      %v4423 = vld [vmem:[%s4375 + $0xbc] sm:$0xf]
      %v4472 = vunpack.c.l.b16 %v4376
      %v4473 = vunpack.c.l.b16 %v4377
      %v4474 = vunpack.c.l.b16 %v4378
      %v4475 = vunpack.c.l.b16 %v4379
      %v4476 = vunpack.c.l.b16 %v4380
      %v4477 = vunpack.c.l.b16 %v4381
      %v4478 = vunpack.c.l.b16 %v4382
      %v4479 = vunpack.c.l.b16 %v4383
      %v4480 = vunpack.c.l.b16 %v4384
      %v4481 = vunpack.c.l.b16 %v4385
      %v4482 = vunpack.c.l.b16 %v4386
      %v4483 = vunpack.c.l.b16 %v4387
      %v4484 = vunpack.c.l.b16 %v4388
      %v4485 = vunpack.c.l.b16 %v4389
      %v4486 = vunpack.c.l.b16 %v4390
      %v4487 = vunpack.c.l.b16 %v4391
      %v4488 = vunpack.c.l.b16 %v4392
      %v4489 = vunpack.c.l.b16 %v4393
      %v4490 = vunpack.c.l.b16 %v4394
      %v4491 = vunpack.c.l.b16 %v4395
      %v4492 = vunpack.c.l.b16 %v4396
      %v4493 = vunpack.c.l.b16 %v4397
      %v4494 = vunpack.c.l.b16 %v4398
      %v4495 = vunpack.c.l.b16 %v4399
      %v4496 = vunpack.c.l.b16 %v4400
      %v4497 = vunpack.c.l.b16 %v4401
      %v4498 = vunpack.c.l.b16 %v4402
      %v4499 = vunpack.c.l.b16 %v4403
      %v4500 = vunpack.c.l.b16 %v4404
      %v4501 = vunpack.c.l.b16 %v4405
      %v4502 = vunpack.c.l.b16 %v4406
      %v4503 = vunpack.c.l.b16 %v4407
      %v4504 = vunpack.c.l.b16 %v4408
      %v4505 = vunpack.c.l.b16 %v4409
      %v4506 = vunpack.c.l.b16 %v4410
      %v4507 = vunpack.c.l.b16 %v4411
      %v4508 = vunpack.c.l.b16 %v4412
      %v4509 = vunpack.c.l.b16 %v4413
      %v4510 = vunpack.c.l.b16 %v4414
      %v4511 = vunpack.c.l.b16 %v4415
      %v4512 = vunpack.c.l.b16 %v4416
      %v4513 = vunpack.c.l.b16 %v4417
      %v4514 = vunpack.c.l.b16 %v4418
      %v4515 = vunpack.c.l.b16 %v4419
      %v4516 = vunpack.c.l.b16 %v4420
      %v4517 = vunpack.c.l.b16 %v4421
      %v4518 = vunpack.c.l.b16 %v4422
      %v4519 = vunpack.c.l.b16 %v4423
      %v4520 = vpack.c.b16 %v4473, %v4472
      %v4521 = vpack.c.b16 %v4475, %v4474
      %v4522 = vpack.c.b16 %v4477, %v4476
      %v4523 = vpack.c.b16 %v4479, %v4478
      %v4524 = vpack.c.b16 %v4481, %v4480
      %v4525 = vpack.c.b16 %v4483, %v4482
      %v4526 = vpack.c.b16 %v4485, %v4484
      %v4527 = vpack.c.b16 %v4487, %v4486
      %v4528 = vpack.c.b16 %v4489, %v4488
      %v4529 = vpack.c.b16 %v4491, %v4490
      %v4530 = vpack.c.b16 %v4493, %v4492
      %v4531 = vpack.c.b16 %v4495, %v4494
      %v4532 = vpack.c.b16 %v4497, %v4496
      %v4533 = vpack.c.b16 %v4499, %v4498
      %v4534 = vpack.c.b16 %v4501, %v4500
      %v4535 = vpack.c.b16 %v4503, %v4502
      %v4536 = vpack.c.b16 %v4505, %v4504
      %v4537 = vpack.c.b16 %v4507, %v4506
      %v4538 = vpack.c.b16 %v4509, %v4508
      %v4539 = vpack.c.b16 %v4511, %v4510
      %v4540 = vpack.c.b16 %v4513, %v4512
      %v4541 = vpack.c.b16 %v4515, %v4514
      %v4542 = vpack.c.b16 %v4517, %v4516
      %v4543 = vpack.c.b16 %v4519, %v4518
      %4568 = vmatprep.subr.bf16.mxu0 0
      %4569 = vmatpush1.bf16.msra.mxu0 %v4520
      %4570 = vmatprep.subr.bf16.mxu0 0
      %4571 = vmatpush1.bf16.msra.mxu0 %v4521
      %4572 = vmatprep.subr.bf16.mxu0 0
      %4573 = vmatpush1.bf16.msra.mxu0 %v4522
      %4574 = vmatprep.subr.bf16.mxu0 0
      %4575 = vmatpush1.bf16.msra.mxu0 %v4523
      %4576 = vmatprep.subr.bf16.mxu0 0
      %4577 = vmatpush1.bf16.msra.mxu0 %v4524
      %4578 = vmatprep.subr.bf16.mxu0 0
      %4579 = vmatpush1.bf16.msra.mxu0 %v4525
      %4580 = vmatprep.subr.bf16.mxu0 0
      %4581 = vmatpush1.bf16.msra.mxu0 %v4526
      %4582 = vmatprep.subr.bf16.mxu0 0
      %4583 = vmatpush1.bf16.msra.mxu0 %v4527
      %4584 = vmatprep.subr.bf16.mxu0 0
      %4585 = vmatpush1.bf16.msra.mxu0 %v4528
      %4586 = vmatprep.subr.bf16.mxu0 0
      %4587 = vmatpush1.bf16.msra.mxu0 %v4529
      %4588 = vmatprep.subr.bf16.mxu0 0
      %4589 = vmatpush1.bf16.msra.mxu0 %v4530
      %4590 = vmatprep.subr.bf16.mxu0 0
      %4591 = vmatpush1.bf16.msra.mxu0 %v4531
      %4592 = vmatprep.subr.bf16.mxu0 0
      %4593 = vmatpush1.bf16.msra.mxu0 %v4532
      %4594 = vmatprep.subr.bf16.mxu0 0
      %4595 = vmatpush1.bf16.msra.mxu0 %v4533
      %4596 = vmatprep.subr.bf16.mxu0 0
      %4597 = vmatpush1.bf16.msra.mxu0 %v4534
      %4598 = vmatprep.subr.bf16.mxu0 0
      %4599 = vmatpush1.bf16.msra.mxu0 %v4535
      %4600 = vmatprep.mubr.bf16.mxu0 %v4308
      %4601 = vmatmul.mubr.bf16.gmra.mrb[0].mxu0 %v4305
      %v4602 = vpop.f32.mrb[0].mxu0
      %v4603 = vadd.f32 0.0, %v4602
      %v4604 = vpop.f32.mrb[0].mxu0
      %v4605 = vpop.f32.mrb[0].mxu0
      %v4606 = vadd.f32 0.0, %v4605
      %v4607 = vpop.f32.mrb[0].mxu0
      %4608 = vmatprep.mubr.bf16.mxu0 %v4311
      %4609 = vmatmul.mubr.bf16.gmra.mrb[0].mxu0 %v4308
      %v4610 = vpop.f32.mrb[0].mxu0
      %v4611 = vadd.f32 0.0, %v4610
      %v4612 = vpop.f32.mrb[0].mxu0
      %v4613 = vpop.f32.mrb[0].mxu0
      %v4614 = vadd.f32 0.0, %v4613
      %v4615 = vpop.f32.mrb[0].mxu0
      %4616 = vmatprep.mubr.bf16.mxu0 %v4314
      %4617 = vmatmul.mubr.bf16.gmra.mrb[0].mxu0 %v4311
      %v4618 = vpop.f32.mrb[0].mxu0
      %v4619 = vadd.f32 0.0, %v4618
      %v4620 = vpop.f32.mrb[0].mxu0
      %v4621 = vpop.f32.mrb[0].mxu0
      %v4622 = vadd.f32 0.0, %v4621
      %v4623 = vpop.f32.mrb[0].mxu0
      %4624 = vmatprep.mubr.bf16.mxu0 %v4317
      %4625 = vmatmul.mubr.bf16.gmra.mrb[0].mxu0 %v4314
      %v4626 = vpop.f32.mrb[0].mxu0
      %v4627 = vadd.f32 0.0, %v4626
      %v4628 = vpop.f32.mrb[0].mxu0
      %v4629 = vpop.f32.mrb[0].mxu0
      %v4630 = vadd.f32 0.0, %v4629
      %v4631 = vpop.f32.mrb[0].mxu0
      %4632 = vmatprep.mubr.bf16.mxu0 %v4320
      %4633 = vmatmul.mubr.bf16.gmra.mrb[0].mxu0 %v4317
      %v4634 = vpop.f32.mrb[0].mxu0
      %v4635 = vadd.f32 0.0, %v4634
      %v4636 = vpop.f32.mrb[0].mxu0
      %v4637 = vpop.f32.mrb[0].mxu0
      %v4638 = vadd.f32 0.0, %v4637
      %v4639 = vpop.f32.mrb[0].mxu0
      %4640 = vmatprep.mubr.bf16.mxu0 %v4323
      %4641 = vmatmul.mubr.bf16.gmra.mrb[0].mxu0 %v4320
      %v4642 = vpop.f32.mrb[0].mxu0
      %v4643 = vadd.f32 0.0, %v4642
      %v4644 = vpop.f32.mrb[0].mxu0
      %v4645 = vpop.f32.mrb[0].mxu0
      %v4646 = vadd.f32 0.0, %v4645
      %v4647 = vpop.f32.mrb[0].mxu0
      %4648 = vmatprep.mubr.bf16.mxu0 %v4326
      %4649 = vmatmul.mubr.bf16.gmra.mrb[0].mxu0 %v4323
      %v4650 = vpop.f32.mrb[0].mxu0
      %v4651 = vadd.f32 0.0, %v4650
      %v4652 = vpop.f32.mrb[0].mxu0
      %v4653 = vpop.f32.mrb[0].mxu0
      %v4654 = vadd.f32 0.0, %v4653
      %v4655 = vpop.f32.mrb[0].mxu0
      %4656 = vmatprep.mubr.bf16.mxu0 %v4329
      %4657 = vmatmul.mubr.bf16.gmra.mrb[0].mxu0 %v4326
      %v4658 = vpop.f32.mrb[0].mxu0
      %v4659 = vadd.f32 0.0, %v4658
      %v4660 = vpop.f32.mrb[0].mxu0
      %v4661 = vpop.f32.mrb[0].mxu0
      %v4662 = vadd.f32 0.0, %v4661
      %v4663 = vpop.f32.mrb[0].mxu0
      %4664 = vmatprep.mubr.bf16.mxu0 %v4332
      %4665 = vmatmul.mubr.bf16.gmra.mrb[0].mxu0 %v4329
      %v4666 = vpop.f32.mrb[0].mxu0
      %v4667 = vadd.f32 0.0, %v4666
      %v4668 = vpop.f32.mrb[0].mxu0
      %v4669 = vpop.f32.mrb[0].mxu0
      %v4670 = vadd.f32 0.0, %v4669
      %v4671 = vpop.f32.mrb[0].mxu0
      %4672 = vmatprep.mubr.bf16.mxu0 %v4335
      %4673 = vmatmul.mubr.bf16.gmra.mrb[0].mxu0 %v4332
      %v4674 = vpop.f32.mrb[0].mxu0
      %v4675 = vadd.f32 0.0, %v4674
      %v4676 = vpop.f32.mrb[0].mxu0
      %v4677 = vpop.f32.mrb[0].mxu0
      %v4678 = vadd.f32 0.0, %v4677
      %v4679 = vpop.f32.mrb[0].mxu0
      %4680 = vmatprep.mubr.bf16.mxu0 %v4338
      %4681 = vmatmul.mubr.bf16.gmra.mrb[0].mxu0 %v4335
      %v4682 = vpop.f32.mrb[0].mxu0
      %v4683 = vadd.f32 0.0, %v4682
      %v4684 = vpop.f32.mrb[0].mxu0
      %v4685 = vpop.f32.mrb[0].mxu0
      %v4686 = vadd.f32 0.0, %v4685
      %v4687 = vpop.f32.mrb[0].mxu0
      %4688 = vmatprep.mubr.bf16.mxu0 %v4341
      %4689 = vmatmul.mubr.bf16.gmra.mrb[0].mxu0 %v4338
      %v4690 = vpop.f32.mrb[0].mxu0
      %v4691 = vadd.f32 0.0, %v4690
      %v4692 = vpop.f32.mrb[0].mxu0
      %v4693 = vpop.f32.mrb[0].mxu0
      %v4694 = vadd.f32 0.0, %v4693
      %v4695 = vpop.f32.mrb[0].mxu0
      %4696 = vmatprep.mubr.bf16.mxu0 %v4344
      %4697 = vmatmul.mubr.bf16.gmra.mrb[0].mxu0 %v4341
      %v4698 = vpop.f32.mrb[0].mxu0
      %v4699 = vadd.f32 0.0, %v4698
      %v4700 = vpop.f32.mrb[0].mxu0
      %v4701 = vpop.f32.mrb[0].mxu0
      %v4702 = vadd.f32 0.0, %v4701
      %v4703 = vpop.f32.mrb[0].mxu0
      %4704 = vmatprep.mubr.bf16.mxu0 %v4347
      %4705 = vmatmul.mubr.bf16.gmra.mrb[0].mxu0 %v4344
      %v4706 = vpop.f32.mrb[0].mxu0
      %v4707 = vadd.f32 0.0, %v4706
      %v4708 = vpop.f32.mrb[0].mxu0
      %v4709 = vpop.f32.mrb[0].mxu0
      %v4710 = vadd.f32 0.0, %v4709
      %v4711 = vpop.f32.mrb[0].mxu0
      %4712 = vmatprep.mubr.bf16.mxu0 %v4350
      %4713 = vmatmul.mubr.bf16.gmra.mrb[0].mxu0 %v4347
      %v4714 = vpop.f32.mrb[0].mxu0
      %v4715 = vadd.f32 0.0, %v4714
      %v4716 = vpop.f32.mrb[0].mxu0
      %v4717 = vpop.f32.mrb[0].mxu0
      %v4718 = vadd.f32 0.0, %v4717
      %v4719 = vpop.f32.mrb[0].mxu0
      %4720 = vmatprep.mubr.bf16.mxu0 %v4353
      %4721 = vmatmul.mubr.bf16.gmra.mrb[0].mxu0 %v4350
      %v4722 = vpop.f32.mrb[0].mxu0
      %v4723 = vadd.f32 0.0, %v4722
      %v4724 = vpop.f32.mrb[0].mxu0
      %v4725 = vpop.f32.mrb[0].mxu0
      %v4726 = vadd.f32 0.0, %v4725
      %v4727 = vpop.f32.mrb[0].mxu0
      %4728 = vdwg.mxu0
      %4729 = vmatprep.subr.bf16.mxu0 0
      %4730 = vmatpush1.bf16.msra.mxu0 %v4536
      %4731 = vmatprep.subr.bf16.mxu0 0
      %4732 = vmatpush1.bf16.msra.mxu0 %v4537
      %4733 = vmatprep.subr.bf16.mxu0 0
      %4734 = vmatpush1.bf16.msra.mxu0 %v4538
      %4735 = vmatprep.subr.bf16.mxu0 0
      %4736 = vmatpush1.bf16.msra.mxu0 %v4539
      %4737 = vmatprep.subr.bf16.mxu0 0
      %4738 = vmatpush1.bf16.msra.mxu0 %v4540
      %4739 = vmatprep.subr.bf16.mxu0 0
      %4740 = vmatpush1.bf16.msra.mxu0 %v4541
      %4741 = vmatprep.subr.bf16.mxu0 0
      %4742 = vmatpush1.bf16.msra.mxu0 %v4542
      %4743 = vmatprep.subr.bf16.mxu0 0
      %4744 = vmatpush1.bf16.msra.mxu0 %v4543
      %4745 = vmatprep.subr.bf16.mxu0 0
      %4746 = vmatpush1.bf16.msra.mxu0 0
      %4747 = vmatprep.subr.bf16.mxu0 0
      %4748 = vmatpush1.bf16.msra.mxu0 0
      %4749 = vmatprep.subr.bf16.mxu0 0
      %4750 = vmatpush1.bf16.msra.mxu0 0
      %4751 = vmatprep.subr.bf16.mxu0 0
      %4752 = vmatpush1.bf16.msra.mxu0 0
      %4753 = vmatprep.subr.bf16.mxu0 0
      %4754 = vmatpush1.bf16.msra.mxu0 0
      %4755 = vmatprep.subr.bf16.mxu0 0
      %4756 = vmatpush1.bf16.msra.mxu0 0
      %4757 = vmatprep.subr.bf16.mxu0 0
      %4758 = vmatpush1.bf16.msra.mxu0 0
      %4759 = vmatprep.subr.bf16.mxu0 0
      %4760 = vmatpush1.bf16.msra.mxu0 0
      %4761 = vmatprep.mubr.bf16.mxu0 0
      %4762 = vmatmul.mubr.bf16.gmra.mrb[0].mxu0 %v4311
      %v4763 = vpop.f32.mrb[0].mxu0
      %v4764 = vadd.f32 %v4603, %v4763
      %v4765 = vpop.f32.mrb[0].mxu0
      %v4766 = vpop.f32.mrb[0].mxu0
      %v4767 = vadd.f32 %v4606, %v4766
      %v4768 = vpop.f32.mrb[0].mxu0
      %4769 = vmatprep.mubr.bf16.mxu0 0
      %4770 = vmatmul.mubr.bf16.gmra.mrb[0].mxu0 %v4314
      %v4771 = vpop.f32.mrb[0].mxu0
      %v4772 = vadd.f32 %v4611, %v4771
      %v4773 = vpop.f32.mrb[0].mxu0
      %v4774 = vpop.f32.mrb[0].mxu0
      %v4775 = vadd.f32 %v4614, %v4774
      %v4776 = vpop.f32.mrb[0].mxu0
      %4777 = vmatprep.mubr.bf16.mxu0 0
      %4778 = vmatmul.mubr.bf16.gmra.mrb[0].mxu0 %v4317
      %v4779 = vpop.f32.mrb[0].mxu0
      %v4780 = vadd.f32 %v4619, %v4779
      %v4781 = vpop.f32.mrb[0].mxu0
      %v4782 = vpop.f32.mrb[0].mxu0
      %v4783 = vadd.f32 %v4622, %v4782
      %v4784 = vpop.f32.mrb[0].mxu0
      %4785 = vmatprep.mubr.bf16.mxu0 0
      %4786 = vmatmul.mubr.bf16.gmra.mrb[0].mxu0 %v4320
      %v4787 = vpop.f32.mrb[0].mxu0
      %v4788 = vadd.f32 %v4627, %v4787
      %v4789 = vpop.f32.mrb[0].mxu0
      %v4790 = vpop.f32.mrb[0].mxu0
      %v4791 = vadd.f32 %v4630, %v4790
      %v4792 = vpop.f32.mrb[0].mxu0
      %4793 = vmatprep.mubr.bf16.mxu0 0
      %4794 = vmatmul.mubr.bf16.gmra.mrb[0].mxu0 %v4323
      %v4795 = vpop.f32.mrb[0].mxu0
      %v4796 = vadd.f32 %v4635, %v4795
      %v4797 = vpop.f32.mrb[0].mxu0
      %v4798 = vpop.f32.mrb[0].mxu0
      %v4799 = vadd.f32 %v4638, %v4798
      %v4800 = vpop.f32.mrb[0].mxu0
      %4801 = vmatprep.mubr.bf16.mxu0 0
      %4802 = vmatmul.mubr.bf16.gmra.mrb[0].mxu0 %v4326
      %v4803 = vpop.f32.mrb[0].mxu0
      %v4804 = vadd.f32 %v4643, %v4803
      %v4805 = vpop.f32.mrb[0].mxu0
      %v4806 = vpop.f32.mrb[0].mxu0
      %v4807 = vadd.f32 %v4646, %v4806
      %v4808 = vpop.f32.mrb[0].mxu0
      %4809 = vmatprep.mubr.bf16.mxu0 0
      %4810 = vmatmul.mubr.bf16.gmra.mrb[0].mxu0 %v4329
      %v4811 = vpop.f32.mrb[0].mxu0
      %v4812 = vadd.f32 %v4651, %v4811
      %v4813 = vpop.f32.mrb[0].mxu0
      %v4814 = vpop.f32.mrb[0].mxu0
      %v4815 = vadd.f32 %v4654, %v4814
      %v4816 = vpop.f32.mrb[0].mxu0
      %4817 = vmatprep.mubr.bf16.mxu0 0
      %4818 = vmatmul.mubr.bf16.gmra.mrb[0].mxu0 %v4332
      %v4819 = vpop.f32.mrb[0].mxu0
      %v4820 = vadd.f32 %v4659, %v4819
      %v4821 = vpop.f32.mrb[0].mxu0
      %v4822 = vpop.f32.mrb[0].mxu0
      %v4823 = vadd.f32 %v4662, %v4822
      %v4824 = vpop.f32.mrb[0].mxu0
      %4825 = vmatprep.mubr.bf16.mxu0 0
      %4826 = vmatmul.mubr.bf16.gmra.mrb[0].mxu0 %v4335
      %v4827 = vpop.f32.mrb[0].mxu0
      %v4828 = vadd.f32 %v4667, %v4827
      %v4829 = vpop.f32.mrb[0].mxu0
      %v4830 = vpop.f32.mrb[0].mxu0
      %v4831 = vadd.f32 %v4670, %v4830
      %v4832 = vpop.f32.mrb[0].mxu0
      %4833 = vmatprep.mubr.bf16.mxu0 0
      %4834 = vmatmul.mubr.bf16.gmra.mrb[0].mxu0 %v4338
      %v4835 = vpop.f32.mrb[0].mxu0
      %v4836 = vadd.f32 %v4675, %v4835
      %v4837 = vpop.f32.mrb[0].mxu0
      %v4838 = vpop.f32.mrb[0].mxu0
      %v4839 = vadd.f32 %v4678, %v4838
      %v4840 = vpop.f32.mrb[0].mxu0
      %4841 = vmatprep.mubr.bf16.mxu0 0
      %4842 = vmatmul.mubr.bf16.gmra.mrb[0].mxu0 %v4341
      %v4843 = vpop.f32.mrb[0].mxu0
      %v4844 = vadd.f32 %v4683, %v4843
      %v4845 = vpop.f32.mrb[0].mxu0
      %v4846 = vpop.f32.mrb[0].mxu0
      %v4847 = vadd.f32 %v4686, %v4846
      %v4848 = vpop.f32.mrb[0].mxu0
      %4849 = vmatprep.mubr.bf16.mxu0 0
      %4850 = vmatmul.mubr.bf16.gmra.mrb[0].mxu0 %v4344
      %v4851 = vpop.f32.mrb[0].mxu0
      %v4852 = vadd.f32 %v4691, %v4851
      %v4853 = vpop.f32.mrb[0].mxu0
      %v4854 = vpop.f32.mrb[0].mxu0
      %v4855 = vadd.f32 %v4694, %v4854
      %v4856 = vpop.f32.mrb[0].mxu0
      %4857 = vmatprep.mubr.bf16.mxu0 0
      %4858 = vmatmul.mubr.bf16.gmra.mrb[0].mxu0 %v4347
      %v4859 = vpop.f32.mrb[0].mxu0
      %v4860 = vadd.f32 %v4699, %v4859
      %v4861 = vpop.f32.mrb[0].mxu0
      %v4862 = vpop.f32.mrb[0].mxu0
      %v4863 = vadd.f32 %v4702, %v4862
      %v4864 = vpop.f32.mrb[0].mxu0
      %4865 = vmatprep.mubr.bf16.mxu0 0
      %4866 = vmatmul.mubr.bf16.gmra.mrb[0].mxu0 %v4350
      %v4867 = vpop.f32.mrb[0].mxu0
      %v4868 = vadd.f32 %v4707, %v4867
      %v4869 = vpop.f32.mrb[0].mxu0
      %v4870 = vpop.f32.mrb[0].mxu0
      %v4871 = vadd.f32 %v4710, %v4870
      %v4872 = vpop.f32.mrb[0].mxu0
      %4873 = vmatprep.mubr.bf16.mxu0 0
      %4874 = vmatmul.mubr.bf16.gmra.mrb[0].mxu0 %v4353
      %v4875 = vpop.f32.mrb[0].mxu0
      %v4876 = vadd.f32 %v4715, %v4875
      %v4877 = vpop.f32.mrb[0].mxu0
      %v4878 = vpop.f32.mrb[0].mxu0
      %v4879 = vadd.f32 %v4718, %v4878
      %v4880 = vpop.f32.mrb[0].mxu0
      %4881 = vmatprep.mubr.bf16.mxu0 0
      %4882 = vmatmul.mubr.bf16.gmra.mrb[0].mxu0 %v4356
      %v4883 = vpop.f32.mrb[0].mxu0
      %v4884 = vadd.f32 %v4723, %v4883
      %v4885 = vpop.f32.mrb[0].mxu0
      %v4886 = vpop.f32.mrb[0].mxu0
      %v4887 = vadd.f32 %v4726, %v4886
      %v4888 = vpop.f32.mrb[0].mxu0
      %4889 = vdwg.mxu0
      %v4890 = vadd.f32 %v4177, %v4764
      %v4891 = vadd.f32 %v4180, %v4767
      %v4892 = vadd.f32 %v4185, %v4772
      %v4893 = vadd.f32 %v4188, %v4775
      %v4894 = vadd.f32 %v4193, %v4780
      %v4895 = vadd.f32 %v4196, %v4783
      %v4896 = vadd.f32 %v4201, %v4788
      %v4897 = vadd.f32 %v4204, %v4791
      %v4898 = vadd.f32 %v4209, %v4796
      %v4899 = vadd.f32 %v4212, %v4799
      %v4900 = vadd.f32 %v4217, %v4804
      %v4901 = vadd.f32 %v4220, %v4807
      %v4902 = vadd.f32 %v4225, %v4812
      %v4903 = vadd.f32 %v4228, %v4815
      %v4904 = vadd.f32 %v4233, %v4820
      %v4905 = vadd.f32 %v4236, %v4823
      %v4906 = vadd.f32 %v4241, %v4828
      %v4907 = vadd.f32 %v4244, %v4831
      %v4908 = vadd.f32 %v4249, %v4836
      %v4909 = vadd.f32 %v4252, %v4839
      %v4910 = vadd.f32 %v4257, %v4844
      %v4911 = vadd.f32 %v4260, %v4847
      %v4912 = vadd.f32 %v4265, %v4852
      %v4913 = vadd.f32 %v4268, %v4855
      %v4914 = vadd.f32 %v4273, %v4860
      %v4915 = vadd.f32 %v4276, %v4863
      %v4916 = vadd.f32 %v4281, %v4868
      %v4917 = vadd.f32 %v4284, %v4871
      %v4918 = vadd.f32 %v4289, %v4876
      %v4919 = vadd.f32 %v4292, %v4879
      %v4920 = vadd.f32 %v4297, %v4884
      %v4921 = vadd.f32 %v4300, %v4887
      %vm4922 = vsmask.f32 3328
      %vm4923 = vsmask.f32 7440
      %vm4924 = vmor %vm4922, %vm4923
      %v4926 = vshrl.u32 %v229, 16
      %v4928 = vrot.slane %v4926, 4
      %v4929 = vshll.u32 %v229, 16
      %v4931 = vrot.slane %v4929, 5
      %v4932 = vor.u32 %v4928, %v4931
      %v4933 = vrot.slane %v4932, 4
      %v4935 = vshll.u32 %v230, 16
      %v4937 = vrot.slane %v4935, 5
      %v4938 = vsel %vm4924, %v4933, %v4937
      %v4939 = vshrl.u32 %v230, 16
      %v4941 = vrot.slane %v4939, 4
      %v4942 = vor.u32 %v4941, %v4937
      %v4943 = vrot.slane %v4942, 4
      %v4945 = vshll.u32 %v231, 16
      %v4947 = vrot.slane %v4945, 5
      %v4948 = vsel %vm4924, %v4943, %v4947
      %v4950 = vshrl.u32 %v232, 16
      %v4952 = vrot.slane %v4950, 4
      %v4953 = vshll.u32 %v232, 16
      %v4955 = vrot.slane %v4953, 5
      %v4956 = vor.u32 %v4952, %v4955
      %v4957 = vrot.slane %v4956, 4
      %v4959 = vshll.u32 %v233, 16
      %v4961 = vrot.slane %v4959, 5
      %v4962 = vsel %vm4924, %v4957, %v4961
      %v4963 = vshrl.u32 %v233, 16
      %v4965 = vrot.slane %v4963, 4
      %v4966 = vor.u32 %v4965, %v4961
      %v4967 = vrot.slane %v4966, 4
      %v4969 = vshll.u32 %v234, 16
      %v4971 = vrot.slane %v4969, 5
      %v4972 = vsel %vm4924, %v4967, %v4971
      %v4974 = vshrl.u32 %v235, 16
      %v4976 = vrot.slane %v4974, 4
      %v4977 = vshll.u32 %v235, 16
      %v4979 = vrot.slane %v4977, 5
      %v4980 = vor.u32 %v4976, %v4979
      %v4981 = vrot.slane %v4980, 4
      %v4983 = vshll.u32 %v236, 16
      %v4985 = vrot.slane %v4983, 5
      %v4986 = vsel %vm4924, %v4981, %v4985
      %v4987 = vshrl.u32 %v236, 16
      %v4989 = vrot.slane %v4987, 4
      %v4990 = vor.u32 %v4989, %v4985
      %v4991 = vrot.slane %v4990, 4
      %v4993 = vshll.u32 %v237, 16
      %v4995 = vrot.slane %v4993, 5
      %v4996 = vsel %vm4924, %v4991, %v4995
      %v4998 = vshrl.u32 %v238, 16
      %v5000 = vrot.slane %v4998, 4
      %v5001 = vshll.u32 %v238, 16
      %v5003 = vrot.slane %v5001, 5
      %v5004 = vor.u32 %v5000, %v5003
      %v5005 = vrot.slane %v5004, 4
      %v5007 = vshll.u32 %v239, 16
      %v5009 = vrot.slane %v5007, 5
      %v5010 = vsel %vm4924, %v5005, %v5009
      %v5011 = vshrl.u32 %v239, 16
      %v5013 = vrot.slane %v5011, 4
      %v5014 = vor.u32 %v5013, %v5009
      %v5015 = vrot.slane %v5014, 4
      %v5017 = vshll.u32 %v240, 16
      %v5019 = vrot.slane %v5017, 5
      %v5020 = vsel %vm4924, %v5015, %v5019
      %v5022 = vshrl.u32 %v241, 16
      %v5024 = vrot.slane %v5022, 4
      %v5025 = vshll.u32 %v241, 16
      %v5027 = vrot.slane %v5025, 5
      %v5028 = vor.u32 %v5024, %v5027
      %v5029 = vrot.slane %v5028, 4
      %v5031 = vshll.u32 %v242, 16
      %v5033 = vrot.slane %v5031, 5
      %v5034 = vsel %vm4924, %v5029, %v5033
      %v5035 = vshrl.u32 %v242, 16
      %v5037 = vrot.slane %v5035, 4
      %v5038 = vor.u32 %v5037, %v5033
      %v5039 = vrot.slane %v5038, 4
      %v5041 = vshll.u32 %v243, 16
      %v5043 = vrot.slane %v5041, 5
      %v5044 = vsel %vm4924, %v5039, %v5043
      %v5046 = vshrl.u32 %v244, 16
      %v5048 = vrot.slane %v5046, 4
      %v5049 = vshll.u32 %v244, 16
      %v5051 = vrot.slane %v5049, 5
      %v5052 = vor.u32 %v5048, %v5051
      %v5053 = vrot.slane %v5052, 4
      %v5055 = vshll.u32 %v245, 16
      %v5057 = vrot.slane %v5055, 5
      %v5058 = vsel %vm4924, %v5053, %v5057
      %v5059 = vshrl.u32 %v245, 16
      %v5061 = vrot.slane %v5059, 4
      %v5062 = vor.u32 %v5061, %v5057
      %v5063 = vrot.slane %v5062, 4
      %v5065 = vshll.u32 %v246, 16
      %v5067 = vrot.slane %v5065, 5
      %v5068 = vsel %vm4924, %v5063, %v5067
      %v5070 = vshrl.u32 %v247, 16
      %v5072 = vrot.slane %v5070, 4
      %v5073 = vshll.u32 %v247, 16
      %v5075 = vrot.slane %v5073, 5
      %v5076 = vor.u32 %v5072, %v5075
      %v5077 = vrot.slane %v5076, 4
      %v5079 = vshll.u32 %v248, 16
      %v5081 = vrot.slane %v5079, 5
      %v5082 = vsel %vm4924, %v5077, %v5081
      %v5083 = vshrl.u32 %v248, 16
      %v5085 = vrot.slane %v5083, 4
      %v5086 = vor.u32 %v5085, %v5081
      %v5087 = vrot.slane %v5086, 4
      %v5089 = vshll.u32 %v249, 16
      %v5091 = vrot.slane %v5089, 5
      %v5092 = vsel %vm4924, %v5087, %v5091
      %v5094 = vshrl.u32 %v250, 16
      %v5096 = vrot.slane %v5094, 4
      %v5097 = vshll.u32 %v250, 16
      %v5099 = vrot.slane %v5097, 5
      %v5100 = vor.u32 %v5096, %v5099
      %v5101 = vrot.slane %v5100, 4
      %v5103 = vshll.u32 %v251, 16
      %v5105 = vrot.slane %v5103, 5
      %v5106 = vsel %vm4924, %v5101, %v5105
      %v5107 = vshrl.u32 %v251, 16
      %v5109 = vrot.slane %v5107, 4
      %v5110 = vor.u32 %v5109, %v5105
      %v5111 = vrot.slane %v5110, 4
      %v5113 = vshll.u32 %v252, 16
      %v5115 = vrot.slane %v5113, 5
      %v5116 = vsel %vm4924, %v5111, %v5115
      %v5118 = vshrl.u32 %v253, 16
      %v5120 = vrot.slane %v5118, 4
      %v5121 = vshll.u32 %v253, 16
      %v5123 = vrot.slane %v5121, 5
      %v5124 = vor.u32 %v5120, %v5123
      %v5125 = vrot.slane %v5124, 4
      %v5127 = vshll.u32 %v254, 16
      %v5129 = vrot.slane %v5127, 5
      %v5130 = vsel %vm4924, %v5125, %v5129
      %v5131 = vshrl.u32 %v254, 16
      %v5133 = vrot.slane %v5131, 4
      %v5134 = vor.u32 %v5133, %v5129
      %v5135 = vrot.slane %v5134, 4
      %v5137 = vshll.u32 %v255, 16
      %v5139 = vrot.slane %v5137, 5
      %v5140 = vsel %vm4924, %v5135, %v5139
      %v5142 = vshrl.u32 %v256, 16
      %v5144 = vrot.slane %v5142, 4
      %v5145 = vshll.u32 %v256, 16
      %v5147 = vrot.slane %v5145, 5
      %v5148 = vor.u32 %v5144, %v5147
      %v5149 = vrot.slane %v5148, 4
      %v5151 = vshll.u32 %v257, 16
      %v5153 = vrot.slane %v5151, 5
      %v5154 = vsel %vm4924, %v5149, %v5153
      %v5155 = vshrl.u32 %v257, 16
      %v5157 = vrot.slane %v5155, 4
      %v5158 = vor.u32 %v5157, %v5153
      %v5159 = vrot.slane %v5158, 4
      %v5161 = vshll.u32 %v258, 16
      %v5163 = vrot.slane %v5161, 5
      %v5164 = vsel %vm4924, %v5159, %v5163
      %v5166 = vshrl.u32 %v259, 16
      %v5168 = vrot.slane %v5166, 4
      %v5169 = vshll.u32 %v259, 16
      %v5171 = vrot.slane %v5169, 5
      %v5172 = vor.u32 %v5168, %v5171
      %v5173 = vrot.slane %v5172, 4
      %v5175 = vshll.u32 %v260, 16
      %v5177 = vrot.slane %v5175, 5
      %v5178 = vsel %vm4924, %v5173, %v5177
      %v5179 = vshrl.u32 %v260, 16
      %v5181 = vrot.slane %v5179, 4
      %v5182 = vor.u32 %v5181, %v5177
      %v5183 = vrot.slane %v5182, 4
      %v5185 = vshll.u32 %v261, 16
      %v5187 = vrot.slane %v5185, 5
      %v5188 = vsel %vm4924, %v5183, %v5187
      %v5190 = vshrl.u32 %v262, 16
      %v5192 = vrot.slane %v5190, 4
      %v5193 = vshll.u32 %v262, 16
      %v5195 = vrot.slane %v5193, 5
      %v5196 = vor.u32 %v5192, %v5195
      %v5197 = vrot.slane %v5196, 4
      %v5199 = vshll.u32 %v263, 16
      %v5201 = vrot.slane %v5199, 5
      %v5202 = vsel %vm4924, %v5197, %v5201
      %v5203 = vshrl.u32 %v263, 16
      %v5205 = vrot.slane %v5203, 4
      %v5206 = vor.u32 %v5205, %v5201
      %v5207 = vrot.slane %v5206, 4
      %v5209 = vshll.u32 %v264, 16
      %v5211 = vrot.slane %v5209, 5
      %v5212 = vsel %vm4924, %v5207, %v5211
      %v5214 = vshrl.u32 %v265, 16
      %v5216 = vrot.slane %v5214, 4
      %v5217 = vshll.u32 %v265, 16
      %v5219 = vrot.slane %v5217, 5
      %v5220 = vor.u32 %v5216, %v5219
      %v5221 = vrot.slane %v5220, 4
      %v5223 = vshll.u32 %v266, 16
      %v5225 = vrot.slane %v5223, 5
      %v5226 = vsel %vm4924, %v5221, %v5225
      %v5227 = vshrl.u32 %v266, 16
      %v5229 = vrot.slane %v5227, 4
      %v5230 = vor.u32 %v5229, %v5225
      %v5231 = vrot.slane %v5230, 4
      %v5233 = vshll.u32 %v267, 16
      %v5235 = vrot.slane %v5233, 5
      %v5236 = vsel %vm4924, %v5231, %v5235
      %v5238 = vshrl.u32 %v268, 16
      %v5240 = vrot.slane %v5238, 4
      %v5241 = vshll.u32 %v268, 16
      %v5243 = vrot.slane %v5241, 5
      %v5244 = vor.u32 %v5240, %v5243
      %v5245 = vrot.slane %v5244, 4
      %v5247 = vshll.u32 %v269, 16
      %v5249 = vrot.slane %v5247, 5
      %v5250 = vsel %vm4924, %v5245, %v5249
      %v5251 = vshrl.u32 %v269, 16
      %v5253 = vrot.slane %v5251, 4
      %v5254 = vor.u32 %v5253, %v5249
      %v5255 = vrot.slane %v5254, 4
      %v5257 = vshll.u32 %v270, 16
      %v5259 = vrot.slane %v5257, 5
      %v5260 = vsel %vm4924, %v5255, %v5259
      %v5262 = vshrl.u32 %v271, 16
      %v5264 = vrot.slane %v5262, 4
      %v5265 = vshll.u32 %v271, 16
      %v5267 = vrot.slane %v5265, 5
      %v5268 = vor.u32 %v5264, %v5267
      %v5269 = vrot.slane %v5268, 4
      %v5271 = vshll.u32 %v272, 16
      %v5273 = vrot.slane %v5271, 5
      %v5274 = vsel %vm4924, %v5269, %v5273
      %v5275 = vshrl.u32 %v272, 16
      %v5277 = vrot.slane %v5275, 4
      %v5278 = vor.u32 %v5277, %v5273
      %v5279 = vrot.slane %v5278, 4
      %v5281 = vshll.u32 %v273, 16
      %v5283 = vrot.slane %v5281, 5
      %v5284 = vsel %vm4924, %v5279, %v5283
      %v5286 = vshrl.u32 %v274, 16
      %v5288 = vrot.slane %v5286, 4
      %v5289 = vshll.u32 %v274, 16
      %v5291 = vrot.slane %v5289, 5
      %v5292 = vor.u32 %v5288, %v5291
      %v5293 = vrot.slane %v5292, 4
      %v5295 = vshll.u32 %v275, 16
      %v5297 = vrot.slane %v5295, 5
      %v5298 = vsel %vm4924, %v5293, %v5297
      %v5299 = vshrl.u32 %v275, 16
      %v5301 = vrot.slane %v5299, 4
      %v5302 = vor.u32 %v5301, %v5297
      %v5303 = vrot.slane %v5302, 4
      %v5305 = vshll.u32 %v276, 16
      %v5307 = vrot.slane %v5305, 5
      %v5308 = vsel %vm4924, %v5303, %v5307
      %v5341 = vunpack.c.l.bf16 %v4938
      %v5342 = vunpack.c.l.bf16 %v4948
      %v5343 = vunpack.c.l.bf16 %v4962
      %v5344 = vunpack.c.l.bf16 %v4972
      %v5345 = vunpack.c.l.bf16 %v4986
      %v5346 = vunpack.c.l.bf16 %v4996
      %v5347 = vunpack.c.l.bf16 %v5010
      %v5348 = vunpack.c.l.bf16 %v5020
      %v5349 = vunpack.c.l.bf16 %v5034
      %v5350 = vunpack.c.l.bf16 %v5044
      %v5351 = vunpack.c.l.bf16 %v5058
      %v5352 = vunpack.c.l.bf16 %v5068
      %v5353 = vunpack.c.l.bf16 %v5082
      %v5354 = vunpack.c.l.bf16 %v5092
      %v5355 = vunpack.c.l.bf16 %v5106
      %v5356 = vunpack.c.l.bf16 %v5116
      %v5357 = vunpack.c.l.bf16 %v5130
      %v5358 = vunpack.c.l.bf16 %v5140
      %v5359 = vunpack.c.l.bf16 %v5154
      %v5360 = vunpack.c.l.bf16 %v5164
      %v5361 = vunpack.c.l.bf16 %v5178
      %v5362 = vunpack.c.l.bf16 %v5188
      %v5363 = vunpack.c.l.bf16 %v5202
      %v5364 = vunpack.c.l.bf16 %v5212
      %v5365 = vunpack.c.l.bf16 %v5226
      %v5366 = vunpack.c.l.bf16 %v5236
      %v5367 = vunpack.c.l.bf16 %v5250
      %v5368 = vunpack.c.l.bf16 %v5260
      %v5369 = vunpack.c.l.bf16 %v5274
      %v5370 = vunpack.c.l.bf16 %v5284
      %v5371 = vunpack.c.l.bf16 %v5298
      %v5372 = vunpack.c.l.bf16 %v5308
      %v5373 = vld [vmem:[%s4] sm:$0x1]
      %v5375 = vlaneseq
      %v5376 = vshrl.u32 %v5375, 7
      %v5377 = vsub.s32 0, %v5376
      %v5378 = vrot.slane %v5373, %v5377
      %v5380 = vadd.f32 %v4890, %v5378
      %v5381 = vadd.f32 %v4891, %v5378
      %v5382 = vadd.f32 %v4892, %v5378
      %v5383 = vadd.f32 %v4893, %v5378
      %v5384 = vadd.f32 %v4894, %v5378
      %v5385 = vadd.f32 %v4895, %v5378
      %v5386 = vadd.f32 %v4896, %v5378
      %v5387 = vadd.f32 %v4897, %v5378
      %v5388 = vadd.f32 %v4898, %v5378
      %v5389 = vadd.f32 %v4899, %v5378
      %v5390 = vadd.f32 %v4900, %v5378
      %v5391 = vadd.f32 %v4901, %v5378
      %v5392 = vadd.f32 %v4902, %v5378
      %v5393 = vadd.f32 %v4903, %v5378
      %v5394 = vadd.f32 %v4904, %v5378
      %v5395 = vadd.f32 %v4905, %v5378
      %v5396 = vadd.f32 %v4906, %v5378
      %v5397 = vadd.f32 %v4907, %v5378
      %v5398 = vadd.f32 %v4908, %v5378
      %v5399 = vadd.f32 %v4909, %v5378
      %v5400 = vadd.f32 %v4910, %v5378
      %v5401 = vadd.f32 %v4911, %v5378
      %v5402 = vadd.f32 %v4912, %v5378
      %v5403 = vadd.f32 %v4913, %v5378
      %v5404 = vadd.f32 %v4914, %v5378
      %v5405 = vadd.f32 %v4915, %v5378
      %v5406 = vadd.f32 %v4916, %v5378
      %v5407 = vadd.f32 %v4917, %v5378
      %v5408 = vadd.f32 %v4918, %v5378
      %v5409 = vadd.f32 %v4919, %v5378
      %v5410 = vadd.f32 %v4920, %v5378
      %v5411 = vadd.f32 %v4921, %v5378
      %v5412 = vadd.f32 %v5380, %v5341
      %v5413 = vadd.f32 %v5381, %v5342
      %v5414 = vadd.f32 %v5382, %v5343
      %v5415 = vadd.f32 %v5383, %v5344
      %v5416 = vadd.f32 %v5384, %v5345
      %v5417 = vadd.f32 %v5385, %v5346
      %v5418 = vadd.f32 %v5386, %v5347
      %v5419 = vadd.f32 %v5387, %v5348
      %v5420 = vadd.f32 %v5388, %v5349
      %v5421 = vadd.f32 %v5389, %v5350
      %v5422 = vadd.f32 %v5390, %v5351
      %v5423 = vadd.f32 %v5391, %v5352
      %v5424 = vadd.f32 %v5392, %v5353
      %v5425 = vadd.f32 %v5393, %v5354
      %v5426 = vadd.f32 %v5394, %v5355
      %v5427 = vadd.f32 %v5395, %v5356
      %v5428 = vadd.f32 %v5396, %v5357
      %v5429 = vadd.f32 %v5397, %v5358
      %v5430 = vadd.f32 %v5398, %v5359
      %v5431 = vadd.f32 %v5399, %v5360
      %v5432 = vadd.f32 %v5400, %v5361
      %v5433 = vadd.f32 %v5401, %v5362
      %v5434 = vadd.f32 %v5402, %v5363
      %v5435 = vadd.f32 %v5403, %v5364
      %v5436 = vadd.f32 %v5404, %v5365
      %v5437 = vadd.f32 %v5405, %v5366
      %v5438 = vadd.f32 %v5406, %v5367
      %v5439 = vadd.f32 %v5407, %v5368
      %v5440 = vadd.f32 %v5408, %v5369
      %v5441 = vadd.f32 %v5409, %v5370
      %v5442 = vadd.f32 %v5410, %v5371
      %v5443 = vadd.f32 %v5411, %v5372
      %v5444 = vmax.f32 %v5412, 0.0
      %v5445 = vmax.f32 %v5413, 0.0
      %v5446 = vmax.f32 %v5414, 0.0
      %v5447 = vmax.f32 %v5415, 0.0
      %v5448 = vmax.f32 %v5416, 0.0
      %v5449 = vmax.f32 %v5417, 0.0
      %v5450 = vmax.f32 %v5418, 0.0
      %v5451 = vmax.f32 %v5419, 0.0
      %v5452 = vmax.f32 %v5420, 0.0
      %v5453 = vmax.f32 %v5421, 0.0
      %v5454 = vmax.f32 %v5422, 0.0
      %v5455 = vmax.f32 %v5423, 0.0
      %v5456 = vmax.f32 %v5424, 0.0
      %v5457 = vmax.f32 %v5425, 0.0
      %v5458 = vmax.f32 %v5426, 0.0
      %v5459 = vmax.f32 %v5427, 0.0
      %v5460 = vmax.f32 %v5428, 0.0
      %v5461 = vmax.f32 %v5429, 0.0
      %v5462 = vmax.f32 %v5430, 0.0
      %v5463 = vmax.f32 %v5431, 0.0
      %v5464 = vmax.f32 %v5432, 0.0
      %v5465 = vmax.f32 %v5433, 0.0
      %v5466 = vmax.f32 %v5434, 0.0
      %v5467 = vmax.f32 %v5435, 0.0
      %v5468 = vmax.f32 %v5436, 0.0
      %v5469 = vmax.f32 %v5437, 0.0
      %v5470 = vmax.f32 %v5438, 0.0
      %v5471 = vmax.f32 %v5439, 0.0
      %v5472 = vmax.f32 %v5440, 0.0
      %v5473 = vmax.f32 %v5441, 0.0
      %v5474 = vmax.f32 %v5442, 0.0
      %v5475 = vmax.f32 %v5443, 0.0
      %5476 = vst [vmem:[%s224] sm:$0xff] %v5444
      %5477 = vst [vmem:[%s224 + $0x8] sm:$0xff] %v5445
      %5478 = vst [vmem:[%s224 + $0x10] sm:$0xff] %v5446
      %5479 = vst [vmem:[%s224 + $0x18] sm:$0xff] %v5447
      %5480 = vst [vmem:[%s224 + $0x20] sm:$0xff] %v5448
      %5481 = vst [vmem:[%s224 + $0x28] sm:$0xff] %v5449
      %5482 = vst [vmem:[%s224 + $0x30] sm:$0xff] %v5450
      %5483 = vst [vmem:[%s224 + $0x38] sm:$0xff] %v5451
      %5484 = vst [vmem:[%s224 + $0x40] sm:$0xff] %v5452
      %5485 = vst [vmem:[%s224 + $0x48] sm:$0xff] %v5453
      %5486 = vst [vmem:[%s224 + $0x50] sm:$0xff] %v5454
      %5487 = vst [vmem:[%s224 + $0x58] sm:$0xff] %v5455
      %5488 = vst [vmem:[%s224 + $0x60] sm:$0xff] %v5456
      %5489 = vst [vmem:[%s224 + $0x68] sm:$0xff] %v5457
      %5490 = vst [vmem:[%s224 + $0x70] sm:$0xff] %v5458
      %5491 = vst [vmem:[%s224 + $0x78] sm:$0xff] %v5459
      %5492 = vst [vmem:[%s224 + $0x80] sm:$0xff] %v5460
      %5493 = vst [vmem:[%s224 + $0x88] sm:$0xff] %v5461
      %5494 = vst [vmem:[%s224 + $0x90] sm:$0xff] %v5462
      %5495 = vst [vmem:[%s224 + $0x98] sm:$0xff] %v5463
      %5496 = vst [vmem:[%s224 + $0xa0] sm:$0xff] %v5464
      %5497 = vst [vmem:[%s224 + $0xa8] sm:$0xff] %v5465
      %5498 = vst [vmem:[%s224 + $0xb0] sm:$0xff] %v5466
      %5499 = vst [vmem:[%s224 + $0xb8] sm:$0xff] %v5467
      %5500 = vst [vmem:[%s224 + $0xc0] sm:$0xff] %v5468
      %5501 = vst [vmem:[%s224 + $0xc8] sm:$0xff] %v5469
      %5502 = vst [vmem:[%s224 + $0xd0] sm:$0xff] %v5470
      %5503 = vst [vmem:[%s224 + $0xd8] sm:$0xff] %v5471
      %5504 = vst [vmem:[%s224 + $0xe0] sm:$0xff] %v5472
      %5505 = vst [vmem:[%s224 + $0xe8] sm:$0xff] %v5473
      %5506 = vst [vmem:[%s224 + $0xf0] sm:$0xff] %v5474
      %5507 = vst [vmem:[%s224 + $0xf8] sm:$0xff] %v5475
      %p5508 = scmp.lt.s32.totalorder %s16, 1
      %s5509 = scalar_select %p5508, %s16, 1
      %s5510 = smul.addr %s5509, 32
      %s5511 = smul.addr %s5510, 8
      %s5512 = scalar_lea.vmem %s5, %s5511
      // Predicated region
      $region41: #{basic_block_pallas.1} parent=39 // pred_check
        %p5513 = pneg %p144
      $region42: #{basic_block_pallas.1} parent=39 // pred_check_branch
        %5515 = sbr.rel (%p5513) target = $region44
      $region43: #{basic_block_pallas.1} parent=39 // pred_region
        _
      $region44: #{basic_block_pallas.1} parent=39 // pred_fallthru
        _
    $region40: #{basic_block_pallas.1} parent=5 // pred_fallthru
      _
    %p5516 = scmp.le.s32.totalorder 2, %s11
    // Predicated region
    $region45: #{basic_block_pallas.1} parent=5 // pred_check
      %p5517 = pneg %p5516
    $region46: #{basic_block_pallas.1} parent=5 // pred_check_branch
      %5519 = sbr.rel (%p5517) target = $region48
    $region47: #{basic_block_pallas.1} parent=5 // pred_region
      %s5520 = ssub.s32 %s11, 2
      // Predicated region
      $region49: #{basic_block_pallas.1} parent=47 // pred_check
        %p5521 = pneg %p150
      $region50: #{basic_block_pallas.1} parent=47 // pred_check_branch
        %5523 = sbr.rel (%p5521) target = $region52
      $region51: #{basic_block_pallas.1} parent=47 // pred_region
        %p5524 = scmp.lt.s32.totalorder %s17, 1
        %s5525 = scalar_select %p5524, %s17, 1
        %s5526 = smul.addr %s5525, 32
        %s5527 = smul.addr %s5526, 8
        %s5528 = scalar_lea.vmem %s5, %s5527
      $region52: #{basic_block_pallas.1} parent=47 // pred_fallthru
        _
    $region48: #{basic_block_pallas.1} parent=5 // pred_fallthru
      _
  $region6: #{basic_block_pallas.1} parent=0 // loop_footer
    %s15 = sadd.s32 1, %s11
  $region7: #{basic_block_pallas.1} parent=0 // loop_footer_branch
    %10 = sbr.rel target = $region3
  $region8: #{basic_block_pallas.1} parent=0 // loop_exit
    _

</llo_original>
